<compile_context>
chip_gen: v6e
topology: v6e:2x2x1
jax: 0.10.0
libtpu: 0.0.40
codegen_flags: <defaults>
</compile_context>

<pallas_src>
import functools
import math

import jax
import jax.numpy as jnp
from jax.experimental import pallas as pl
from jax.experimental.pallas import tpu as pltpu


# ----------------------------------------------------------------------------
# Exact GELU from VPU-only ops: XLA's f32 erf rational approximation
# (clamp to [-4,4], odd/even polynomials in x^2) -> matches jax.lax.erf to ~1e-7.
# ----------------------------------------------------------------------------
_ERF_ALPHA = (-2.72614225801306e-10, 2.77068142495902e-08, -2.10102402082508e-06,
              -5.69250639462346e-05, -7.34990630326855e-04, -2.95459980854025e-03,
              -1.60960333262415e-02)
_ERF_BETA = (-1.45660718464996e-05, -2.13374055278905e-04, -1.68282697438203e-03,
             -7.37332916720468e-03, -1.42647390514189e-02)


def _erf_f32(x):
    x = jnp.clip(x, -4.0, 4.0)
    x2 = x * x
    p = jnp.float32(_ERF_ALPHA[0])
    for a in _ERF_ALPHA[1:]:
        p = p * x2 + jnp.float32(a)
    p = p * x
    q = jnp.float32(_ERF_BETA[0])
    for bcoef in _ERF_BETA[1:]:
        q = q * x2 + jnp.float32(bcoef)
    return p / q


def _gelu_exact(x):
    return jnp.float32(0.5) * x * (jnp.float32(1.0)
                                   + _erf_f32(x * jnp.float32(0.7071067811865476)))


def _softmax_lastdim(a):
    m = jnp.max(a, axis=-1, keepdims=True)
    e = jnp.exp(a - m)
    return e / jnp.sum(e, axis=-1, keepdims=True)


# ----------------------------------------------------------------------------
# Kernel 1: fused PSA attention (projections + per-head spectral attention +
#           folded output projection), one grid step per batch element.
#
#   qkv = x @ w_qkv            (q|k|v channel blocks)      [n, 3C]
#   qky = y @ w_qky            (qy|ky channel blocks)      [ny, 2C]
#   per head h (d = dim_head):
#     attn  = softmax(rescale[h]  * l2n(k_h)^T l2n(q_h))    [d, d]   (norm over n)
#     attny = softmax(rescaley[h] * l2n(ky_h)^T l2n(qy_h))  [d, d]
#     wf[h*d:(h+1)*d, :] = attn^T @ attny^T @ w_proj[h*d:(h+1)*d, :]
#   out = v @ wf + b_proj      (single [n,C]@[C,dim] MXU op)
#   second output: v (input of the positional branch)
# ----------------------------------------------------------------------------
def _psa_attn_kernel(rescale_ref, rescaley_ref, x_ref, y_ref, wqkv_ref, wqky_ref,
                     wproj_ref, bproj_ref, o_ref, v_ref, wf_scr, *, heads, dim_head):
    f32 = jnp.float32
    C = heads * dim_head
    eps = jnp.float32(1e-12)                     # torch F.normalize eps
    tn = (((0,), (0,)), ((), ()))                # dot_general dims for A^T @ B

    # fused projections: x / y stay in their storage dtype, results are f32
    qkv = jnp.dot(x_ref[0], wqkv_ref[...], preferred_element_type=f32)   # [n, 3C]
    qky = jnp.dot(y_ref[0], wqky_ref[...], preferred_element_type=f32)   # [ny, 2C]
    v = qkv[:, 2 * C:3 * C]                                              # [n, C]

    # per-channel inverse L2 norms over the spatial axis (1/max(||.||, 1e-12))
    inv_x = 1.0 / jnp.maximum(jnp.sqrt(jnp.sum(qkv * qkv, axis=0, keepdims=True)), eps)
    inv_y = 1.0 / jnp.maximum(jnp.sqrt(jnp.sum(qky * qky, axis=0, keepdims=True)), eps)

    # batched channel grams over the spatial axis WITHOUT transposing the big
    # activations; k-side norms pre-folded (one broadcast multiply), q-side norms
    # + rescale folded onto the small per-head blocks below.
    k_n = qkv[:, C:2 * C] * inv_x[:, C:2 * C]
    ky_n = qky[:, C:2 * C] * inv_y[:, C:2 * C]
    g = jax.lax.dot_general(k_n, qkv[:, 0:C], tn, preferred_element_type=f32)    # [C, C]
    gy = jax.lax.dot_general(ky_n, qky[:, 0:C], tn, preferred_element_type=f32)  # [C, C]

    wproj = wproj_ref[...].astype(f32)                                   # [C, dim]

    for h in range(heads):
        s = h * dim_head
        e = s + dim_head
        attn = _softmax_lastdim(g[s:e, s:e] * (inv_x[:, s:e] * rescale_ref[h]))
        attny = _softmax_lastdim(gy[s:e, s:e] * (inv_y[:, s:e] * rescaley_ref[h]))
        # wf_h = (attny @ attn)^T @ Wp_h  ==  attn^T @ (attny^T @ Wp_h)
        tmp = jax.lax.dot_general(attny, wproj[s:e, :], tn, preferred_element_type=f32)
        wf_scr[s:e, :] = jax.lax.dot_general(attn, tmp, tn, preferred_element_type=f32)

    out = jnp.dot(v, wf_scr[...], preferred_element_type=f32) + bproj_ref[...].astype(f32)
    o_ref[0] = out.astype(o_ref.dtype)
    v_ref[0] = v.astype(v_ref.dtype)


def psa_attention(x, y, rescale, rescaley, w_qkv, w_qky, w_proj, b_proj, *,
                  heads, dim_head):
    """x: [b,n,c], y: [b,ny,cy] -> (out_c [b,n,dim], v [b,n,C])."""
    b, n, c = x.shape
    _, ny, cy = y.shape
    C = heads * dim_head
    dim = w_proj.shape[1]
    dt = x.dtype
    d = dim_head

    smem = pl.BlockSpec(memory_space=pltpu.MemorySpace.SMEM)
    kernel = functools.partial(_psa_attn_kernel, heads=heads, dim_head=dim_head)

    flops = 2 * b * (n * c * 3 * C + ny * cy * 2 * C + n * C * C + ny * C * C
                     + heads * 2 * d * d * dim + n * C * dim)
    transcendentals = b * 2 * heads * d * d
    bytes_accessed = (x.size * x.dtype.itemsize + y.size * y.dtype.itemsize
                      + (w_qkv.size + w_qky.size + w_proj.size + b_proj.size
                         + rescale.size + rescaley.size) * 4
                      + (b * n * dim + b * n * C) * dt.itemsize)

    # TODO(synk): for very large n (>= ~8-16k, esp. on v7x's 64 MiB VMEM) add an
    #             "arbitrary" n-tile reduction axis that accumulates the channel
    #             grams / sums-of-squares in scratch instead of whole-sequence blocks.
    return pl.pallas_call(
        kernel,
        out_shape=(jax.ShapeDtypeStruct((b, n, dim), dt),
                   jax.ShapeDtypeStruct((b, n, C), dt)),
        grid=(b,),
        in_specs=[
            smem, smem,
            pl.BlockSpec((1, n, c), lambda i: (i, 0, 0)),
            pl.BlockSpec((1, ny, cy), lambda i: (i, 0, 0)),
            pl.BlockSpec((c, 3 * C), lambda i: (0, 0)),
            pl.BlockSpec((cy, 2 * C), lambda i: (0, 0)),
            pl.BlockSpec((C, dim), lambda i: (0, 0)),
            pl.BlockSpec((1, dim), lambda i: (0, 0)),
        ],
        out_specs=[
            # TODO(synk): when dim/C < 128 these stores are lane-masked; pad to a
            #             multiple of 128 in-kernel (slice outside) if the store
            #             path becomes the binding slot (worst on v5e's single vst).
            pl.BlockSpec((1, n, dim), lambda i: (i, 0, 0)),
            pl.BlockSpec((1, n, C), lambda i: (i, 0, 0)),
        ],
        scratch_shapes=[pltpu.VMEM((C, dim), jnp.float32)],
        cost_estimate=pl.CostEstimate(flops=flops, transcendentals=transcendentals,
                                      bytes_accessed=bytes_accessed),
        compiler_params=pltpu.CompilerParams(
            dimension_semantics=("parallel",),
            vmem_limit_bytes=48 * 1024 * 1024),
    )(rescale, rescaley, x, y, w_qkv, w_qky, w_proj, b_proj)


# ----------------------------------------------------------------------------
# Kernel 2: fused positional branch, one grid step per batch element:
#   dwconv3x3 -> exact GELU -> dwconv3x3 (+ residual = attention output).
# Lane-dense flattened [H, W*C] layout; the GELU'd haloed intermediate never
# leaves VMEM.
# ----------------------------------------------------------------------------
def _posemb_kernel(xpad_ref, w1_ref, w2_ref, add_ref, o_ref, *, H, W, C):
    f32 = jnp.float32
    WC = W * C
    xp = xpad_ref[0].astype(f32)          # [H+2, (W+2)*C]
    w1 = w1_ref[...].astype(f32)          # [9, WC]
    w2 = w2_ref[...].astype(f32)

    # depthwise 3x3 #1
    # TODO(synk): if ld/st or XLU slots saturate, switch to an [H*W(+halo), C]
    #             layout (C multiple of 128) so all 9 taps become sublane shifts.
    acc = jnp.zeros((H, WC), f32)
    for dy in range(3):
        for dx in range(3):
            r = dy * 3 + dx
            acc = acc + xp[dy:dy + H, dx * C:dx * C + WC] * w1[r:r + 1, :]

    t = _gelu_exact(acc)

    # zero 1-px halo for conv #2, built entirely in VMEM (no HBM round trip)
    zc = jnp.zeros((H, C), f32)
    zr = jnp.zeros((1, (W + 2) * C), f32)
    tp = jnp.concatenate([zr, jnp.concatenate([zc, t, zc], axis=1), zr], axis=0)

    # depthwise 3x3 #2 seeded with the fused residual (attention output)
    acc2 = add_ref[0].astype(f32)
    for dy in range(3):
        for dx in range(3):
            r = dy * 3 + dx
            acc2 = acc2 + tp[dy:dy + H, dx * C:dx * C + WC] * w2[r:r + 1, :]
    o_ref[0] = acc2.astype(o_ref.dtype)


def pos_emb_fused(v_img, w1, w2, residual):
    """v_img, residual: [b,H,W,C]; w1,w2: [3,3,C] depthwise weights."""
    b, H, W, C = v_img.shape
    WC = W * C
    x_pad = jnp.pad(v_img, ((0, 0), (1, 1), (1, 1), (0, 0))).reshape(b, H + 2, (W + 2) * C)
    w1_t = jnp.tile(w1.reshape(9, 1, C), (1, W, 1)).reshape(9, WC)
    w2_t = jnp.tile(w2.reshape(9, 1, C), (1, W, 1)).reshape(9, WC)
    res = residual.reshape(b, H, WC)

    # TODO(synk): row-tile with a 2-row halo (grid over H) before large images on
    #             v7x (64 MiB VMEM); also provides megacore work when b == 1.
    out = pl.pallas_call(
        functools.partial(_posemb_kernel, H=H, W=W, C=C),
        out_shape=jax.ShapeDtypeStruct((b, H, WC), v_img.dtype),
        grid=(b,),
        in_specs=[
            pl.BlockSpec((1, H + 2, (W + 2) * C), lambda i: (i, 0, 0)),
            pl.BlockSpec((9, WC), lambda i: (0, 0)),
            pl.BlockSpec((9, WC), lambda i: (0, 0)),
            pl.BlockSpec((1, H, WC), lambda i: (i, 0, 0)),
        ],
        out_specs=pl.BlockSpec((1, H, WC), lambda i: (i, 0, 0)),
        compiler_params=pltpu.CompilerParams(
            dimension_semantics=("parallel",),
            vmem_limit_bytes=48 * 1024 * 1024),
    )(x_pad, w1_t, w2_t, res)
    return out.reshape(b, H, W, C)


# ----------------------------------------------------------------------------
# PSA forward (glue + Pallas kernels)
# ----------------------------------------------------------------------------
def psa_forward(x_in, y, params, *, heads, dim_head):
    b, h, w, c = x_in.shape
    _, hy, wy, cy = y.shape
    n, ny = h * w, hy * wy
    C = heads * dim_head  # == c == dim in PSA
    dim = params["w_proj"].shape[1]

    out_c, v_inp = psa_attention(
        x_in.reshape(b, n, c), y.reshape(b, ny, cy),
        params["rescale"], params["rescaley"],
        params["w_qkv"], params["w_qky"], params["w_proj"], params["b_proj"],
        heads=heads, dim_head=dim_head)

    return pos_emb_fused(
        v_inp.reshape(b, h, w, C),
        params["w_pos1"], params["w_pos2"],
        out_c.reshape(b, h, w, dim))


# ----------------------------------------------------------------------------
# Pure-JAX reference (mirrors the PyTorch module) for a numerical sanity check.
# ----------------------------------------------------------------------------
def psa_reference(x_in, y, params, *, heads, dim_head):
    hi = jax.lax.Precision.HIGHEST
    b, h, w, c = x_in.shape
    _, hy, wy, cy = y.shape
    n, ny = h * w, hy * wy
    C = heads * dim_head
    x = x_in.reshape(b, n, c)
    yy = y.reshape(b, ny, cy)

    qkv = jnp.einsum('bnc,ck->bnk', x, params["w_qkv"], precision=hi)
    qy_ky = jnp.einsum('bnc,ck->bnk', yy, params["w_qky"], precision=hi)
    q, k, v = qkv[..., :C], qkv[..., C:2 * C], qkv[..., 2 * C:]
    qy, ky = qy_ky[..., :C], qy_ky[..., C:]

    def to_heads_t(t):  # [b, n, C] -> [b, heads, d, n]
        bb, nn, _ = t.shape
        return t.reshape(bb, nn, heads, dim_head).transpose(0, 2, 3, 1)

    def l2n(t):
        return t / jnp.maximum(jnp.linalg.norm(t, axis=-1, keepdims=True), 1e-12)

    qh, kh, vh = to_heads_t(q), to_heads_t(k), to_heads_t(v)
    qyh, kyh = to_heads_t(qy), to_heads_t(ky)
    qh, kh, qyh, kyh = l2n(qh), l2n(kh), l2n(qyh), l2n(kyh)

    attn = jax.nn.softmax(jnp.einsum('bhdn,bhen->bhde', kh, qh, precision=hi)
                          * params["rescale"][None, :, None, None], axis=-1)
    attny = jax.nn.softmax(jnp.einsum('bhdn,bhen->bhde', kyh, qyh, precision=hi)
                           * params["rescaley"][None, :, None, None], axis=-1)
    xo = jnp.einsum('bhde,bhef,bhfn->bhdn', attny, attn, vh, precision=hi)
    xo = xo.transpose(0, 3, 1, 2).reshape(b, n, C)
    out_c = (jnp.einsum('bnc,cd->bnd', xo, params["w_proj"], precision=hi)
             + params["b_proj"]).reshape(b, h, w, -1)

    def dwconv(img, wgt):
        return jax.lax.conv_general_dilated(
            img, wgt.reshape(3, 3, 1, C), (1, 1), 'SAME',
            dimension_numbers=('NHWC', 'HWIO', 'NHWC'),
            feature_group_count=C, precision=hi)

    v_img = v.reshape(b, h, w, C)
    t = dwconv(v_img, params["w_pos1"])
    t = jax.nn.gelu(t, approximate=False)
    out_p = dwconv(t, params["w_pos2"])
    return out_c + out_p


# ----------------------------------------------------------------------------
# Deterministic parameter init (synthetic; shapes follow PSA.__init__)
# ----------------------------------------------------------------------------
def init_params(key, dim, dim_head, heads):
    C = dim_head * heads
    ks = jax.random.split(key, 8)
    bound = 1.0 / math.sqrt(dim)

    def u(k, shape):
        return jax.random.uniform(k, shape, jnp.float32, -bound, bound)

    return {
        "w_qkv": u(ks[0], (dim, 3 * C)),      # concat of to_q|to_k|to_v, stored [in,out]
        "w_qky": u(ks[1], (dim, 2 * C)),      # concat of to_qy|to_ky
        "rescale": jnp.ones((heads,), jnp.float32)
        + 0.1 * jax.random.normal(ks[2], (heads,), jnp.float32),
        "rescaley": jnp.ones((heads,), jnp.float32)
        + 0.1 * jax.random.normal(ks[3], (heads,), jnp.float32),
        "w_proj": u(ks[4], (C, dim)),
        "b_proj": u(ks[5], (1, dim)),
        "w_pos1": 0.1 * jax.random.normal(ks[6], (3, 3, dim), jnp.float32),
        "w_pos2": 0.1 * jax.random.normal(ks[7], (3, 3, dim), jnp.float32),
    }


if __name__ == "__main__":
    # small shapes consistent with the module: dim = dim_head * heads
    b, h, w = 2, 16, 16
    hy, wy = 8, 8
    dim, dim_head, heads = 32, 8, 4

    key = jax.random.PRNGKey(0)
    kx, ky_, kp = jax.random.split(key, 3)
    x_in = jax.random.normal(kx, (b, h, w, dim), jnp.float32)
    y = jax.random.normal(ky_, (b, hy, wy, dim), jnp.float32)
    params = init_params(kp, dim, dim_head, heads)

    fwd = jax.jit(functools.partial(psa_forward, heads=heads, dim_head=dim_head))
    out = jax.block_until_ready(fwd(x_in, y, params))

    ref = psa_reference(x_in, y, params, heads=heads, dim_head=dim_head)
    max_err = float(jnp.max(jnp.abs(out - ref)))

    assert out.shape == (b, h, w, dim), out.shape
    assert bool(jnp.all(jnp.isfinite(out)))
    assert max_err < 2e-2, f"max abs err vs reference: {max_err}"
    print("KERNEL_OK")
</pallas_src>

<mosaic_0001>
module attributes {stable_mosaic.version = 11 : i64} {
  func.func @_psa_attn_kernel(%arg0: i32, %arg1: memref<4xf32, #tpu.memory_space<smem>>, %arg2: memref<4xf32, #tpu.memory_space<smem>>, %arg3: memref<1x256x32xf32, #tpu.memory_space<vmem>>, %arg4: memref<1x64x32xf32, #tpu.memory_space<vmem>>, %arg5: memref<32x96xf32, #tpu.memory_space<vmem>>, %arg6: memref<32x64xf32, #tpu.memory_space<vmem>>, %arg7: memref<32x32xf32, #tpu.memory_space<vmem>>, %arg8: memref<1x32xf32, #tpu.memory_space<vmem>>, %arg9: memref<1x256x32xf32, #tpu.memory_space<vmem>>, %arg10: memref<1x256x32xf32, #tpu.memory_space<vmem>>, %arg11: memref<32x32xf32, #tpu.memory_space<vmem>>) attributes {dimension_semantics = [#tpu.dimension_semantics<parallel>], iteration_bounds = array<i64: 2>, scalar_prefetch = 0 : i64, scratch_operands = 1 : i64, tpu.core_type = #tpu.core_type<tc>, window_params = [{transform_indices = @transform_0, window_bounds = array<i64: 4>}, {transform_indices = @transform_1, window_bounds = array<i64: 4>}, {transform_indices = @transform_2, window_bounds = array<i64: 1, 256, 32>}, {transform_indices = @transform_3, window_bounds = array<i64: 1, 64, 32>}, {pipeline_mode = #tpu.pipeline_mode<synchronous>, transform_indices = @transform_4, window_bounds = array<i64: 32, 96>}, {pipeline_mode = #tpu.pipeline_mode<synchronous>, transform_indices = @transform_5, window_bounds = array<i64: 32, 64>}, {pipeline_mode = #tpu.pipeline_mode<synchronous>, transform_indices = @transform_6, window_bounds = array<i64: 32, 32>}, {pipeline_mode = #tpu.pipeline_mode<synchronous>, transform_indices = @transform_7, window_bounds = array<i64: 1, 32>}, {transform_indices = @transform_8, window_bounds = array<i64: 1, 256, 32>}, {transform_indices = @transform_9, window_bounds = array<i64: 1, 256, 32>}]} {
    %c0 = arith.constant 0 : index
    %c0_0 = arith.constant 0 : index
    %c0_1 = arith.constant 0 : index
    %0 = vector.load %arg3[%c0, %c0_0, %c0_1] : memref<1x256x32xf32, #tpu.memory_space<vmem>>, vector<1x256x32xf32>
    %1 = vector.shape_cast %0 : vector<1x256x32xf32> to vector<256x32xf32>
    %c0_2 = arith.constant 0 : index
    %c0_3 = arith.constant 0 : index
    %2 = vector.load %arg5[%c0_2, %c0_3] : memref<32x96xf32, #tpu.memory_space<vmem>>, vector<32x96xf32>
    %cst = arith.constant dense<0.000000e+00> : vector<256x96xf32>
    %3 = tpu.matmul %1, %2, %cst {dimension_numbers = #tpu.dot_dimension_numbers<[1], [0], [0], [1], [0, 0, 1, 1], [], []>} : vector<256x32xf32>, vector<32x96xf32>, vector<256x96xf32> -> vector<256x96xf32>
    %c0_4 = arith.constant 0 : index
    %c0_5 = arith.constant 0 : index
    %c0_6 = arith.constant 0 : index
    %4 = vector.load %arg4[%c0_4, %c0_5, %c0_6] : memref<1x64x32xf32, #tpu.memory_space<vmem>>, vector<1x64x32xf32>
    %5 = vector.shape_cast %4 : vector<1x64x32xf32> to vector<64x32xf32>
    %c0_7 = arith.constant 0 : index
    %c0_8 = arith.constant 0 : index
    %6 = vector.load %arg6[%c0_7, %c0_8] : memref<32x64xf32, #tpu.memory_space<vmem>>, vector<32x64xf32>
    %cst_9 = arith.constant dense<0.000000e+00> : vector<64x64xf32>
    %7 = tpu.matmul %5, %6, %cst_9 {dimension_numbers = #tpu.dot_dimension_numbers<[1], [0], [0], [1], [0, 0, 1, 1], [], []>} : vector<64x32xf32>, vector<32x64xf32>, vector<64x64xf32> -> vector<64x64xf32>
    %8 = vector.extract_strided_slice %3 {offsets = [0, 64], sizes = [256, 32], strides = [1, 1]} : vector<256x96xf32> to vector<256x32xf32>
    %9 = arith.mulf %3, %3 : vector<256x96xf32>
    %cst_10 = arith.constant dense<0.000000e+00> : vector<96xf32>
    %10 = vector.multi_reduction <add>, %9, %cst_10 [0] : vector<256x96xf32> to vector<96xf32>
    %11 = vector.shape_cast %10 : vector<96xf32> to vector<1x96xf32>
    %12 = math.sqrt %11 : vector<1x96xf32>
    %cst_11 = arith.constant 9.99999996E-13 : f32
    %13 = vector.broadcast %cst_11 : f32 to vector<1x96xf32>
    %14 = arith.maximumf %12, %13 : vector<1x96xf32>
    %cst_12 = arith.constant 1.000000e+00 : f32
    %15 = vector.broadcast %cst_12 : f32 to vector<1x96xf32>
    %16 = arith.divf %15, %14 : vector<1x96xf32>
    %17 = arith.mulf %7, %7 : vector<64x64xf32>
    %cst_13 = arith.constant dense<0.000000e+00> : vector<64xf32>
    %18 = vector.multi_reduction <add>, %17, %cst_13 [0] : vector<64x64xf32> to vector<64xf32>
    %19 = vector.shape_cast %18 : vector<64xf32> to vector<1x64xf32>
    %20 = math.sqrt %19 : vector<1x64xf32>
    %cst_14 = arith.constant 9.99999996E-13 : f32
    %21 = vector.broadcast %cst_14 : f32 to vector<1x64xf32>
    %22 = arith.maximumf %20, %21 : vector<1x64xf32>
    %cst_15 = arith.constant 1.000000e+00 : f32
    %23 = vector.broadcast %cst_15 : f32 to vector<1x64xf32>
    %24 = arith.divf %23, %22 : vector<1x64xf32>
    %25 = vector.extract_strided_slice %3 {offsets = [0, 32], sizes = [256, 32], strides = [1, 1]} : vector<256x96xf32> to vector<256x32xf32>
    %26 = vector.extract_strided_slice %16 {offsets = [0, 32], sizes = [1, 32], strides = [1, 1]} : vector<1x96xf32> to vector<1x32xf32>
    %27 = vector.broadcast %26 : vector<1x32xf32> to vector<256x32xf32>
    %28 = arith.mulf %25, %27 : vector<256x32xf32>
    %29 = vector.extract_strided_slice %7 {offsets = [0, 32], sizes = [64, 32], strides = [1, 1]} : vector<64x64xf32> to vector<64x32xf32>
    %30 = vector.extract_strided_slice %24 {offsets = [0, 32], sizes = [1, 32], strides = [1, 1]} : vector<1x64xf32> to vector<1x32xf32>
    %31 = vector.broadcast %30 : vector<1x32xf32> to vector<64x32xf32>
    %32 = arith.mulf %29, %31 : vector<64x32xf32>
    %33 = vector.extract_strided_slice %3 {offsets = [0, 0], sizes = [256, 32], strides = [1, 1]} : vector<256x96xf32> to vector<256x32xf32>
    %cst_16 = arith.constant dense<0.000000e+00> : vector<32x32xf32>
    %34 = tpu.matmul %28, %33, %cst_16 {dimension_numbers = #tpu.dot_dimension_numbers<[0], [0], [1], [1], [0, 1, 1, 1], [], []>} : vector<256x32xf32>, vector<256x32xf32>, vector<32x32xf32> -> vector<32x32xf32>
    %35 = vector.extract_strided_slice %7 {offsets = [0, 0], sizes = [64, 32], strides = [1, 1]} : vector<64x64xf32> to vector<64x32xf32>
    %cst_17 = arith.constant dense<0.000000e+00> : vector<32x32xf32>
    %36 = tpu.matmul %32, %35, %cst_17 {dimension_numbers = #tpu.dot_dimension_numbers<[0], [0], [1], [1], [0, 1, 1, 1], [], []>} : vector<64x32xf32>, vector<64x32xf32>, vector<32x32xf32> -> vector<32x32xf32>
    %c0_18 = arith.constant 0 : index
    %c0_19 = arith.constant 0 : index
    %37 = vector.load %arg7[%c0_18, %c0_19] : memref<32x32xf32, #tpu.memory_space<vmem>>, vector<32x32xf32>
    %38 = vector.extract_strided_slice %34 {offsets = [0, 0], sizes = [8, 8], strides = [1, 1]} : vector<32x32xf32> to vector<8x8xf32>
    %39 = vector.extract_strided_slice %16 {offsets = [0, 0], sizes = [1, 8], strides = [1, 1]} : vector<1x96xf32> to vector<1x8xf32>
    %c0_20 = arith.constant 0 : index
    %40 = memref.load %arg1[%c0_20] : memref<4xf32, #tpu.memory_space<smem>>
    %41 = vector.broadcast %40 : f32 to vector<1x8xf32>
    %42 = arith.mulf %39, %41 : vector<1x8xf32>
    %43 = vector.broadcast %42 : vector<1x8xf32> to vector<8x8xf32>
    %44 = arith.mulf %38, %43 : vector<8x8xf32>
    %cst_21 = arith.constant dense<0xFF800000> : vector<8xf32>
    %45 = vector.multi_reduction <maximumf>, %44, %cst_21 [1] : vector<8x8xf32> to vector<8xf32>
    %46 = vector.shape_cast %45 : vector<8xf32> to vector<8x1xf32>
    %47 = vector.broadcast %46 : vector<8x1xf32> to vector<8x8xf32>
    %48 = arith.subf %44, %47 : vector<8x8xf32>
    %49 = math.exp %48 : vector<8x8xf32>
    %cst_22 = arith.constant dense<0.000000e+00> : vector<8xf32>
    %50 = vector.multi_reduction <add>, %49, %cst_22 [1] : vector<8x8xf32> to vector<8xf32>
    %51 = vector.shape_cast %50 : vector<8xf32> to vector<8x1xf32>
    %52 = vector.broadcast %51 : vector<8x1xf32> to vector<8x8xf32>
    %53 = arith.divf %49, %52 : vector<8x8xf32>
    %54 = vector.extract_strided_slice %36 {offsets = [0, 0], sizes = [8, 8], strides = [1, 1]} : vector<32x32xf32> to vector<8x8xf32>
    %55 = vector.extract_strided_slice %24 {offsets = [0, 0], sizes = [1, 8], strides = [1, 1]} : vector<1x64xf32> to vector<1x8xf32>
    %c0_23 = arith.constant 0 : index
    %56 = memref.load %arg2[%c0_23] : memref<4xf32, #tpu.memory_space<smem>>
    %57 = vector.broadcast %56 : f32 to vector<1x8xf32>
    %58 = arith.mulf %55, %57 : vector<1x8xf32>
    %59 = vector.broadcast %58 : vector<1x8xf32> to vector<8x8xf32>
    %60 = arith.mulf %54, %59 : vector<8x8xf32>
    %cst_24 = arith.constant dense<0xFF800000> : vector<8xf32>
    %61 = vector.multi_reduction <maximumf>, %60, %cst_24 [1] : vector<8x8xf32> to vector<8xf32>
    %62 = vector.shape_cast %61 : vector<8xf32> to vector<8x1xf32>
    %63 = vector.broadcast %62 : vector<8x1xf32> to vector<8x8xf32>
    %64 = arith.subf %60, %63 : vector<8x8xf32>
    %65 = math.exp %64 : vector<8x8xf32>
    %cst_25 = arith.constant dense<0.000000e+00> : vector<8xf32>
    %66 = vector.multi_reduction <add>, %65, %cst_25 [1] : vector<8x8xf32> to vector<8xf32>
    %67 = vector.shape_cast %66 : vector<8xf32> to vector<8x1xf32>
    %68 = vector.broadcast %67 : vector<8x1xf32> to vector<8x8xf32>
    %69 = arith.divf %65, %68 : vector<8x8xf32>
    %70 = vector.extract_strided_slice %37 {offsets = [0, 0], sizes = [8, 32], strides = [1, 1]} : vector<32x32xf32> to vector<8x32xf32>
    %cst_26 = arith.constant dense<0.000000e+00> : vector<8x32xf32>
    %71 = tpu.matmul %69, %70, %cst_26 {dimension_numbers = #tpu.dot_dimension_numbers<[0], [0], [1], [1], [0, 1, 1, 1], [], []>} : vector<8x8xf32>, vector<8x32xf32>, vector<8x32xf32> -> vector<8x32xf32>
    %cst_27 = arith.constant dense<0.000000e+00> : vector<8x32xf32>
    %72 = tpu.matmul %53, %71, %cst_27 {dimension_numbers = #tpu.dot_dimension_numbers<[0], [0], [1], [1], [0, 1, 1, 1], [], []>} : vector<8x8xf32>, vector<8x32xf32>, vector<8x32xf32> -> vector<8x32xf32>
    %c0_28 = arith.constant 0 : index
    %c0_29 = arith.constant 0 : index
    %73 = vector.load %arg11[%c0_28, %c0_29] : memref<32x32xf32, #tpu.memory_space<vmem>>, vector<8x32xf32>
    tpu.vector_store %arg11[%c0_28, %c0_29], %72 {strides = array<i32>} : memref<32x32xf32, #tpu.memory_space<vmem>>, vector<8x32xf32>,
    %74 = vector.extract_strided_slice %34 {offsets = [8, 8], sizes = [8, 8], strides = [1, 1]} : vector<32x32xf32> to vector<8x8xf32>
    %75 = vector.extract_strided_slice %16 {offsets = [0, 8], sizes = [1, 8], strides = [1, 1]} : vector<1x96xf32> to vector<1x8xf32>
    %c1 = arith.constant 1 : index
    %76 = memref.load %arg1[%c1] : memref<4xf32, #tpu.memory_space<smem>>
    %77 = vector.broadcast %76 : f32 to vector<1x8xf32>
    %78 = arith.mulf %75, %77 : vector<1x8xf32>
    %79 = vector.broadcast %78 : vector<1x8xf32> to vector<8x8xf32>
    %80 = arith.mulf %74, %79 : vector<8x8xf32>
    %cst_30 = arith.constant dense<0xFF800000> : vector<8xf32>
    %81 = vector.multi_reduction <maximumf>, %80, %cst_30 [1] : vector<8x8xf32> to vector<8xf32>
    %82 = vector.shape_cast %81 : vector<8xf32> to vector<8x1xf32>
    %83 = vector.broadcast %82 : vector<8x1xf32> to vector<8x8xf32>
    %84 = arith.subf %80, %83 : vector<8x8xf32>
    %85 = math.exp %84 : vector<8x8xf32>
    %cst_31 = arith.constant dense<0.000000e+00> : vector<8xf32>
    %86 = vector.multi_reduction <add>, %85, %cst_31 [1] : vector<8x8xf32> to vector<8xf32>
    %87 = vector.shape_cast %86 : vector<8xf32> to vector<8x1xf32>
    %88 = vector.broadcast %87 : vector<8x1xf32> to vector<8x8xf32>
    %89 = arith.divf %85, %88 : vector<8x8xf32>
    %90 = vector.extract_strided_slice %36 {offsets = [8, 8], sizes = [8, 8], strides = [1, 1]} : vector<32x32xf32> to vector<8x8xf32>
    %91 = vector.extract_strided_slice %24 {offsets = [0, 8], sizes = [1, 8], strides = [1, 1]} : vector<1x64xf32> to vector<1x8xf32>
    %c1_32 = arith.constant 1 : index
    %92 = memref.load %arg2[%c1_32] : memref<4xf32, #tpu.memory_space<smem>>
    %93 = vector.broadcast %92 : f32 to vector<1x8xf32>
    %94 = arith.mulf %91, %93 : vector<1x8xf32>
    %95 = vector.broadcast %94 : vector<1x8xf32> to vector<8x8xf32>
    %96 = arith.mulf %90, %95 : vector<8x8xf32>
    %cst_33 = arith.constant dense<0xFF800000> : vector<8xf32>
    %97 = vector.multi_reduction <maximumf>, %96, %cst_33 [1] : vector<8x8xf32> to vector<8xf32>
    %98 = vector.shape_cast %97 : vector<8xf32> to vector<8x1xf32>
    %99 = vector.broadcast %98 : vector<8x1xf32> to vector<8x8xf32>
    %100 = arith.subf %96, %99 : vector<8x8xf32>
    %101 = math.exp %100 : vector<8x8xf32>
    %cst_34 = arith.constant dense<0.000000e+00> : vector<8xf32>
    %102 = vector.multi_reduction <add>, %101, %cst_34 [1] : vector<8x8xf32> to vector<8xf32>
    %103 = vector.shape_cast %102 : vector<8xf32> to vector<8x1xf32>
    %104 = vector.broadcast %103 : vector<8x1xf32> to vector<8x8xf32>
    %105 = arith.divf %101, %104 : vector<8x8xf32>
    %106 = vector.extract_strided_slice %37 {offsets = [8, 0], sizes = [8, 32], strides = [1, 1]} : vector<32x32xf32> to vector<8x32xf32>
    %cst_35 = arith.constant dense<0.000000e+00> : vector<8x32xf32>
    %107 = tpu.matmul %105, %106, %cst_35 {dimension_numbers = #tpu.dot_dimension_numbers<[0], [0], [1], [1], [0, 1, 1, 1], [], []>} : vector<8x8xf32>, vector<8x32xf32>, vector<8x32xf32> -> vector<8x32xf32>
    %cst_36 = arith.constant dense<0.000000e+00> : vector<8x32xf32>
    %108 = tpu.matmul %89, %107, %cst_36 {dimension_numbers = #tpu.dot_dimension_numbers<[0], [0], [1], [1], [0, 1, 1, 1], [], []>} : vector<8x8xf32>, vector<8x32xf32>, vector<8x32xf32> -> vector<8x32xf32>
    %c8 = arith.constant 8 : index
    %c0_37 = arith.constant 0 : index
    %109 = vector.load %arg11[%c8, %c0_37] : memref<32x32xf32, #tpu.memory_space<vmem>>, vector<8x32xf32>
    tpu.vector_store %arg11[%c8, %c0_37], %108 {strides = array<i32>} : memref<32x32xf32, #tpu.memory_space<vmem>>, vector<8x32xf32>,
    %110 = vector.extract_strided_slice %34 {offsets = [16, 16], sizes = [8, 8], strides = [1, 1]} : vector<32x32xf32> to vector<8x8xf32>
    %111 = vector.extract_strided_slice %16 {offsets = [0, 16], sizes = [1, 8], strides = [1, 1]} : vector<1x96xf32> to vector<1x8xf32>
    %c2 = arith.constant 2 : index
    %112 = memref.load %arg1[%c2] : memref<4xf32, #tpu.memory_space<smem>>
    %113 = vector.broadcast %112 : f32 to vector<1x8xf32>
    %114 = arith.mulf %111, %113 : vector<1x8xf32>
    %115 = vector.broadcast %114 : vector<1x8xf32> to vector<8x8xf32>
    %116 = arith.mulf %110, %115 : vector<8x8xf32>
    %cst_38 = arith.constant dense<0xFF800000> : vector<8xf32>
    %117 = vector.multi_reduction <maximumf>, %116, %cst_38 [1] : vector<8x8xf32> to vector<8xf32>
    %118 = vector.shape_cast %117 : vector<8xf32> to vector<8x1xf32>
    %119 = vector.broadcast %118 : vector<8x1xf32> to vector<8x8xf32>
    %120 = arith.subf %116, %119 : vector<8x8xf32>
    %121 = math.exp %120 : vector<8x8xf32>
    %cst_39 = arith.constant dense<0.000000e+00> : vector<8xf32>
    %122 = vector.multi_reduction <add>, %121, %cst_39 [1] : vector<8x8xf32> to vector<8xf32>
    %123 = vector.shape_cast %122 : vector<8xf32> to vector<8x1xf32>
    %124 = vector.broadcast %123 : vector<8x1xf32> to vector<8x8xf32>
    %125 = arith.divf %121, %124 : vector<8x8xf32>
    %126 = vector.extract_strided_slice %36 {offsets = [16, 16], sizes = [8, 8], strides = [1, 1]} : vector<32x32xf32> to vector<8x8xf32>
    %127 = vector.extract_strided_slice %24 {offsets = [0, 16], sizes = [1, 8], strides = [1, 1]} : vector<1x64xf32> to vector<1x8xf32>
    %c2_40 = arith.constant 2 : index
    %128 = memref.load %arg2[%c2_40] : memref<4xf32, #tpu.memory_space<smem>>
    %129 = vector.broadcast %128 : f32 to vector<1x8xf32>
    %130 = arith.mulf %127, %129 : vector<1x8xf32>
    %131 = vector.broadcast %130 : vector<1x8xf32> to vector<8x8xf32>
    %132 = arith.mulf %126, %131 : vector<8x8xf32>
    %cst_41 = arith.constant dense<0xFF800000> : vector<8xf32>
    %133 = vector.multi_reduction <maximumf>, %132, %cst_41 [1] : vector<8x8xf32> to vector<8xf32>
    %134 = vector.shape_cast %133 : vector<8xf32> to vector<8x1xf32>
    %135 = vector.broadcast %134 : vector<8x1xf32> to vector<8x8xf32>
    %136 = arith.subf %132, %135 : vector<8x8xf32>
    %137 = math.exp %136 : vector<8x8xf32>
    %cst_42 = arith.constant dense<0.000000e+00> : vector<8xf32>
    %138 = vector.multi_reduction <add>, %137, %cst_42 [1] : vector<8x8xf32> to vector<8xf32>
    %139 = vector.shape_cast %138 : vector<8xf32> to vector<8x1xf32>
    %140 = vector.broadcast %139 : vector<8x1xf32> to vector<8x8xf32>
    %141 = arith.divf %137, %140 : vector<8x8xf32>
    %142 = vector.extract_strided_slice %37 {offsets = [16, 0], sizes = [8, 32], strides = [1, 1]} : vector<32x32xf32> to vector<8x32xf32>
    %cst_43 = arith.constant dense<0.000000e+00> : vector<8x32xf32>
    %143 = tpu.matmul %141, %142, %cst_43 {dimension_numbers = #tpu.dot_dimension_numbers<[0], [0], [1], [1], [0, 1, 1, 1], [], []>} : vector<8x8xf32>, vector<8x32xf32>, vector<8x32xf32> -> vector<8x32xf32>
    %cst_44 = arith.constant dense<0.000000e+00> : vector<8x32xf32>
    %144 = tpu.matmul %125, %143, %cst_44 {dimension_numbers = #tpu.dot_dimension_numbers<[0], [0], [1], [1], [0, 1, 1, 1], [], []>} : vector<8x8xf32>, vector<8x32xf32>, vector<8x32xf32> -> vector<8x32xf32>
    %c16 = arith.constant 16 : index
    %c0_45 = arith.constant 0 : index
    %145 = vector.load %arg11[%c16, %c0_45] : memref<32x32xf32, #tpu.memory_space<vmem>>, vector<8x32xf32>
    tpu.vector_store %arg11[%c16, %c0_45], %144 {strides = array<i32>} : memref<32x32xf32, #tpu.memory_space<vmem>>, vector<8x32xf32>,
    %146 = vector.extract_strided_slice %34 {offsets = [24, 24], sizes = [8, 8], strides = [1, 1]} : vector<32x32xf32> to vector<8x8xf32>
    %147 = vector.extract_strided_slice %16 {offsets = [0, 24], sizes = [1, 8], strides = [1, 1]} : vector<1x96xf32> to vector<1x8xf32>
    %c3 = arith.constant 3 : index
    %148 = memref.load %arg1[%c3] : memref<4xf32, #tpu.memory_space<smem>>
    %149 = vector.broadcast %148 : f32 to vector<1x8xf32>
    %150 = arith.mulf %147, %149 : vector<1x8xf32>
    %151 = vector.broadcast %150 : vector<1x8xf32> to vector<8x8xf32>
    %152 = arith.mulf %146, %151 : vector<8x8xf32>
    %cst_46 = arith.constant dense<0xFF800000> : vector<8xf32>
    %153 = vector.multi_reduction <maximumf>, %152, %cst_46 [1] : vector<8x8xf32> to vector<8xf32>
    %154 = vector.shape_cast %153 : vector<8xf32> to vector<8x1xf32>
    %155 = vector.broadcast %154 : vector<8x1xf32> to vector<8x8xf32>
    %156 = arith.subf %152, %155 : vector<8x8xf32>
    %157 = math.exp %156 : vector<8x8xf32>
    %cst_47 = arith.constant dense<0.000000e+00> : vector<8xf32>
    %158 = vector.multi_reduction <add>, %157, %cst_47 [1] : vector<8x8xf32> to vector<8xf32>
    %159 = vector.shape_cast %158 : vector<8xf32> to vector<8x1xf32>
    %160 = vector.broadcast %159 : vector<8x1xf32> to vector<8x8xf32>
    %161 = arith.divf %157, %160 : vector<8x8xf32>
    %162 = vector.extract_strided_slice %36 {offsets = [24, 24], sizes = [8, 8], strides = [1, 1]} : vector<32x32xf32> to vector<8x8xf32>
    %163 = vector.extract_strided_slice %24 {offsets = [0, 24], sizes = [1, 8], strides = [1, 1]} : vector<1x64xf32> to vector<1x8xf32>
    %c3_48 = arith.constant 3 : index
    %164 = memref.load %arg2[%c3_48] : memref<4xf32, #tpu.memory_space<smem>>
    %165 = vector.broadcast %164 : f32 to vector<1x8xf32>
    %166 = arith.mulf %163, %165 : vector<1x8xf32>
    %167 = vector.broadcast %166 : vector<1x8xf32> to vector<8x8xf32>
    %168 = arith.mulf %162, %167 : vector<8x8xf32>
    %cst_49 = arith.constant dense<0xFF800000> : vector<8xf32>
    %169 = vector.multi_reduction <maximumf>, %168, %cst_49 [1] : vector<8x8xf32> to vector<8xf32>
    %170 = vector.shape_cast %169 : vector<8xf32> to vector<8x1xf32>
    %171 = vector.broadcast %170 : vector<8x1xf32> to vector<8x8xf32>
    %172 = arith.subf %168, %171 : vector<8x8xf32>
    %173 = math.exp %172 : vector<8x8xf32>
    %cst_50 = arith.constant dense<0.000000e+00> : vector<8xf32>
    %174 = vector.multi_reduction <add>, %173, %cst_50 [1] : vector<8x8xf32> to vector<8xf32>
    %175 = vector.shape_cast %174 : vector<8xf32> to vector<8x1xf32>
    %176 = vector.broadcast %175 : vector<8x1xf32> to vector<8x8xf32>
    %177 = arith.divf %173, %176 : vector<8x8xf32>
    %178 = vector.extract_strided_slice %37 {offsets = [24, 0], sizes = [8, 32], strides = [1, 1]} : vector<32x32xf32> to vector<8x32xf32>
    %cst_51 = arith.constant dense<0.000000e+00> : vector<8x32xf32>
    %179 = tpu.matmul %177, %178, %cst_51 {dimension_numbers = #tpu.dot_dimension_numbers<[0], [0], [1], [1], [0, 1, 1, 1], [], []>} : vector<8x8xf32>, vector<8x32xf32>, vector<8x32xf32> -> vector<8x32xf32>
    %cst_52 = arith.constant dense<0.000000e+00> : vector<8x32xf32>
    %180 = tpu.matmul %161, %179, %cst_52 {dimension_numbers = #tpu.dot_dimension_numbers<[0], [0], [1], [1], [0, 1, 1, 1], [], []>} : vector<8x8xf32>, vector<8x32xf32>, vector<8x32xf32> -> vector<8x32xf32>
    %c24 = arith.constant 24 : index
    %c0_53 = arith.constant 0 : index
    %181 = vector.load %arg11[%c24, %c0_53] : memref<32x32xf32, #tpu.memory_space<vmem>>, vector<8x32xf32>
    tpu.vector_store %arg11[%c24, %c0_53], %180 {strides = array<i32>} : memref<32x32xf32, #tpu.memory_space<vmem>>, vector<8x32xf32>,
    %c0_54 = arith.constant 0 : index
    %c0_55 = arith.constant 0 : index
    %182 = vector.load %arg11[%c0_54, %c0_55] : memref<32x32xf32, #tpu.memory_space<vmem>>, vector<32x32xf32>
    %cst_56 = arith.constant dense<0.000000e+00> : vector<256x32xf32>
    %183 = tpu.matmul %8, %182, %cst_56 {dimension_numbers = #tpu.dot_dimension_numbers<[1], [0], [0], [1], [0, 0, 1, 1], [], []>} : vector<256x32xf32>, vector<32x32xf32>, vector<256x32xf32> -> vector<256x32xf32>
    %c0_57 = arith.constant 0 : index
    %c0_58 = arith.constant 0 : index
    %184 = vector.load %arg8[%c0_57, %c0_58] : memref<1x32xf32, #tpu.memory_space<vmem>>, vector<1x32xf32>
    %185 = vector.broadcast %184 : vector<1x32xf32> to vector<256x32xf32>
    %186 = arith.addf %183, %185 : vector<256x32xf32>
    %c0_59 = arith.constant 0 : index
    %c0_60 = arith.constant 0 : index
    %c0_61 = arith.constant 0 : index
    %187 = vector.load %arg9[%c0_59, %c0_60, %c0_61] : memref<1x256x32xf32, #tpu.memory_space<vmem>>, vector<1x256x32xf32>
    %188 = vector.shape_cast %187 : vector<1x256x32xf32> to vector<256x32xf32>
    %189 = vector.shape_cast %186 : vector<256x32xf32> to vector<1x256x32xf32>
    tpu.vector_store %arg9[%c0_59, %c0_60, %c0_61], %189 {strides = array<i32>} : memref<1x256x32xf32, #tpu.memory_space<vmem>>, vector<1x256x32xf32>,
    %c0_62 = arith.constant 0 : index
    %c0_63 = arith.constant 0 : index
    %c0_64 = arith.constant 0 : index
    %190 = vector.load %arg10[%c0_62, %c0_63, %c0_64] : memref<1x256x32xf32, #tpu.memory_space<vmem>>, vector<1x256x32xf32>
    %191 = vector.shape_cast %190 : vector<1x256x32xf32> to vector<256x32xf32>
    %192 = vector.shape_cast %8 : vector<256x32xf32> to vector<1x256x32xf32>
    tpu.vector_store %arg10[%c0_62, %c0_63, %c0_64], %192 {strides = array<i32>} : memref<1x256x32xf32, #tpu.memory_space<vmem>>, vector<1x256x32xf32>,
    return
  }
  func.func @transform_0(%arg0: i32) -> i32 {
    %c0_i32 = arith.constant 0 : i32
    %c0_i32_0 = arith.constant 0 : i32
    return %c0_i32 : i32
  }
  func.func @transform_1(%arg0: i32) -> i32 {
    %c0_i32 = arith.constant 0 : i32
    %c0_i32_0 = arith.constant 0 : i32
    return %c0_i32 : i32
  }
  func.func @transform_2(%arg0: i32) -> (i32, i32, i32) {
    %c0_i32 = arith.constant 0 : i32
    %c0_i32_0 = arith.constant 0 : i32
    %c0_i32_1 = arith.constant 0 : i32
    return %arg0, %c0_i32, %c0_i32_0 : i32, i32, i32
  }
  func.func @transform_3(%arg0: i32) -> (i32, i32, i32) {
    %c0_i32 = arith.constant 0 : i32
    %c0_i32_0 = arith.constant 0 : i32
    %c0_i32_1 = arith.constant 0 : i32
    return %arg0, %c0_i32, %c0_i32_0 : i32, i32, i32
  }
  func.func @transform_4(%arg0: i32) -> (i32, i32) {
    %c0_i32 = arith.constant 0 : i32
    %c0_i32_0 = arith.constant 0 : i32
    %c0_i32_1 = arith.constant 0 : i32
    return %c0_i32, %c0_i32_0 : i32, i32
  }
  func.func @transform_5(%arg0: i32) -> (i32, i32) {
    %c0_i32 = arith.constant 0 : i32
    %c0_i32_0 = arith.constant 0 : i32
    %c0_i32_1 = arith.constant 0 : i32
    return %c0_i32, %c0_i32_0 : i32, i32
  }
  func.func @transform_6(%arg0: i32) -> (i32, i32) {
    %c0_i32 = arith.constant 0 : i32
    %c0_i32_0 = arith.constant 0 : i32
    %c0_i32_1 = arith.constant 0 : i32
    return %c0_i32, %c0_i32_0 : i32, i32
  }
  func.func @transform_7(%arg0: i32) -> (i32, i32) {
    %c0_i32 = arith.constant 0 : i32
    %c0_i32_0 = arith.constant 0 : i32
    %c0_i32_1 = arith.constant 0 : i32
    return %c0_i32, %c0_i32_0 : i32, i32
  }
  func.func @transform_8(%arg0: i32) -> (i32, i32, i32) {
    %c0_i32 = arith.constant 0 : i32
    %c0_i32_0 = arith.constant 0 : i32
    %c0_i32_1 = arith.constant 0 : i32
    return %arg0, %c0_i32, %c0_i32_0 : i32, i32, i32
  }
  func.func @transform_9(%arg0: i32) -> (i32, i32, i32) {
    %c0_i32 = arith.constant 0 : i32
    %c0_i32_0 = arith.constant 0 : i32
    %c0_i32_1 = arith.constant 0 : i32
    return %arg0, %c0_i32, %c0_i32_0 : i32, i32, i32
  }
}

module attributes {stable_mosaic.version = 11 : i64} {
  func.func @_posemb_kernel(%arg0: i32, %arg1: memref<1x18x576xf32, #tpu.memory_space<vmem>>, %arg2: memref<9x512xf32, #tpu.memory_space<vmem>>, %arg3: memref<9x512xf32, #tpu.memory_space<vmem>>, %arg4: memref<1x16x512xf32, #tpu.memory_space<vmem>>, %arg5: memref<1x16x512xf32, #tpu.memory_space<vmem>>) attributes {dimension_semantics = [#tpu.dimension_semantics<parallel>], iteration_bounds = array<i64: 2>, scalar_prefetch = 0 : i64, scratch_operands = 0 : i64, tpu.core_type = #tpu.core_type<tc>, window_params = [{transform_indices = @transform_0, window_bounds = array<i64: 1, 18, 576>}, {pipeline_mode = #tpu.pipeline_mode<synchronous>, transform_indices = @transform_1, window_bounds = array<i64: 9, 512>}, {pipeline_mode = #tpu.pipeline_mode<synchronous>, transform_indices = @transform_2, window_bounds = array<i64: 9, 512>}, {transform_indices = @transform_3, window_bounds = array<i64: 1, 16, 512>}, {transform_indices = @transform_4, window_bounds = array<i64: 1, 16, 512>}]} {
    %c0 = arith.constant 0 : index
    %c0_0 = arith.constant 0 : index
    %c0_1 = arith.constant 0 : index
    %0 = vector.load %arg1[%c0, %c0_0, %c0_1] : memref<1x18x576xf32, #tpu.memory_space<vmem>>, vector<1x18x576xf32>
    %1 = vector.shape_cast %0 : vector<1x18x576xf32> to vector<18x576xf32>
    %c0_2 = arith.constant 0 : index
    %c0_3 = arith.constant 0 : index
    %2 = vector.load %arg2[%c0_2, %c0_3] : memref<9x512xf32, #tpu.memory_space<vmem>>, vector<9x512xf32>
    %c0_4 = arith.constant 0 : index
    %c0_5 = arith.constant 0 : index
    %3 = vector.load %arg3[%c0_4, %c0_5] : memref<9x512xf32, #tpu.memory_space<vmem>>, vector<9x512xf32>
    %cst = arith.constant 0.000000e+00 : f32
    %4 = vector.broadcast %cst : f32 to vector<16x512xf32>
    %5 = vector.extract_strided_slice %1 {offsets = [0, 0], sizes = [16, 512], strides = [1, 1]} : vector<18x576xf32> to vector<16x512xf32>
    %6 = vector.extract_strided_slice %2 {offsets = [0, 0], sizes = [1, 512], strides = [1, 1]} : vector<9x512xf32> to vector<1x512xf32>
    %7 = vector.broadcast %6 : vector<1x512xf32> to vector<16x512xf32>
    %8 = arith.mulf %5, %7 : vector<16x512xf32>
    %9 = arith.addf %4, %8 : vector<16x512xf32>
    %10 = vector.extract_strided_slice %1 {offsets = [0, 32], sizes = [16, 512], strides = [1, 1]} : vector<18x576xf32> to vector<16x512xf32>
    %11 = vector.extract_strided_slice %2 {offsets = [1, 0], sizes = [1, 512], strides = [1, 1]} : vector<9x512xf32> to vector<1x512xf32>
    %12 = vector.broadcast %11 : vector<1x512xf32> to vector<16x512xf32>
    %13 = arith.mulf %10, %12 : vector<16x512xf32>
    %14 = arith.addf %9, %13 : vector<16x512xf32>
    %15 = vector.extract_strided_slice %1 {offsets = [0, 64], sizes = [16, 512], strides = [1, 1]} : vector<18x576xf32> to vector<16x512xf32>
    %16 = vector.extract_strided_slice %2 {offsets = [2, 0], sizes = [1, 512], strides = [1, 1]} : vector<9x512xf32> to vector<1x512xf32>
    %17 = vector.broadcast %16 : vector<1x512xf32> to vector<16x512xf32>
    %18 = arith.mulf %15, %17 : vector<16x512xf32>
    %19 = arith.addf %14, %18 : vector<16x512xf32>
    %20 = vector.extract_strided_slice %1 {offsets = [1, 0], sizes = [16, 512], strides = [1, 1]} : vector<18x576xf32> to vector<16x512xf32>
    %21 = vector.extract_strided_slice %2 {offsets = [3, 0], sizes = [1, 512], strides = [1, 1]} : vector<9x512xf32> to vector<1x512xf32>
    %22 = vector.broadcast %21 : vector<1x512xf32> to vector<16x512xf32>
    %23 = arith.mulf %20, %22 : vector<16x512xf32>
    %24 = arith.addf %19, %23 : vector<16x512xf32>
    %25 = vector.extract_strided_slice %1 {offsets = [1, 32], sizes = [16, 512], strides = [1, 1]} : vector<18x576xf32> to vector<16x512xf32>
    %26 = vector.extract_strided_slice %2 {offsets = [4, 0], sizes = [1, 512], strides = [1, 1]} : vector<9x512xf32> to vector<1x512xf32>
    %27 = vector.broadcast %26 : vector<1x512xf32> to vector<16x512xf32>
    %28 = arith.mulf %25, %27 : vector<16x512xf32>
    %29 = arith.addf %24, %28 : vector<16x512xf32>
    %30 = vector.extract_strided_slice %1 {offsets = [1, 64], sizes = [16, 512], strides = [1, 1]} : vector<18x576xf32> to vector<16x512xf32>
    %31 = vector.extract_strided_slice %2 {offsets = [5, 0], sizes = [1, 512], strides = [1, 1]} : vector<9x512xf32> to vector<1x512xf32>
    %32 = vector.broadcast %31 : vector<1x512xf32> to vector<16x512xf32>
    %33 = arith.mulf %30, %32 : vector<16x512xf32>
    %34 = arith.addf %29, %33 : vector<16x512xf32>
    %35 = vector.extract_strided_slice %1 {offsets = [2, 0], sizes = [16, 512], strides = [1, 1]} : vector<18x576xf32> to vector<16x512xf32>
    %36 = vector.extract_strided_slice %2 {offsets = [6, 0], sizes = [1, 512], strides = [1, 1]} : vector<9x512xf32> to vector<1x512xf32>
    %37 = vector.broadcast %36 : vector<1x512xf32> to vector<16x512xf32>
    %38 = arith.mulf %35, %37 : vector<16x512xf32>
    %39 = arith.addf %34, %38 : vector<16x512xf32>
    %40 = vector.extract_strided_slice %1 {offsets = [2, 32], sizes = [16, 512], strides = [1, 1]} : vector<18x576xf32> to vector<16x512xf32>
    %41 = vector.extract_strided_slice %2 {offsets = [7, 0], sizes = [1, 512], strides = [1, 1]} : vector<9x512xf32> to vector<1x512xf32>
    %42 = vector.broadcast %41 : vector<1x512xf32> to vector<16x512xf32>
    %43 = arith.mulf %40, %42 : vector<16x512xf32>
    %44 = arith.addf %39, %43 : vector<16x512xf32>
    %45 = vector.extract_strided_slice %1 {offsets = [2, 64], sizes = [16, 512], strides = [1, 1]} : vector<18x576xf32> to vector<16x512xf32>
    %46 = vector.extract_strided_slice %2 {offsets = [8, 0], sizes = [1, 512], strides = [1, 1]} : vector<9x512xf32> to vector<1x512xf32>
    %47 = vector.broadcast %46 : vector<1x512xf32> to vector<16x512xf32>
    %48 = arith.mulf %45, %47 : vector<16x512xf32>
    %49 = arith.addf %44, %48 : vector<16x512xf32>
    %cst_6 = arith.constant 5.000000e-01 : f32
    %50 = vector.broadcast %cst_6 : f32 to vector<16x512xf32>
    %51 = arith.mulf %50, %49 : vector<16x512xf32>
    %cst_7 = arith.constant 0.707106769 : f32
    %52 = vector.broadcast %cst_7 : f32 to vector<16x512xf32>
    %53 = arith.mulf %49, %52 : vector<16x512xf32>
    %cst_8 = arith.constant -4.000000e+00 : f32
    %cst_9 = arith.constant 4.000000e+00 : f32
    %54 = vector.broadcast %cst_8 : f32 to vector<16x512xf32>
    %55 = arith.maximumf %54, %53 : vector<16x512xf32>
    %56 = vector.broadcast %cst_9 : f32 to vector<16x512xf32>
    %57 = arith.minimumf %56, %55 : vector<16x512xf32>
    %58 = arith.mulf %57, %57 : vector<16x512xf32>
    %cst_10 = arith.constant -2.72614237E-10 : f32
    %59 = vector.broadcast %cst_10 : f32 to vector<16x512xf32>
    %60 = arith.mulf %59, %58 : vector<16x512xf32>
    %cst_11 = arith.constant 2.77068146E-8 : f32
    %61 = vector.broadcast %cst_11 : f32 to vector<16x512xf32>
    %62 = arith.addf %60, %61 : vector<16x512xf32>
    %63 = arith.mulf %62, %58 : vector<16x512xf32>
    %cst_12 = arith.constant -2.10102394E-6 : f32
    %64 = vector.broadcast %cst_12 : f32 to vector<16x512xf32>
    %65 = arith.addf %63, %64 : vector<16x512xf32>
    %66 = arith.mulf %65, %58 : vector<16x512xf32>
    %cst_13 = arith.constant -5.69250624E-5 : f32
    %67 = vector.broadcast %cst_13 : f32 to vector<16x512xf32>
    %68 = arith.addf %66, %67 : vector<16x512xf32>
    %69 = arith.mulf %68, %58 : vector<16x512xf32>
    %cst_14 = arith.constant -7.34990637E-4 : f32
    %70 = vector.broadcast %cst_14 : f32 to vector<16x512xf32>
    %71 = arith.addf %69, %70 : vector<16x512xf32>
    %72 = arith.mulf %71, %58 : vector<16x512xf32>
    %cst_15 = arith.constant -2.954600e-03 : f32
    %73 = vector.broadcast %cst_15 : f32 to vector<16x512xf32>
    %74 = arith.addf %72, %73 : vector<16x512xf32>
    %75 = arith.mulf %74, %58 : vector<16x512xf32>
    %cst_16 = arith.constant -0.0160960332 : f32
    %76 = vector.broadcast %cst_16 : f32 to vector<16x512xf32>
    %77 = arith.addf %75, %76 : vector<16x512xf32>
    %78 = arith.mulf %77, %57 : vector<16x512xf32>
    %cst_17 = arith.constant -1.45660715E-5 : f32
    %79 = vector.broadcast %cst_17 : f32 to vector<16x512xf32>
    %80 = arith.mulf %79, %58 : vector<16x512xf32>
    %cst_18 = arith.constant -2.13374049E-4 : f32
    %81 = vector.broadcast %cst_18 : f32 to vector<16x512xf32>
    %82 = arith.addf %80, %81 : vector<16x512xf32>
    %83 = arith.mulf %82, %58 : vector<16x512xf32>
    %cst_19 = arith.constant -0.00168282702 : f32
    %84 = vector.broadcast %cst_19 : f32 to vector<16x512xf32>
    %85 = arith.addf %83, %84 : vector<16x512xf32>
    %86 = arith.mulf %85, %58 : vector<16x512xf32>
    %cst_20 = arith.constant -0.00737332925 : f32
    %87 = vector.broadcast %cst_20 : f32 to vector<16x512xf32>
    %88 = arith.addf %86, %87 : vector<16x512xf32>
    %89 = arith.mulf %88, %58 : vector<16x512xf32>
    %cst_21 = arith.constant -0.0142647391 : f32
    %90 = vector.broadcast %cst_21 : f32 to vector<16x512xf32>
    %91 = arith.addf %89, %90 : vector<16x512xf32>
    %92 = arith.divf %78, %91 : vector<16x512xf32>
    %cst_22 = arith.constant 1.000000e+00 : f32
    %93 = vector.broadcast %cst_22 : f32 to vector<16x512xf32>
    %94 = arith.addf %93, %92 : vector<16x512xf32>
    %95 = arith.mulf %51, %94 : vector<16x512xf32>
    %cst_23 = arith.constant 0.000000e+00 : f32
    %96 = vector.broadcast %cst_23 : f32 to vector<16x32xf32>
    %cst_24 = arith.constant 0.000000e+00 : f32
    %97 = vector.broadcast %cst_24 : f32 to vector<1x576xf32>
    %98 = tpu.concatenate %96, %95, %96 in 1 : vector<16x32xf32>, vector<16x512xf32>, vector<16x32xf32> -> vector<16x576xf32>
    %99 = tpu.concatenate %97, %98, %97 in 0 : vector<1x576xf32>, vector<16x576xf32>, vector<1x576xf32> -> vector<18x576xf32>
    %c0_25 = arith.constant 0 : index
    %c0_26 = arith.constant 0 : index
    %c0_27 = arith.constant 0 : index
    %100 = vector.load %arg4[%c0_25, %c0_26, %c0_27] : memref<1x16x512xf32, #tpu.memory_space<vmem>>, vector<1x16x512xf32>
    %101 = vector.shape_cast %100 : vector<1x16x512xf32> to vector<16x512xf32>
    %102 = vector.extract_strided_slice %99 {offsets = [0, 0], sizes = [16, 512], strides = [1, 1]} : vector<18x576xf32> to vector<16x512xf32>
    %103 = vector.extract_strided_slice %3 {offsets = [0, 0], sizes = [1, 512], strides = [1, 1]} : vector<9x512xf32> to vector<1x512xf32>
    %104 = vector.broadcast %103 : vector<1x512xf32> to vector<16x512xf32>
    %105 = arith.mulf %102, %104 : vector<16x512xf32>
    %106 = arith.addf %101, %105 : vector<16x512xf32>
    %107 = vector.extract_strided_slice %99 {offsets = [0, 32], sizes = [16, 512], strides = [1, 1]} : vector<18x576xf32> to vector<16x512xf32>
    %108 = vector.extract_strided_slice %3 {offsets = [1, 0], sizes = [1, 512], strides = [1, 1]} : vector<9x512xf32> to vector<1x512xf32>
    %109 = vector.broadcast %108 : vector<1x512xf32> to vector<16x512xf32>
    %110 = arith.mulf %107, %109 : vector<16x512xf32>
    %111 = arith.addf %106, %110 : vector<16x512xf32>
    %112 = vector.extract_strided_slice %99 {offsets = [0, 64], sizes = [16, 512], strides = [1, 1]} : vector<18x576xf32> to vector<16x512xf32>
    %113 = vector.extract_strided_slice %3 {offsets = [2, 0], sizes = [1, 512], strides = [1, 1]} : vector<9x512xf32> to vector<1x512xf32>
    %114 = vector.broadcast %113 : vector<1x512xf32> to vector<16x512xf32>
    %115 = arith.mulf %112, %114 : vector<16x512xf32>
    %116 = arith.addf %111, %115 : vector<16x512xf32>
    %117 = vector.extract_strided_slice %99 {offsets = [1, 0], sizes = [16, 512], strides = [1, 1]} : vector<18x576xf32> to vector<16x512xf32>
    %118 = vector.extract_strided_slice %3 {offsets = [3, 0], sizes = [1, 512], strides = [1, 1]} : vector<9x512xf32> to vector<1x512xf32>
    %119 = vector.broadcast %118 : vector<1x512xf32> to vector<16x512xf32>
    %120 = arith.mulf %117, %119 : vector<16x512xf32>
    %121 = arith.addf %116, %120 : vector<16x512xf32>
    %122 = vector.extract_strided_slice %99 {offsets = [1, 32], sizes = [16, 512], strides = [1, 1]} : vector<18x576xf32> to vector<16x512xf32>
    %123 = vector.extract_strided_slice %3 {offsets = [4, 0], sizes = [1, 512], strides = [1, 1]} : vector<9x512xf32> to vector<1x512xf32>
    %124 = vector.broadcast %123 : vector<1x512xf32> to vector<16x512xf32>
    %125 = arith.mulf %122, %124 : vector<16x512xf32>
    %126 = arith.addf %121, %125 : vector<16x512xf32>
    %127 = vector.extract_strided_slice %99 {offsets = [1, 64], sizes = [16, 512], strides = [1, 1]} : vector<18x576xf32> to vector<16x512xf32>
    %128 = vector.extract_strided_slice %3 {offsets = [5, 0], sizes = [1, 512], strides = [1, 1]} : vector<9x512xf32> to vector<1x512xf32>
    %129 = vector.broadcast %128 : vector<1x512xf32> to vector<16x512xf32>
    %130 = arith.mulf %127, %129 : vector<16x512xf32>
    %131 = arith.addf %126, %130 : vector<16x512xf32>
    %132 = vector.extract_strided_slice %99 {offsets = [2, 0], sizes = [16, 512], strides = [1, 1]} : vector<18x576xf32> to vector<16x512xf32>
    %133 = vector.extract_strided_slice %3 {offsets = [6, 0], sizes = [1, 512], strides = [1, 1]} : vector<9x512xf32> to vector<1x512xf32>
    %134 = vector.broadcast %133 : vector<1x512xf32> to vector<16x512xf32>
    %135 = arith.mulf %132, %134 : vector<16x512xf32>
    %136 = arith.addf %131, %135 : vector<16x512xf32>
    %137 = vector.extract_strided_slice %99 {offsets = [2, 32], sizes = [16, 512], strides = [1, 1]} : vector<18x576xf32> to vector<16x512xf32>
    %138 = vector.extract_strided_slice %3 {offsets = [7, 0], sizes = [1, 512], strides = [1, 1]} : vector<9x512xf32> to vector<1x512xf32>
    %139 = vector.broadcast %138 : vector<1x512xf32> to vector<16x512xf32>
    %140 = arith.mulf %137, %139 : vector<16x512xf32>
    %141 = arith.addf %136, %140 : vector<16x512xf32>
    %142 = vector.extract_strided_slice %99 {offsets = [2, 64], sizes = [16, 512], strides = [1, 1]} : vector<18x576xf32> to vector<16x512xf32>
    %143 = vector.extract_strided_slice %3 {offsets = [8, 0], sizes = [1, 512], strides = [1, 1]} : vector<9x512xf32> to vector<1x512xf32>
    %144 = vector.broadcast %143 : vector<1x512xf32> to vector<16x512xf32>
    %145 = arith.mulf %142, %144 : vector<16x512xf32>
    %146 = arith.addf %141, %145 : vector<16x512xf32>
    %c0_28 = arith.constant 0 : index
    %c0_29 = arith.constant 0 : index
    %c0_30 = arith.constant 0 : index
    %147 = vector.load %arg5[%c0_28, %c0_29, %c0_30] : memref<1x16x512xf32, #tpu.memory_space<vmem>>, vector<1x16x512xf32>
    %148 = vector.shape_cast %147 : vector<1x16x512xf32> to vector<16x512xf32>
    %149 = vector.shape_cast %146 : vector<16x512xf32> to vector<1x16x512xf32>
    tpu.vector_store %arg5[%c0_28, %c0_29, %c0_30], %149 {strides = array<i32>} : memref<1x16x512xf32, #tpu.memory_space<vmem>>, vector<1x16x512xf32>,
    return
  }
  func.func @transform_0(%arg0: i32) -> (i32, i32, i32) {
    %c0_i32 = arith.constant 0 : i32
    %c0_i32_0 = arith.constant 0 : i32
    %c0_i32_1 = arith.constant 0 : i32
    return %arg0, %c0_i32, %c0_i32_0 : i32, i32, i32
  }
  func.func @transform_1(%arg0: i32) -> (i32, i32) {
    %c0_i32 = arith.constant 0 : i32
    %c0_i32_0 = arith.constant 0 : i32
    %c0_i32_1 = arith.constant 0 : i32
    return %c0_i32, %c0_i32_0 : i32, i32
  }
  func.func @transform_2(%arg0: i32) -> (i32, i32) {
    %c0_i32 = arith.constant 0 : i32
    %c0_i32_0 = arith.constant 0 : i32
    %c0_i32_1 = arith.constant 0 : i32
    return %c0_i32, %c0_i32_0 : i32, i32
  }
  func.func @transform_3(%arg0: i32) -> (i32, i32, i32) {
    %c0_i32 = arith.constant 0 : i32
    %c0_i32_0 = arith.constant 0 : i32
    %c0_i32_1 = arith.constant 0 : i32
    return %arg0, %c0_i32, %c0_i32_0 : i32, i32, i32
  }
  func.func @transform_4(%arg0: i32) -> (i32, i32, i32) {
    %c0_i32 = arith.constant 0 : i32
    %c0_i32_0 = arith.constant 0 : i32
    %c0_i32_1 = arith.constant 0 : i32
    return %arg0, %c0_i32, %c0_i32_0 : i32, i32, i32
  }
}

</mosaic_0001>

<llo_original>
// kernel: tile.15
$region0: #{tile.15}
  %s0 = inlined_call_operand.vmem [shape: f32[9,16,1,1,32], index: 0, kind: input, shape index: {}]
  %s1 = inlined_call_operand.vmem [shape: f32[9,512], index: 1, kind: output, shape index: {}]
  %v2 = vld [vmem:[%s0] ss:$4 sm:$0xff]
  %vm3 = vcmask 261120
  %4 = vst.msk [vmem:[%s1] ss:$8 sm:$0xf] %vm3, %v2
  %s5 = scalar_lea.vmem %s1, 4294967265
  %6 = vst.msk [vmem:[%s5] ss:$8 sm:$0xf0] %vm3, %v2
  %s7 = scalar_lea.vmem %s0, 32
  %v8 = vld [vmem:[%s7] ss:$4 sm:$0xff]
  %vm9 = vcmask 261120
  %s10 = scalar_lea.vmem %s1, 2
  %11 = vst.msk [vmem:[%s10] ss:$8 sm:$0xf] %vm9, %v8
  %s12 = scalar_lea.vmem %s1, 4294967267
  %13 = vst.msk [vmem:[%s12] ss:$8 sm:$0xf0] %vm9, %v8
  %s14 = scalar_lea.vmem %s0, 64
  %v15 = vld [vmem:[%s14] ss:$4 sm:$0xff]
  %vm16 = vcmask 261120
  %s17 = scalar_lea.vmem %s1, 4
  %18 = vst.msk [vmem:[%s17] ss:$8 sm:$0xf] %vm16, %v15
  %s19 = scalar_lea.vmem %s1, 4294967269
  %20 = vst.msk [vmem:[%s19] ss:$8 sm:$0xf0] %vm16, %v15
  %s21 = scalar_lea.vmem %s0, 96
  %v22 = vld [vmem:[%s21] ss:$4 sm:$0xff]
  %vm23 = vcmask 261120
  %s24 = scalar_lea.vmem %s1, 6
  %25 = vst.msk [vmem:[%s24] ss:$8 sm:$0xf] %vm23, %v22
  %s26 = scalar_lea.vmem %s1, 4294967271
  %27 = vst.msk [vmem:[%s26] ss:$8 sm:$0xf0] %vm23, %v22
  %s28 = scalar_lea.vmem %s0, 128
  %v29 = vld [vmem:[%s28] ss:$4 sm:$0xf]
  %vm30 = vcmask 261120
  %s31 = scalar_lea.vmem %s1, 32
  %32 = vst.msk [vmem:[%s31] ss:$8 sm:$0xf] %vm30, %v29
  %s33 = scalar_lea.vmem %s0, 3
  %s34 = smov 3
  %v35 = vld [vmem:[%s33] ss:$16 sm:%s34]
  %s36 = scalar_lea.vmem %s0, 3
  %s37 = smov 12
  %v38 = vld [vmem:[%s36] ss:$16 sm:%s37]
  %vm39 = vcmask 1043458
  %v40 = vsel %vm39, %v38, %v35
  %s41 = scalar_lea.vmem %s0, 3
  %s42 = smov 48
  %v43 = vld [vmem:[%s41] ss:$16 sm:%s42]
  %vm44 = vcmask 1045508
  %v45 = vsel %vm44, %v43, %v40
  %s46 = scalar_lea.vmem %s0, 3
  %s47 = smov 192
  %v48 = vld [vmem:[%s46] ss:$16 sm:%s47]
  %vm49 = vcmask 1047558
  %v50 = vsel %vm49, %v48, %v45
  %51 = vrot.lane.b32.xlu0 %v50, 96
  %v52 = vpop.permute.xlu0 %51
  %vm53 = vcmask 1048320
  %54 = vst.msk [vmem:[%s1] sm:$0xff] %vm53, %v52
  %s55 = scalar_lea.vmem %s0, 131
  %s56 = smov 3
  %v57 = vld [vmem:[%s55] ss:$-124 sm:%s56]
  %s58 = scalar_lea.vmem %s0, 4294967287
  %s59 = smov 12
  %v60 = vld [vmem:[%s58] ss:$16 sm:%s59]
  %vm61 = vcmask 1043458
  %v62 = vsel %vm61, %v60, %v57
  %s63 = scalar_lea.vmem %s0, 4294967287
  %s64 = smov 48
  %v65 = vld [vmem:[%s63] ss:$16 sm:%s64]
  %vm66 = vcmask 1045508
  %v67 = vsel %vm66, %v65, %v62
  %s68 = scalar_lea.vmem %s0, 4294967287
  %s69 = smov 192
  %v70 = vld [vmem:[%s68] ss:$16 sm:%s69]
  %vm71 = vcmask 1047558
  %v72 = vsel %vm71, %v70, %v67
  %73 = vrot.lane.b32.xlu0 %v72, 96
  %v74 = vpop.permute.xlu0 %73
  %vm75 = vcmask 1048320
  %s76 = scalar_lea.vmem %s1, 32
  %77 = vst.msk [vmem:[%s76] ss:$-24 sm:$0x3] %vm75, %v74
  %s78 = scalar_lea.vmem %s1, 7
  %79 = vst.msk [vmem:[%s78] sm:$0xfc] %vm75, %v74
  %s80 = scalar_lea.vmem %s0, 135
  %s81 = smov 3
  %v82 = vld [vmem:[%s80] ss:$-16 sm:%s81]
  %s83 = scalar_lea.vmem %s0, 4294967275
  %s84 = smov 12
  %v85 = vld [vmem:[%s83] ss:$16 sm:%s84]
  %vm86 = vcmask 1043458
  %v87 = vsel %vm86, %v85, %v82
  %s88 = scalar_lea.vmem %s0, 4294967275
  %s89 = smov 48
  %v90 = vld [vmem:[%s88] ss:$16 sm:%s89]
  %vm91 = vcmask 1045508
  %v92 = vsel %vm91, %v90, %v87
  %s93 = scalar_lea.vmem %s0, 4294967275
  %s94 = smov 192
  %v95 = vld [vmem:[%s93] ss:$16 sm:%s94]
  %vm96 = vcmask 1047558
  %v97 = vsel %vm96, %v95, %v92
  %98 = vrot.lane.b32.xlu0 %v97, 96
  %v99 = vpop.permute.xlu0 %98
  %vm100 = vcmask 1048320
  %s101 = scalar_lea.vmem %s1, 40
  %102 = vst.msk [vmem:[%s101] ss:$-25 sm:$0x3] %vm100, %v99
  %s103 = scalar_lea.vmem %s1, 14
  %104 = vst.msk [vmem:[%s103] sm:$0xfc] %vm100, %v99
  %s105 = scalar_lea.vmem %s0, 139
  %v106 = vld [vmem:[%s105] sm:$0x1]
  %s107 = scalar_lea.vmem %s0, 91
  %s108 = smov 6
  %v109 = vld [vmem:[%s107] ss:$16 sm:%s108]
  %vm110 = vcmask 1042433
  %v111 = vsel %vm110, %v109, %v106
  %s112 = scalar_lea.vmem %s0, 4294967263
  %s113 = smov 24
  %v114 = vld [vmem:[%s112] ss:$16 sm:%s113]
  %vm115 = vcmask 1044483
  %v116 = vsel %vm115, %v114, %v111
  %s117 = scalar_lea.vmem %s0, 4294967263
  %s118 = smov 96
  %v119 = vld [vmem:[%s117] ss:$16 sm:%s118]
  %vm120 = vcmask 1046533
  %v121 = vsel %vm120, %v119, %v116
  %s122 = scalar_lea.vmem %s0, 72
  %v123 = vld [vmem:[%s122] sm:$0x80]
  %vm124 = vcmask 1047559
  %v125 = vsel %vm124, %v123, %v121
  %126 = vrot.lane.b32.xlu0 %v125, 96
  %v127 = vpop.permute.xlu0 %126
  %vm128 = vcmask 1048320
  %s129 = scalar_lea.vmem %s1, 48
  %130 = vst.msk [vmem:[%s129] ss:$-26 sm:$0x3] %vm128, %v127
  %s131 = scalar_lea.vmem %s1, 21
  %132 = vst.msk [vmem:[%s131] sm:$0xfc] %vm128, %v127
  %s133 = scalar_lea.vmem %s0, 143
  %s134 = smov 3
  %v135 = vld [vmem:[%s133] ss:$-48 sm:%s134]
  %s136 = scalar_lea.vmem %s0, 79
  %s137 = smov 12
  %v138 = vld [vmem:[%s136] ss:$16 sm:%s137]
  %vm139 = vcmask 1043458
  %v140 = vsel %vm139, %v138, %v135
  %141 = vrot.lane.b32.xlu0 %v140, 96
  %v142 = vpop.permute.xlu0 %141
  %vm143 = vcmask 1048320
  %s144 = scalar_lea.vmem %s1, 56
  %145 = vst.msk [vmem:[%s144] ss:$-27 sm:$0x3] %vm143, %v142
  %s146 = scalar_lea.vmem %s1, 28
  %147 = vst.msk [vmem:[%s146] sm:$0xc] %vm143, %v142
  %s148 = scalar_lea.vmem %s0, 2
  %s149 = smov 3
  %v150 = vld [vmem:[%s148] ss:$16 sm:%s149]
  %s151 = scalar_lea.vmem %s0, 2
  %s152 = smov 12
  %v153 = vld [vmem:[%s151] ss:$16 sm:%s152]
  %vm154 = vcmask 1043458
  %v155 = vsel %vm154, %v153, %v150
  %s156 = scalar_lea.vmem %s0, 2
  %s157 = smov 48
  %v158 = vld [vmem:[%s156] ss:$16 sm:%s157]
  %vm159 = vcmask 1045508
  %v160 = vsel %vm159, %v158, %v155
  %s161 = scalar_lea.vmem %s0, 2
  %s162 = smov 192
  %v163 = vld [vmem:[%s161] ss:$16 sm:%s162]
  %vm164 = vcmask 1047558
  %v165 = vsel %vm164, %v163, %v160
  %166 = vrot.lane.b32.xlu0 %v165, 64
  %v167 = vpop.permute.xlu0 %166
  %vm168 = vcmask 785920
  %169 = vst.msk [vmem:[%s1] sm:$0xff] %vm168, %v167
  %s170 = scalar_lea.vmem %s0, 130
  %s171 = smov 3
  %v172 = vld [vmem:[%s170] ss:$-124 sm:%s171]
  %s173 = scalar_lea.vmem %s0, 4294967286
  %s174 = smov 12
  %v175 = vld [vmem:[%s173] ss:$16 sm:%s174]
  %vm176 = vcmask 1043458
  %v177 = vsel %vm176, %v175, %v172
  %s178 = scalar_lea.vmem %s0, 4294967286
  %s179 = smov 48
  %v180 = vld [vmem:[%s178] ss:$16 sm:%s179]
  %vm181 = vcmask 1045508
  %v182 = vsel %vm181, %v180, %v177
  %s183 = scalar_lea.vmem %s0, 4294967286
  %s184 = smov 192
  %v185 = vld [vmem:[%s183] ss:$16 sm:%s184]
  %vm186 = vcmask 1047558
  %v187 = vsel %vm186, %v185, %v182
  %188 = vrot.lane.b32.xlu0 %v187, 64
  %v189 = vpop.permute.xlu0 %188
  %vm190 = vcmask 785920
  %s191 = scalar_lea.vmem %s1, 32
  %192 = vst.msk [vmem:[%s191] ss:$-24 sm:$0x3] %vm190, %v189
  %s193 = scalar_lea.vmem %s1, 7
  %194 = vst.msk [vmem:[%s193] sm:$0xfc] %vm190, %v189
  %s195 = scalar_lea.vmem %s0, 134
  %s196 = smov 3
  %v197 = vld [vmem:[%s195] ss:$-16 sm:%s196]
  %s198 = scalar_lea.vmem %s0, 4294967274
  %s199 = smov 12
  %v200 = vld [vmem:[%s198] ss:$16 sm:%s199]
  %vm201 = vcmask 1043458
  %v202 = vsel %vm201, %v200, %v197
  %s203 = scalar_lea.vmem %s0, 4294967274
  %s204 = smov 48
  %v205 = vld [vmem:[%s203] ss:$16 sm:%s204]
  %vm206 = vcmask 1045508
  %v207 = vsel %vm206, %v205, %v202
  %s208 = scalar_lea.vmem %s0, 4294967274
  %s209 = smov 192
  %v210 = vld [vmem:[%s208] ss:$16 sm:%s209]
  %vm211 = vcmask 1047558
  %v212 = vsel %vm211, %v210, %v207
  %213 = vrot.lane.b32.xlu0 %v212, 64
  %v214 = vpop.permute.xlu0 %213
  %vm215 = vcmask 785920
  %s216 = scalar_lea.vmem %s1, 40
  %217 = vst.msk [vmem:[%s216] ss:$-25 sm:$0x3] %vm215, %v214
  %s218 = scalar_lea.vmem %s1, 14
  %219 = vst.msk [vmem:[%s218] sm:$0xfc] %vm215, %v214
  %s220 = scalar_lea.vmem %s0, 138
  %v221 = vld [vmem:[%s220] sm:$0x1]
  %s222 = scalar_lea.vmem %s0, 90
  %s223 = smov 6
  %v224 = vld [vmem:[%s222] ss:$16 sm:%s223]
  %vm225 = vcmask 1042433
  %v226 = vsel %vm225, %v224, %v221
  %s227 = scalar_lea.vmem %s0, 4294967262
  %s228 = smov 24
  %v229 = vld [vmem:[%s227] ss:$16 sm:%s228]
  %vm230 = vcmask 1044483
  %v231 = vsel %vm230, %v229, %v226
  %s232 = scalar_lea.vmem %s0, 4294967262
  %s233 = smov 96
  %v234 = vld [vmem:[%s232] ss:$16 sm:%s233]
  %vm235 = vcmask 1046533
  %v236 = vsel %vm235, %v234, %v231
  %s237 = scalar_lea.vmem %s0, 71
  %v238 = vld [vmem:[%s237] sm:$0x80]
  %vm239 = vcmask 1047559
  %v240 = vsel %vm239, %v238, %v236
  %241 = vrot.lane.b32.xlu0 %v240, 64
  %v242 = vpop.permute.xlu0 %241
  %vm243 = vcmask 785920
  %s244 = scalar_lea.vmem %s1, 48
  %245 = vst.msk [vmem:[%s244] ss:$-26 sm:$0x3] %vm243, %v242
  %s246 = scalar_lea.vmem %s1, 21
  %247 = vst.msk [vmem:[%s246] sm:$0xfc] %vm243, %v242
  %s248 = scalar_lea.vmem %s0, 142
  %s249 = smov 3
  %v250 = vld [vmem:[%s248] ss:$-48 sm:%s249]
  %s251 = scalar_lea.vmem %s0, 78
  %s252 = smov 12
  %v253 = vld [vmem:[%s251] ss:$16 sm:%s252]
  %vm254 = vcmask 1043458
  %v255 = vsel %vm254, %v253, %v250
  %256 = vrot.lane.b32.xlu0 %v255, 64
  %v257 = vpop.permute.xlu0 %256
  %vm258 = vcmask 785920
  %s259 = scalar_lea.vmem %s1, 56
  %260 = vst.msk [vmem:[%s259] ss:$-27 sm:$0x3] %vm258, %v257
  %s261 = scalar_lea.vmem %s1, 28
  %262 = vst.msk [vmem:[%s261] sm:$0xc] %vm258, %v257
  %s263 = scalar_lea.vmem %s0, 1
  %s264 = smov 3
  %v265 = vld [vmem:[%s263] ss:$16 sm:%s264]
  %s266 = scalar_lea.vmem %s0, 1
  %s267 = smov 12
  %v268 = vld [vmem:[%s266] ss:$16 sm:%s267]
  %vm269 = vcmask 1043458
  %v270 = vsel %vm269, %v268, %v265
  %s271 = scalar_lea.vmem %s0, 1
  %s272 = smov 48
  %v273 = vld [vmem:[%s271] ss:$16 sm:%s272]
  %vm274 = vcmask 1045508
  %v275 = vsel %vm274, %v273, %v270
  %s276 = scalar_lea.vmem %s0, 1
  %s277 = smov 192
  %v278 = vld [vmem:[%s276] ss:$16 sm:%s277]
  %vm279 = vcmask 1047558
  %v280 = vsel %vm279, %v278, %v275
  %281 = vrot.lane.b32.xlu0 %v280, 32
  %v282 = vpop.permute.xlu0 %281
  %vm283 = vcmask 523520
  %284 = vst.msk [vmem:[%s1] sm:$0xff] %vm283, %v282
  %s285 = scalar_lea.vmem %s0, 129
  %s286 = smov 3
  %v287 = vld [vmem:[%s285] ss:$-124 sm:%s286]
  %s288 = scalar_lea.vmem %s0, 4294967285
  %s289 = smov 12
  %v290 = vld [vmem:[%s288] ss:$16 sm:%s289]
  %vm291 = vcmask 1043458
  %v292 = vsel %vm291, %v290, %v287
  %s293 = scalar_lea.vmem %s0, 4294967285
  %s294 = smov 48
  %v295 = vld [vmem:[%s293] ss:$16 sm:%s294]
  %vm296 = vcmask 1045508
  %v297 = vsel %vm296, %v295, %v292
  %s298 = scalar_lea.vmem %s0, 4294967285
  %s299 = smov 192
  %v300 = vld [vmem:[%s298] ss:$16 sm:%s299]
  %vm301 = vcmask 1047558
  %v302 = vsel %vm301, %v300, %v297
  %303 = vrot.lane.b32.xlu0 %v302, 32
  %v304 = vpop.permute.xlu0 %303
  %vm305 = vcmask 523520
  %s306 = scalar_lea.vmem %s1, 32
  %307 = vst.msk [vmem:[%s306] ss:$-24 sm:$0x3] %vm305, %v304
  %s308 = scalar_lea.vmem %s1, 7
  %309 = vst.msk [vmem:[%s308] sm:$0xfc] %vm305, %v304
  %s310 = scalar_lea.vmem %s0, 133
  %s311 = smov 3
  %v312 = vld [vmem:[%s310] ss:$-16 sm:%s311]
  %s313 = scalar_lea.vmem %s0, 4294967273
  %s314 = smov 12
  %v315 = vld [vmem:[%s313] ss:$16 sm:%s314]
  %vm316 = vcmask 1043458
  %v317 = vsel %vm316, %v315, %v312
  %s318 = scalar_lea.vmem %s0, 4294967273
  %s319 = smov 48
  %v320 = vld [vmem:[%s318] ss:$16 sm:%s319]
  %vm321 = vcmask 1045508
  %v322 = vsel %vm321, %v320, %v317
  %s323 = scalar_lea.vmem %s0, 4294967273
  %s324 = smov 192
  %v325 = vld [vmem:[%s323] ss:$16 sm:%s324]
  %vm326 = vcmask 1047558
  %v327 = vsel %vm326, %v325, %v322
  %328 = vrot.lane.b32.xlu0 %v327, 32
  %v329 = vpop.permute.xlu0 %328
  %vm330 = vcmask 523520
  %s331 = scalar_lea.vmem %s1, 40
  %332 = vst.msk [vmem:[%s331] ss:$-25 sm:$0x3] %vm330, %v329
  %s333 = scalar_lea.vmem %s1, 14
  %334 = vst.msk [vmem:[%s333] sm:$0xfc] %vm330, %v329
  %s335 = scalar_lea.vmem %s0, 137
  %v336 = vld [vmem:[%s335] sm:$0x1]
  %s337 = scalar_lea.vmem %s0, 89
  %s338 = smov 6
  %v339 = vld [vmem:[%s337] ss:$16 sm:%s338]
  %vm340 = vcmask 1042433
  %v341 = vsel %vm340, %v339, %v336
  %s342 = scalar_lea.vmem %s0, 4294967261
  %s343 = smov 24
  %v344 = vld [vmem:[%s342] ss:$16 sm:%s343]
  %vm345 = vcmask 1044483
  %v346 = vsel %vm345, %v344, %v341
  %s347 = scalar_lea.vmem %s0, 4294967261
  %s348 = smov 96
  %v349 = vld [vmem:[%s347] ss:$16 sm:%s348]
  %vm350 = vcmask 1046533
  %v351 = vsel %vm350, %v349, %v346
  %s352 = scalar_lea.vmem %s0, 70
  %v353 = vld [vmem:[%s352] sm:$0x80]
  %vm354 = vcmask 1047559
  %v355 = vsel %vm354, %v353, %v351
  %356 = vrot.lane.b32.xlu0 %v355, 32
  %v357 = vpop.permute.xlu0 %356
  %vm358 = vcmask 523520
  %s359 = scalar_lea.vmem %s1, 48
  %360 = vst.msk [vmem:[%s359] ss:$-26 sm:$0x3] %vm358, %v357
  %s361 = scalar_lea.vmem %s1, 21
  %362 = vst.msk [vmem:[%s361] sm:$0xfc] %vm358, %v357
  %s363 = scalar_lea.vmem %s0, 141
  %s364 = smov 3
  %v365 = vld [vmem:[%s363] ss:$-48 sm:%s364]
  %s366 = scalar_lea.vmem %s0, 77
  %s367 = smov 12
  %v368 = vld [vmem:[%s366] ss:$16 sm:%s367]
  %vm369 = vcmask 1043458
  %v370 = vsel %vm369, %v368, %v365
  %371 = vrot.lane.b32.xlu0 %v370, 32
  %v372 = vpop.permute.xlu0 %371
  %vm373 = vcmask 523520
  %s374 = scalar_lea.vmem %s1, 56
  %375 = vst.msk [vmem:[%s374] ss:$-27 sm:$0x3] %vm373, %v372
  %s376 = scalar_lea.vmem %s1, 28
  %377 = vst.msk [vmem:[%s376] sm:$0xc] %vm373, %v372

// kernel: psa_forward.3
$region0: #{psa_forward.3}
  #allocation0 [shape = 'u32[]', space=smem, size = 0x4, offset = 0x4, fixed_abs, tag = 'smem constant byte address 0x4 - core index']
  #allocation1 [shape = 'u32[144,128]{1,0:T(1,128)}', space=vmem, size = 0x12000, scoped, tag = 'internal scratch']
  %s0 = inlined_call_operand.vmem [shape: f32[2,18,576], index: 0, kind: input, shape index: {}]
  %s1 = inlined_call_operand.vmem [shape: f32[9,512], index: 1, kind: input, shape index: {}]
  %s2 = inlined_call_operand.vmem [shape: f32[9,512], index: 2, kind: input, shape index: {}]
  %s3 = inlined_call_operand.vmem [shape: f32[2,16,512], index: 3, kind: input, shape index: {}]
  %s4 = inlined_call_operand.vmem [shape: f32[2,16,512], index: 4, kind: output, shape index: {}]
  %s5 = sld [smem:[#allocation0]]
  $region49: #{psa_forward.3} parent=0
    _
  %s7 = ssub.s32 1, %s5
  %s8 = scalar_select 0, %s7, %s5
  loop: start=0, step=1, limit=4
  $region2: #{psa_forward.3} parent=0 // loop_pre_header
    _
  $region3: #{psa_forward.3} parent=0 // loop_header
    %s10 = sphi 0, %s14
    %p11 = scmp.ge.s32.totalorder %s10, 4
    %s20 = sphi 0, %s22
    %s23 = sphi 0, %s20
    %s24 = sphi 0, %s23
    %s40 = sphi 0, %s24
    %s44 = sphi 0, %s44
    %s46 = sphi 0, %s44
    %s47 = sphi 0, %s46
    %s61 = sphi 0, %s47
    %s65 = sphi 0, %s65
    %s67 = sphi 0, %s65
    %s68 = sphi 0, %s67
    %s82 = sphi 0, %s68
    %s88 = sphi 0, %s90
    %s91 = sphi 0, %s88
    %s92 = sphi 0, %s91
    %s108 = sphi 0, %s92
    %s114 = sphi 0, %s116
    %s117 = sphi 0, %s114
    %s118 = sphi 0, %s117
    %s134 = sphi 0, %s118
  $region4: #{psa_forward.3} parent=0 // loop_header_branch
    %13 = sbr.rel (%p11) target = $region8
  $region5: #{psa_forward.3} parent=0 // loop_body
    %s15 = ssub.s32 %s10, 1
    %s16 = ssub.s32 %s10, 2
    %s17 = sadd.s32 %s10, 1
    %s18 = ssub.s32 %s10, %s17
    %p19 = scmp.eq.s32.totalorder %s18, 0
    %s21 = sadd.s32 %s20, 1
    %s22 = scalar_select %p19, %s20, %s21
    %p25 = pneg %p19
    %p26 = scmp.eq.s32.totalorder %s10, 1
    %p27 = por %p25, %p26
    %p28 = scmp.ne.s32.totalorder %s20, %s23
    %p29 = scmp.eq.s32.totalorder %s10, 0
    %p30 = por %p28, %p29
    %p31 = scmp.ne.s32.totalorder %s20, %s23
    %p32 = scmp.eq.s32.totalorder %s15, 1
    %p33 = por %p31, %p32
    %p34 = scmp.ne.s32.totalorder %s23, %s24
    %p35 = scmp.eq.s32.totalorder %s15, 0
    %p36 = por %p34, %p35
    %p37 = scmp.ne.s32.totalorder %s23, %s24
    %p38 = scmp.eq.s32.totalorder %s16, 1
    %p39 = por %p37, %p38
    %p41 = scmp.ne.s32.totalorder %s24, %s40
    %p42 = scmp.eq.s32.totalorder %s16, 0
    %p43 = por %p41, %p42
    %s45 = sadd.s32 %s44, 1
    %p48 = scmp.eq.s32.totalorder %s10, 1
    %p49 = scmp.ne.s32.totalorder %s44, %s46
    %p50 = scmp.eq.s32.totalorder %s10, 0
    %p51 = por %p49, %p50
    %p52 = scmp.ne.s32.totalorder %s44, %s46
    %p53 = scmp.eq.s32.totalorder %s15, 1
    %p54 = por %p52, %p53
    %p55 = scmp.ne.s32.totalorder %s46, %s47
    %p56 = scmp.eq.s32.totalorder %s15, 0
    %p57 = por %p55, %p56
    %p58 = scmp.ne.s32.totalorder %s46, %s47
    %p59 = scmp.eq.s32.totalorder %s16, 1
    %p60 = por %p58, %p59
    %p62 = scmp.ne.s32.totalorder %s47, %s61
    %p63 = scmp.eq.s32.totalorder %s16, 0
    %p64 = por %p62, %p63
    %s66 = sadd.s32 %s65, 1
    %p69 = scmp.eq.s32.totalorder %s10, 1
    %p70 = scmp.ne.s32.totalorder %s65, %s67
    %p71 = scmp.eq.s32.totalorder %s10, 0
    %p72 = por %p70, %p71
    %p73 = scmp.ne.s32.totalorder %s65, %s67
    %p74 = scmp.eq.s32.totalorder %s15, 1
    %p75 = por %p73, %p74
    %p76 = scmp.ne.s32.totalorder %s67, %s68
    %p77 = scmp.eq.s32.totalorder %s15, 0
    %p78 = por %p76, %p77
    %p79 = scmp.ne.s32.totalorder %s67, %s68
    %p80 = scmp.eq.s32.totalorder %s16, 1
    %p81 = por %p79, %p80
    %p83 = scmp.ne.s32.totalorder %s68, %s82
    %p84 = scmp.eq.s32.totalorder %s16, 0
    %p85 = por %p83, %p84
    %s86 = ssub.s32 %s10, %s17
    %p87 = scmp.eq.s32.totalorder %s86, 0
    %s89 = sadd.s32 %s88, 1
    %s90 = scalar_select %p87, %s88, %s89
    %p93 = pneg %p87
    %p94 = scmp.eq.s32.totalorder %s10, 1
    %p95 = por %p93, %p94
    %p96 = scmp.ne.s32.totalorder %s88, %s91
    %p97 = scmp.eq.s32.totalorder %s10, 0
    %p98 = por %p96, %p97
    %p99 = scmp.ne.s32.totalorder %s88, %s91
    %p100 = scmp.eq.s32.totalorder %s15, 1
    %p101 = por %p99, %p100
    %p102 = scmp.ne.s32.totalorder %s91, %s92
    %p103 = scmp.eq.s32.totalorder %s15, 0
    %p104 = por %p102, %p103
    %p105 = scmp.ne.s32.totalorder %s91, %s92
    %p106 = scmp.eq.s32.totalorder %s16, 1
    %p107 = por %p105, %p106
    %p109 = scmp.ne.s32.totalorder %s92, %s108
    %p110 = scmp.eq.s32.totalorder %s16, 0
    %p111 = por %p109, %p110
    %s112 = ssub.s32 %s10, %s17
    %p113 = scmp.eq.s32.totalorder %s112, 0
    %s115 = sadd.s32 %s114, 1
    %s116 = scalar_select %p113, %s114, %s115
    %p119 = pneg %p113
    %p120 = scmp.eq.s32.totalorder %s10, 1
    %p121 = por %p119, %p120
    %p122 = scmp.ne.s32.totalorder %s114, %s117
    %p123 = scmp.eq.s32.totalorder %s10, 0
    %p124 = por %p122, %p123
    %p125 = scmp.ne.s32.totalorder %s114, %s117
    %p126 = scmp.eq.s32.totalorder %s15, 1
    %p127 = por %p125, %p126
    %p128 = scmp.ne.s32.totalorder %s117, %s118
    %p129 = scmp.eq.s32.totalorder %s15, 0
    %p130 = por %p128, %p129
    %p131 = scmp.ne.s32.totalorder %s117, %s118
    %p132 = scmp.eq.s32.totalorder %s16, 1
    %p133 = por %p131, %p132
    %p135 = scmp.ne.s32.totalorder %s118, %s134
    %p136 = scmp.eq.s32.totalorder %s16, 0
    %p137 = por %p135, %p136
    %p138 = scmp.le.s32.totalorder 1, %s10
    %p139 = scmp.lt.s32.totalorder %s10, 3
    %p140 = pnand %p138, %p139
    %p141 = pneg %p140
    // Predicated region
    $region9: #{psa_forward.3} parent=5 // pred_check
      _
    $region10: #{psa_forward.3} parent=5 // pred_check_branch
      %143 = sbr.rel (%p140) target = $region12
    $region11: #{psa_forward.3} parent=5 // pred_region
      %s144 = ssub.s32 %s10, 1
      // Predicated region
      $region13: #{psa_forward.3} parent=11 // pred_check
        %p145 = pneg %p57
      $region14: #{psa_forward.3} parent=11 // pred_check_branch
        %147 = sbr.rel (%p145) target = $region16
      $region15: #{psa_forward.3} parent=11 // pred_region
        _
      $region16: #{psa_forward.3} parent=11 // pred_fallthru
        _
      // Predicated region
      $region17: #{psa_forward.3} parent=11 // pred_check
        %p148 = pneg %p78
      $region18: #{psa_forward.3} parent=11 // pred_check_branch
        %150 = sbr.rel (%p148) target = $region20
      $region19: #{psa_forward.3} parent=11 // pred_region
        _
      $region20: #{psa_forward.3} parent=11 // pred_fallthru
        _
    $region12: #{psa_forward.3} parent=5 // pred_fallthru
      _
    %p151 = scmp.lt.s32.totalorder %s10, 2
    // Predicated region
    $region21: #{psa_forward.3} parent=5 // pred_check
      %p152 = pneg %p151
    $region22: #{psa_forward.3} parent=5 // pred_check_branch
      %154 = sbr.rel (%p152) target = $region24
    $region23: #{psa_forward.3} parent=5 // pred_region
      // Predicated region
      $region25: #{psa_forward.3} parent=23 // pred_check
        %p155 = pneg %p30
      $region26: #{psa_forward.3} parent=23 // pred_check_branch
        %157 = sbr.rel (%p155) target = $region28
      $region27: #{psa_forward.3} parent=23 // pred_region
        %p158 = scmp.lt.s32.totalorder %s10, 1
        %s159 = scalar_select %p158, %s10, 1
        %s160 = smul.addr %s159, 15
        %s161 = smul.addr %s160, 8
        %s162 = scalar_lea.vmem %s0, %s161
      $region28: #{psa_forward.3} parent=23 // pred_fallthru
        _
      // Predicated region
      $region29: #{psa_forward.3} parent=23 // pred_check
        %p163 = pneg %p98
      $region30: #{psa_forward.3} parent=23 // pred_check_branch
        %165 = sbr.rel (%p163) target = $region32
      $region31: #{psa_forward.3} parent=23 // pred_region
        %p166 = scmp.lt.s32.totalorder %s10, 1
        %s167 = scalar_select %p166, %s10, 1
        %s168 = smul.addr %s167, 8
        %s169 = smul.addr %s168, 8
        %s170 = scalar_lea.vmem %s3, %s169
      $region32: #{psa_forward.3} parent=23 // pred_fallthru
        _
    $region24: #{psa_forward.3} parent=5 // pred_fallthru
      _
    %p171 = scmp.le.s32.totalorder 1, %s10
    %p172 = scmp.lt.s32.totalorder %s10, 3
    %p173 = pnand %p171, %p172
    %p174 = pneg %p173
    // Predicated region
    $region33: #{psa_forward.3} parent=5 // pred_check
      _
    $region34: #{psa_forward.3} parent=5 // pred_check_branch
      %176 = sbr.rel (%p173) target = $region36
    $region35: #{psa_forward.3} parent=5 // pred_region
      %s177 = ssub.s32 %s10, 1
      %p178 = scmp.lt.s32.totalorder %s15, 1
      %s179 = scalar_select %p178, %s15, 1
      %s180 = smul.addr %s179, 15
      %s181 = smul.addr %s180, 8
      %s182 = scalar_lea.vmem %s0, %s181
      %p183 = pneg %p36
      %p184 = pneg %p33
      %p185 = pneg %p57
      %p186 = pneg %p54
      %p187 = pneg %p78
      %p188 = pneg %p75
      %p189 = scmp.lt.s32.totalorder %s15, 1
      %s190 = scalar_select %p189, %s15, 1
      %s191 = smul.addr %s190, 8
      %s192 = smul.addr %s191, 8
      %s193 = scalar_lea.vmem %s3, %s192
      %p194 = pneg %p104
      %p195 = pneg %p101
      %p196 = pneg %p130
      %p197 = pneg %p127
      %p198 = scmp.lt.s32.totalorder %s15, 1
      %s199 = scalar_select %p198, %s15, 1
      %s200 = smul.addr %s199, 8
      %s201 = smul.addr %s200, 8
      %s202 = scalar_lea.vmem %s4, %s201
      %p203 = scmp.lt.s32.totalorder %s15, 1
      %s204 = scalar_select %p203, %s15, 1
      %s205 = smul.addr %s204, 15
      %s206 = smul.addr %s205, 8
      %s207 = scalar_lea.vmem %s0, %s206
      %p208 = scmp.lt.s32.totalorder %s15, 1
      %s209 = scalar_select %p208, %s15, 1
      %s210 = smul.addr %s209, 8
      %s211 = smul.addr %s210, 8
      %s212 = scalar_lea.vmem %s3, %s211
      %p213 = scmp.lt.s32.totalorder %s15, 1
      %s214 = scalar_select %p213, %s15, 1
      %s215 = smul.addr %s214, 8
      %s216 = smul.addr %s215, 8
      %s217 = scalar_lea.vmem %s4, %s216
      %v218 = vld [vmem:[%s207] sm:$0xff]
      %v219 = vld [vmem:[%s207 + $0x8] sm:$0xff]
      %v220 = vld [vmem:[%s207 + $0x10] sm:$0xff]
      %v221 = vld [vmem:[%s207 + $0x18] sm:$0xff]
      %v222 = vld [vmem:[%s207 + $0x20] sm:$0xff]
      %v223 = vld [vmem:[%s207 + $0x28] sm:$0xff]
      %v224 = vld [vmem:[%s207 + $0x30] sm:$0xff]
      %v225 = vld [vmem:[%s207 + $0x38] sm:$0xff]
      %v226 = vld [vmem:[%s207 + $0x40] sm:$0xff]
      %v227 = vld [vmem:[%s207 + $0x48] sm:$0xff]
      %v228 = vld [vmem:[%s207 + $0x50] sm:$0x3]
      %v229 = vld [vmem:[%s207 + $0x58] sm:$0x3]
      %v230 = vld [vmem:[%s207 + $0x60] sm:$0x3]
      %v231 = vld [vmem:[%s207 + $0x68] sm:$0x3]
      %v232 = vld [vmem:[%s207 + $0x70] sm:$0x3]
      %v233 = vld [vmem:[%s1] sm:$0xff]
      %v234 = vld [vmem:[%s1 + $0x8] sm:$0xff]
      %v235 = vld [vmem:[%s1 + $0x10] sm:$0xff]
      %v236 = vld [vmem:[%s1 + $0x18] sm:$0xff]
      %v237 = vld [vmem:[%s1 + $0x20] sm:$0x1]
      %v238 = vld [vmem:[%s1 + $0x28] sm:$0x1]
      %v239 = vld [vmem:[%s1 + $0x30] sm:$0x1]
      %v240 = vld [vmem:[%s1 + $0x38] sm:$0x1]
      %v241 = vld [vmem:[%s2] sm:$0xff]
      %v242 = vld [vmem:[%s2 + $0x8] sm:$0xff]
      %v243 = vld [vmem:[%s2 + $0x10] sm:$0xff]
      %v244 = vld [vmem:[%s2 + $0x18] sm:$0xff]
      %v245 = vld [vmem:[%s2 + $0x20] sm:$0x1]
      %v246 = vld [vmem:[%s2 + $0x28] sm:$0x1]
      %v247 = vld [vmem:[%s2 + $0x30] sm:$0x1]
      %v248 = vld [vmem:[%s2 + $0x38] sm:$0x1]
      %v249 = vlaneseq
      %v250 = vshrl.u32 %v249, 7
      %v251 = vsub.s32 0, %v250
      %v252 = vrot.slane %v233, %v251
      %v253 = vlaneseq
      %v254 = vshrl.u32 %v253, 7
      %v255 = vsub.s32 0, %v254
      %v256 = vrot.slane %v234, %v255
      %v257 = vlaneseq
      %v258 = vshrl.u32 %v257, 7
      %v259 = vsub.s32 0, %v258
      %v260 = vrot.slane %v235, %v259
      %v261 = vlaneseq
      %v262 = vshrl.u32 %v261, 7
      %v263 = vsub.s32 0, %v262
      %v264 = vrot.slane %v236, %v263
      %v265 = vmul.f32 %v218, %v252
      %v266 = vmul.f32 %v219, %v256
      %v267 = vmul.f32 %v220, %v260
      %v268 = vmul.f32 %v221, %v264
      %v269 = vmul.f32 %v223, %v252
      %v270 = vmul.f32 %v224, %v256
      %v271 = vmul.f32 %v225, %v260
      %v272 = vmul.f32 %v226, %v264
      %v273 = vadd.f32 %v265, 0.0
      %v274 = vadd.f32 %v266, 0.0
      %v275 = vadd.f32 %v267, 0.0
      %v276 = vadd.f32 %v268, 0.0
      %v277 = vadd.f32 %v269, 0.0
      %v278 = vadd.f32 %v270, 0.0
      %v279 = vadd.f32 %v271, 0.0
      %v280 = vadd.f32 %v272, 0.0
      %v281 = vlaneseq
      %v282 = vshrl.u32 %v281, 7
      %v283 = vsub.s32 1, %v282
      %v284 = vrot.slane %v233, %v283
      %v285 = vlaneseq
      %v286 = vshrl.u32 %v285, 7
      %v287 = vsub.s32 1, %v286
      %v288 = vrot.slane %v234, %v287
      %v289 = vlaneseq
      %v290 = vshrl.u32 %v289, 7
      %v291 = vsub.s32 1, %v290
      %v292 = vrot.slane %v235, %v291
      %v293 = vlaneseq
      %v294 = vshrl.u32 %v293, 7
      %v295 = vsub.s32 1, %v294
      %v296 = vrot.slane %v236, %v295
      %301 = vrot.lane.b32.xlu0 %v284, 32
      %v302 = vpop.permute.xlu0 %301
      %303 = vrot.lane.b32.xlu0 %v288, 32
      %v304 = vpop.permute.xlu0 %303
      %305 = vrot.lane.b32.xlu0 %v292, 32
      %v306 = vpop.permute.xlu0 %305
      %307 = vrot.lane.b32.xlu0 %v296, 32
      %v308 = vpop.permute.xlu0 %307
      %vm309 = vcmask 261120
      %v310 = vsel %vm309, %v302, %v304
      %v311 = vsel %vm309, %v304, %v306
      %v312 = vsel %vm309, %v306, %v308
      %v318 = vmul.f32 %v218, %v302
      %v319 = vmul.f32 %v219, %v310
      %v320 = vmul.f32 %v220, %v311
      %v321 = vmul.f32 %v221, %v312
      %v322 = vmul.f32 %v222, %v308
      %v323 = vmul.f32 %v223, %v302
      %v324 = vmul.f32 %v224, %v310
      %v325 = vmul.f32 %v225, %v311
      %v326 = vmul.f32 %v226, %v312
      %v327 = vmul.f32 %v227, %v308
      %338 = vrot.lane.b32.xlu0 %v318, 96
      %v339 = vpop.permute.xlu0 %338
      %340 = vrot.lane.b32.xlu0 %v319, 96
      %v341 = vpop.permute.xlu0 %340
      %342 = vrot.lane.b32.xlu0 %v320, 96
      %v343 = vpop.permute.xlu0 %342
      %344 = vrot.lane.b32.xlu0 %v321, 96
      %v345 = vpop.permute.xlu0 %344
      %346 = vrot.lane.b32.xlu0 %v322, 96
      %v347 = vpop.permute.xlu0 %346
      %348 = vrot.lane.b32.xlu0 %v323, 96
      %v349 = vpop.permute.xlu0 %348
      %350 = vrot.lane.b32.xlu0 %v324, 96
      %v351 = vpop.permute.xlu0 %350
      %352 = vrot.lane.b32.xlu0 %v325, 96
      %v353 = vpop.permute.xlu0 %352
      %354 = vrot.lane.b32.xlu0 %v326, 96
      %v355 = vpop.permute.xlu0 %354
      %356 = vrot.lane.b32.xlu0 %v327, 96
      %v357 = vpop.permute.xlu0 %356
      %vm358 = vcmask 785408
      %v359 = vsel %vm358, %v339, %v341
      %v360 = vsel %vm358, %v341, %v343
      %v361 = vsel %vm358, %v343, %v345
      %v362 = vsel %vm358, %v345, %v347
      %v363 = vsel %vm358, %v349, %v351
      %v364 = vsel %vm358, %v351, %v353
      %v365 = vsel %vm358, %v353, %v355
      %v366 = vsel %vm358, %v355, %v357
      %v375 = vadd.f32 %v273, %v359
      %v376 = vadd.f32 %v274, %v360
      %v377 = vadd.f32 %v275, %v361
      %v378 = vadd.f32 %v276, %v362
      %v379 = vadd.f32 %v277, %v363
      %v380 = vadd.f32 %v278, %v364
      %v381 = vadd.f32 %v279, %v365
      %v382 = vadd.f32 %v280, %v366
      %v383 = vlaneseq
      %v384 = vshrl.u32 %v383, 7
      %v385 = vsub.s32 2, %v384
      %v386 = vrot.slane %v233, %v385
      %v387 = vlaneseq
      %v388 = vshrl.u32 %v387, 7
      %v389 = vsub.s32 2, %v388
      %v390 = vrot.slane %v234, %v389
      %v391 = vlaneseq
      %v392 = vshrl.u32 %v391, 7
      %v393 = vsub.s32 2, %v392
      %v394 = vrot.slane %v235, %v393
      %v395 = vlaneseq
      %v396 = vshrl.u32 %v395, 7
      %v397 = vsub.s32 2, %v396
      %v398 = vrot.slane %v236, %v397
      %403 = vrot.lane.b32.xlu0 %v386, 64
      %v404 = vpop.permute.xlu0 %403
      %405 = vrot.lane.b32.xlu0 %v390, 64
      %v406 = vpop.permute.xlu0 %405
      %407 = vrot.lane.b32.xlu0 %v394, 64
      %v408 = vpop.permute.xlu0 %407
      %409 = vrot.lane.b32.xlu0 %v398, 64
      %v410 = vpop.permute.xlu0 %409
      %vm411 = vcmask 523264
      %v412 = vsel %vm411, %v404, %v406
      %v413 = vsel %vm411, %v406, %v408
      %v414 = vsel %vm411, %v408, %v410
      %v420 = vmul.f32 %v218, %v404
      %v421 = vmul.f32 %v219, %v412
      %v422 = vmul.f32 %v220, %v413
      %v423 = vmul.f32 %v221, %v414
      %v424 = vmul.f32 %v222, %v410
      %v425 = vmul.f32 %v223, %v404
      %v426 = vmul.f32 %v224, %v412
      %v427 = vmul.f32 %v225, %v413
      %v428 = vmul.f32 %v226, %v414
      %v429 = vmul.f32 %v227, %v410
      %440 = vrot.lane.b32.xlu0 %v420, 64
      %v441 = vpop.permute.xlu0 %440
      %442 = vrot.lane.b32.xlu0 %v421, 64
      %v443 = vpop.permute.xlu0 %442
      %444 = vrot.lane.b32.xlu0 %v422, 64
      %v445 = vpop.permute.xlu0 %444
      %446 = vrot.lane.b32.xlu0 %v423, 64
      %v447 = vpop.permute.xlu0 %446
      %448 = vrot.lane.b32.xlu0 %v424, 64
      %v449 = vpop.permute.xlu0 %448
      %450 = vrot.lane.b32.xlu0 %v425, 64
      %v451 = vpop.permute.xlu0 %450
      %452 = vrot.lane.b32.xlu0 %v426, 64
      %v453 = vpop.permute.xlu0 %452
      %454 = vrot.lane.b32.xlu0 %v427, 64
      %v455 = vpop.permute.xlu0 %454
      %456 = vrot.lane.b32.xlu0 %v428, 64
      %v457 = vpop.permute.xlu0 %456
      %458 = vrot.lane.b32.xlu0 %v429, 64
      %v459 = vpop.permute.xlu0 %458
      %v460 = vsel %vm411, %v441, %v443
      %v461 = vsel %vm411, %v443, %v445
      %v462 = vsel %vm411, %v445, %v447
      %v463 = vsel %vm411, %v447, %v449
      %v464 = vsel %vm411, %v451, %v453
      %v465 = vsel %vm411, %v453, %v455
      %v466 = vsel %vm411, %v455, %v457
      %v467 = vsel %vm411, %v457, %v459
      %v476 = vadd.f32 %v375, %v460
      %v477 = vadd.f32 %v376, %v461
      %v478 = vadd.f32 %v377, %v462
      %v479 = vadd.f32 %v378, %v463
      %v480 = vadd.f32 %v379, %v464
      %v481 = vadd.f32 %v380, %v465
      %v482 = vadd.f32 %v381, %v466
      %v483 = vadd.f32 %v382, %v467
      %v484 = vlaneseq
      %v485 = vshrl.u32 %v484, 7
      %v486 = vsub.s32 3, %v485
      %v487 = vrot.slane %v233, %v486
      %v488 = vlaneseq
      %v489 = vshrl.u32 %v488, 7
      %v490 = vsub.s32 3, %v489
      %v491 = vrot.slane %v234, %v490
      %v492 = vlaneseq
      %v493 = vshrl.u32 %v492, 7
      %v494 = vsub.s32 3, %v493
      %v495 = vrot.slane %v235, %v494
      %v496 = vlaneseq
      %v497 = vshrl.u32 %v496, 7
      %v498 = vsub.s32 3, %v497
      %v499 = vrot.slane %v236, %v498
      %v500 = vmul.f32 %v218, %v487
      %v501 = vmul.f32 %v219, %v491
      %v502 = vmul.f32 %v220, %v495
      %v503 = vmul.f32 %v221, %v499
      %v504 = vmul.f32 %v223, %v487
      %v505 = vmul.f32 %v224, %v491
      %v506 = vmul.f32 %v225, %v495
      %v507 = vmul.f32 %v226, %v499
      %v508 = vmul.f32 %v228, %v487
      %v509 = vmul.f32 %v229, %v491
      %v510 = vmul.f32 %v230, %v495
      %v511 = vmul.f32 %v231, %v499
      %vm524 = vcmask 1046528
      %v525 = vrot.slane %v500, 1
      %v526 = vrot.slane %v504, 1
      %v527 = vsel %vm524, %v525, %v526
      %v528 = vrot.slane %v501, 1
      %v529 = vrot.slane %v505, 1
      %v530 = vsel %vm524, %v528, %v529
      %v531 = vrot.slane %v502, 1
      %v532 = vrot.slane %v506, 1
      %v533 = vsel %vm524, %v531, %v532
      %v534 = vrot.slane %v503, 1
      %v535 = vrot.slane %v507, 1
      %v536 = vsel %vm524, %v534, %v535
      %v537 = vrot.slane %v508, 1
      %v538 = vsel %vm524, %v526, %v537
      %v539 = vrot.slane %v509, 1
      %v540 = vsel %vm524, %v529, %v539
      %v541 = vrot.slane %v510, 1
      %v542 = vsel %vm524, %v532, %v541
      %v543 = vrot.slane %v511, 1
      %v544 = vsel %vm524, %v535, %v543
      %v553 = vadd.f32 %v476, %v527
      %v554 = vadd.f32 %v477, %v530
      %v555 = vadd.f32 %v478, %v533
      %v556 = vadd.f32 %v479, %v536
      %v557 = vadd.f32 %v480, %v538
      %v558 = vadd.f32 %v481, %v540
      %v559 = vadd.f32 %v482, %v542
      %v560 = vadd.f32 %v483, %v544
      %v561 = vlaneseq
      %v562 = vshrl.u32 %v561, 7
      %v563 = vsub.s32 4, %v562
      %v564 = vrot.slane %v233, %v563
      %v565 = vlaneseq
      %v566 = vshrl.u32 %v565, 7
      %v567 = vsub.s32 4, %v566
      %v568 = vrot.slane %v234, %v567
      %v569 = vlaneseq
      %v570 = vshrl.u32 %v569, 7
      %v571 = vsub.s32 4, %v570
      %v572 = vrot.slane %v235, %v571
      %v573 = vlaneseq
      %v574 = vshrl.u32 %v573, 7
      %v575 = vsub.s32 4, %v574
      %v576 = vrot.slane %v236, %v575
      %581 = vrot.lane.b32.xlu0 %v564, 32
      %v582 = vpop.permute.xlu0 %581
      %583 = vrot.lane.b32.xlu0 %v568, 32
      %v584 = vpop.permute.xlu0 %583
      %585 = vrot.lane.b32.xlu0 %v572, 32
      %v586 = vpop.permute.xlu0 %585
      %587 = vrot.lane.b32.xlu0 %v576, 32
      %v588 = vpop.permute.xlu0 %587
      %v589 = vsel %vm309, %v582, %v584
      %v590 = vsel %vm309, %v584, %v586
      %v591 = vsel %vm309, %v586, %v588
      %v597 = vmul.f32 %v218, %v582
      %v598 = vmul.f32 %v219, %v589
      %v599 = vmul.f32 %v220, %v590
      %v600 = vmul.f32 %v221, %v591
      %v601 = vmul.f32 %v222, %v588
      %v602 = vmul.f32 %v223, %v582
      %v603 = vmul.f32 %v224, %v589
      %v604 = vmul.f32 %v225, %v590
      %v605 = vmul.f32 %v226, %v591
      %v606 = vmul.f32 %v227, %v588
      %v607 = vmul.f32 %v228, %v582
      %v608 = vmul.f32 %v229, %v589
      %v609 = vmul.f32 %v230, %v590
      %v610 = vmul.f32 %v231, %v591
      %v611 = vmul.f32 %v232, %v588
      %v627 = vrot.slane %v597, 1
      %v628 = vrot.slane %v602, 1
      %v629 = vsel %vm524, %v627, %v628
      %v630 = vrot.slane %v598, 1
      %v631 = vrot.slane %v603, 1
      %v632 = vsel %vm524, %v630, %v631
      %v633 = vrot.slane %v599, 1
      %v634 = vrot.slane %v604, 1
      %v635 = vsel %vm524, %v633, %v634
      %v636 = vrot.slane %v600, 1
      %v637 = vrot.slane %v605, 1
      %v638 = vsel %vm524, %v636, %v637
      %v639 = vrot.slane %v601, 1
      %v640 = vrot.slane %v606, 1
      %v641 = vsel %vm524, %v639, %v640
      %v642 = vrot.slane %v607, 1
      %v643 = vsel %vm524, %v628, %v642
      %v644 = vrot.slane %v608, 1
      %v645 = vsel %vm524, %v631, %v644
      %v646 = vrot.slane %v609, 1
      %v647 = vsel %vm524, %v634, %v646
      %v648 = vrot.slane %v610, 1
      %v649 = vsel %vm524, %v637, %v648
      %v650 = vrot.slane %v611, 1
      %v651 = vsel %vm524, %v640, %v650
      %652 = vrot.lane.b32.xlu0 %v629, 96
      %v653 = vpop.permute.xlu0 %652
      %654 = vrot.lane.b32.xlu0 %v632, 96
      %v655 = vpop.permute.xlu0 %654
      %656 = vrot.lane.b32.xlu0 %v635, 96
      %v657 = vpop.permute.xlu0 %656
      %658 = vrot.lane.b32.xlu0 %v638, 96
      %v659 = vpop.permute.xlu0 %658
      %660 = vrot.lane.b32.xlu0 %v641, 96
      %v661 = vpop.permute.xlu0 %660
      %662 = vrot.lane.b32.xlu0 %v643, 96
      %v663 = vpop.permute.xlu0 %662
      %664 = vrot.lane.b32.xlu0 %v645, 96
      %v665 = vpop.permute.xlu0 %664
      %666 = vrot.lane.b32.xlu0 %v647, 96
      %v667 = vpop.permute.xlu0 %666
      %668 = vrot.lane.b32.xlu0 %v649, 96
      %v669 = vpop.permute.xlu0 %668
      %670 = vrot.lane.b32.xlu0 %v651, 96
      %v671 = vpop.permute.xlu0 %670
      %v672 = vsel %vm358, %v653, %v655
      %v673 = vsel %vm358, %v655, %v657
      %v674 = vsel %vm358, %v657, %v659
      %v675 = vsel %vm358, %v659, %v661
      %v676 = vsel %vm358, %v663, %v665
      %v677 = vsel %vm358, %v665, %v667
      %v678 = vsel %vm358, %v667, %v669
      %v679 = vsel %vm358, %v669, %v671
      %v688 = vadd.f32 %v553, %v672
      %v689 = vadd.f32 %v554, %v673
      %v690 = vadd.f32 %v555, %v674
      %v691 = vadd.f32 %v556, %v675
      %v692 = vadd.f32 %v557, %v676
      %v693 = vadd.f32 %v558, %v677
      %v694 = vadd.f32 %v559, %v678
      %v695 = vadd.f32 %v560, %v679
      %v696 = vlaneseq
      %v697 = vshrl.u32 %v696, 7
      %v698 = vsub.s32 5, %v697
      %v699 = vrot.slane %v233, %v698
      %v700 = vlaneseq
      %v701 = vshrl.u32 %v700, 7
      %v702 = vsub.s32 5, %v701
      %v703 = vrot.slane %v234, %v702
      %v704 = vlaneseq
      %v705 = vshrl.u32 %v704, 7
      %v706 = vsub.s32 5, %v705
      %v707 = vrot.slane %v235, %v706
      %v708 = vlaneseq
      %v709 = vshrl.u32 %v708, 7
      %v710 = vsub.s32 5, %v709
      %v711 = vrot.slane %v236, %v710
      %716 = vrot.lane.b32.xlu0 %v699, 64
      %v717 = vpop.permute.xlu0 %716
      %718 = vrot.lane.b32.xlu0 %v703, 64
      %v719 = vpop.permute.xlu0 %718
      %720 = vrot.lane.b32.xlu0 %v707, 64
      %v721 = vpop.permute.xlu0 %720
      %722 = vrot.lane.b32.xlu0 %v711, 64
      %v723 = vpop.permute.xlu0 %722
      %v724 = vsel %vm411, %v717, %v719
      %v725 = vsel %vm411, %v719, %v721
      %v726 = vsel %vm411, %v721, %v723
      %v732 = vmul.f32 %v218, %v717
      %v733 = vmul.f32 %v219, %v724
      %v734 = vmul.f32 %v220, %v725
      %v735 = vmul.f32 %v221, %v726
      %v736 = vmul.f32 %v222, %v723
      %v737 = vmul.f32 %v223, %v717
      %v738 = vmul.f32 %v224, %v724
      %v739 = vmul.f32 %v225, %v725
      %v740 = vmul.f32 %v226, %v726
      %v741 = vmul.f32 %v227, %v723
      %v742 = vmul.f32 %v228, %v717
      %v743 = vmul.f32 %v229, %v724
      %v744 = vmul.f32 %v230, %v725
      %v745 = vmul.f32 %v231, %v726
      %v746 = vmul.f32 %v232, %v723
      %v762 = vrot.slane %v732, 1
      %v763 = vrot.slane %v737, 1
      %v764 = vsel %vm524, %v762, %v763
      %v765 = vrot.slane %v733, 1
      %v766 = vrot.slane %v738, 1
      %v767 = vsel %vm524, %v765, %v766
      %v768 = vrot.slane %v734, 1
      %v769 = vrot.slane %v739, 1
      %v770 = vsel %vm524, %v768, %v769
      %v771 = vrot.slane %v735, 1
      %v772 = vrot.slane %v740, 1
      %v773 = vsel %vm524, %v771, %v772
      %v774 = vrot.slane %v736, 1
      %v775 = vrot.slane %v741, 1
      %v776 = vsel %vm524, %v774, %v775
      %v777 = vrot.slane %v742, 1
      %v778 = vsel %vm524, %v763, %v777
      %v779 = vrot.slane %v743, 1
      %v780 = vsel %vm524, %v766, %v779
      %v781 = vrot.slane %v744, 1
      %v782 = vsel %vm524, %v769, %v781
      %v783 = vrot.slane %v745, 1
      %v784 = vsel %vm524, %v772, %v783
      %v785 = vrot.slane %v746, 1
      %v786 = vsel %vm524, %v775, %v785
      %787 = vrot.lane.b32.xlu0 %v764, 64
      %v788 = vpop.permute.xlu0 %787
      %789 = vrot.lane.b32.xlu0 %v767, 64
      %v790 = vpop.permute.xlu0 %789
      %791 = vrot.lane.b32.xlu0 %v770, 64
      %v792 = vpop.permute.xlu0 %791
      %793 = vrot.lane.b32.xlu0 %v773, 64
      %v794 = vpop.permute.xlu0 %793
      %795 = vrot.lane.b32.xlu0 %v776, 64
      %v796 = vpop.permute.xlu0 %795
      %797 = vrot.lane.b32.xlu0 %v778, 64
      %v798 = vpop.permute.xlu0 %797
      %799 = vrot.lane.b32.xlu0 %v780, 64
      %v800 = vpop.permute.xlu0 %799
      %801 = vrot.lane.b32.xlu0 %v782, 64
      %v802 = vpop.permute.xlu0 %801
      %803 = vrot.lane.b32.xlu0 %v784, 64
      %v804 = vpop.permute.xlu0 %803
      %805 = vrot.lane.b32.xlu0 %v786, 64
      %v806 = vpop.permute.xlu0 %805
      %v807 = vsel %vm411, %v788, %v790
      %v808 = vsel %vm411, %v790, %v792
      %v809 = vsel %vm411, %v792, %v794
      %v810 = vsel %vm411, %v794, %v796
      %v811 = vsel %vm411, %v798, %v800
      %v812 = vsel %vm411, %v800, %v802
      %v813 = vsel %vm411, %v802, %v804
      %v814 = vsel %vm411, %v804, %v806
      %v823 = vadd.f32 %v688, %v807
      %v824 = vadd.f32 %v689, %v808
      %v825 = vadd.f32 %v690, %v809
      %v826 = vadd.f32 %v691, %v810
      %v827 = vadd.f32 %v692, %v811
      %v828 = vadd.f32 %v693, %v812
      %v829 = vadd.f32 %v694, %v813
      %v830 = vadd.f32 %v695, %v814
      %v831 = vlaneseq
      %v832 = vshrl.u32 %v831, 7
      %v833 = vsub.s32 6, %v832
      %v834 = vrot.slane %v233, %v833
      %v835 = vlaneseq
      %v836 = vshrl.u32 %v835, 7
      %v837 = vsub.s32 6, %v836
      %v838 = vrot.slane %v234, %v837
      %v839 = vlaneseq
      %v840 = vshrl.u32 %v839, 7
      %v841 = vsub.s32 6, %v840
      %v842 = vrot.slane %v235, %v841
      %v843 = vlaneseq
      %v844 = vshrl.u32 %v843, 7
      %v845 = vsub.s32 6, %v844
      %v846 = vrot.slane %v236, %v845
      %v847 = vmul.f32 %v218, %v834
      %v848 = vmul.f32 %v219, %v838
      %v849 = vmul.f32 %v220, %v842
      %v850 = vmul.f32 %v221, %v846
      %v851 = vmul.f32 %v223, %v834
      %v852 = vmul.f32 %v224, %v838
      %v853 = vmul.f32 %v225, %v842
      %v854 = vmul.f32 %v226, %v846
      %v855 = vmul.f32 %v228, %v834
      %v856 = vmul.f32 %v229, %v838
      %v857 = vmul.f32 %v230, %v842
      %v858 = vmul.f32 %v231, %v846
      %vm871 = vcmask 1045504
      %v872 = vrot.slane %v847, 2
      %v873 = vrot.slane %v851, 2
      %v874 = vsel %vm871, %v872, %v873
      %v875 = vrot.slane %v848, 2
      %v876 = vrot.slane %v852, 2
      %v877 = vsel %vm871, %v875, %v876
      %v878 = vrot.slane %v849, 2
      %v879 = vrot.slane %v853, 2
      %v880 = vsel %vm871, %v878, %v879
      %v881 = vrot.slane %v850, 2
      %v882 = vrot.slane %v854, 2
      %v883 = vsel %vm871, %v881, %v882
      %v884 = vrot.slane %v855, 2
      %v885 = vsel %vm871, %v873, %v884
      %v886 = vrot.slane %v856, 2
      %v887 = vsel %vm871, %v876, %v886
      %v888 = vrot.slane %v857, 2
      %v889 = vsel %vm871, %v879, %v888
      %v890 = vrot.slane %v858, 2
      %v891 = vsel %vm871, %v882, %v890
      %v900 = vadd.f32 %v823, %v874
      %v901 = vadd.f32 %v824, %v877
      %v902 = vadd.f32 %v825, %v880
      %v903 = vadd.f32 %v826, %v883
      %v904 = vadd.f32 %v827, %v885
      %v905 = vadd.f32 %v828, %v887
      %v906 = vadd.f32 %v829, %v889
      %v907 = vadd.f32 %v830, %v891
      %v908 = vlaneseq
      %v909 = vshrl.u32 %v908, 7
      %v910 = vsub.s32 7, %v909
      %v911 = vrot.slane %v233, %v910
      %v912 = vlaneseq
      %v913 = vshrl.u32 %v912, 7
      %v914 = vsub.s32 7, %v913
      %v915 = vrot.slane %v234, %v914
      %v916 = vlaneseq
      %v917 = vshrl.u32 %v916, 7
      %v918 = vsub.s32 7, %v917
      %v919 = vrot.slane %v235, %v918
      %v920 = vlaneseq
      %v921 = vshrl.u32 %v920, 7
      %v922 = vsub.s32 7, %v921
      %v923 = vrot.slane %v236, %v922
      %928 = vrot.lane.b32.xlu0 %v911, 32
      %v929 = vpop.permute.xlu0 %928
      %930 = vrot.lane.b32.xlu0 %v915, 32
      %v931 = vpop.permute.xlu0 %930
      %932 = vrot.lane.b32.xlu0 %v919, 32
      %v933 = vpop.permute.xlu0 %932
      %934 = vrot.lane.b32.xlu0 %v923, 32
      %v935 = vpop.permute.xlu0 %934
      %v936 = vsel %vm309, %v929, %v931
      %v937 = vsel %vm309, %v931, %v933
      %v938 = vsel %vm309, %v933, %v935
      %v944 = vmul.f32 %v218, %v929
      %v945 = vmul.f32 %v219, %v936
      %v946 = vmul.f32 %v220, %v937
      %v947 = vmul.f32 %v221, %v938
      %v948 = vmul.f32 %v222, %v935
      %v949 = vmul.f32 %v223, %v929
      %v950 = vmul.f32 %v224, %v936
      %v951 = vmul.f32 %v225, %v937
      %v952 = vmul.f32 %v226, %v938
      %v953 = vmul.f32 %v227, %v935
      %v954 = vmul.f32 %v228, %v929
      %v955 = vmul.f32 %v229, %v936
      %v956 = vmul.f32 %v230, %v937
      %v957 = vmul.f32 %v231, %v938
      %v958 = vmul.f32 %v232, %v935
      %v974 = vrot.slane %v944, 2
      %v975 = vrot.slane %v949, 2
      %v976 = vsel %vm871, %v974, %v975
      %v977 = vrot.slane %v945, 2
      %v978 = vrot.slane %v950, 2
      %v979 = vsel %vm871, %v977, %v978
      %v980 = vrot.slane %v946, 2
      %v981 = vrot.slane %v951, 2
      %v982 = vsel %vm871, %v980, %v981
      %v983 = vrot.slane %v947, 2
      %v984 = vrot.slane %v952, 2
      %v985 = vsel %vm871, %v983, %v984
      %v986 = vrot.slane %v948, 2
      %v987 = vrot.slane %v953, 2
      %v988 = vsel %vm871, %v986, %v987
      %v989 = vrot.slane %v954, 2
      %v990 = vsel %vm871, %v975, %v989
      %v991 = vrot.slane %v955, 2
      %v992 = vsel %vm871, %v978, %v991
      %v993 = vrot.slane %v956, 2
      %v994 = vsel %vm871, %v981, %v993
      %v995 = vrot.slane %v957, 2
      %v996 = vsel %vm871, %v984, %v995
      %v997 = vrot.slane %v958, 2
      %v998 = vsel %vm871, %v987, %v997
      %999 = vrot.lane.b32.xlu0 %v976, 96
      %v1000 = vpop.permute.xlu0 %999
      %1001 = vrot.lane.b32.xlu0 %v979, 96
      %v1002 = vpop.permute.xlu0 %1001
      %1003 = vrot.lane.b32.xlu0 %v982, 96
      %v1004 = vpop.permute.xlu0 %1003
      %1005 = vrot.lane.b32.xlu0 %v985, 96
      %v1006 = vpop.permute.xlu0 %1005
      %1007 = vrot.lane.b32.xlu0 %v988, 96
      %v1008 = vpop.permute.xlu0 %1007
      %1009 = vrot.lane.b32.xlu0 %v990, 96
      %v1010 = vpop.permute.xlu0 %1009
      %1011 = vrot.lane.b32.xlu0 %v992, 96
      %v1012 = vpop.permute.xlu0 %1011
      %1013 = vrot.lane.b32.xlu0 %v994, 96
      %v1014 = vpop.permute.xlu0 %1013
      %1015 = vrot.lane.b32.xlu0 %v996, 96
      %v1016 = vpop.permute.xlu0 %1015
      %1017 = vrot.lane.b32.xlu0 %v998, 96
      %v1018 = vpop.permute.xlu0 %1017
      %v1019 = vsel %vm358, %v1000, %v1002
      %v1020 = vsel %vm358, %v1002, %v1004
      %v1021 = vsel %vm358, %v1004, %v1006
      %v1022 = vsel %vm358, %v1006, %v1008
      %v1023 = vsel %vm358, %v1010, %v1012
      %v1024 = vsel %vm358, %v1012, %v1014
      %v1025 = vsel %vm358, %v1014, %v1016
      %v1026 = vsel %vm358, %v1016, %v1018
      %v1035 = vadd.f32 %v900, %v1019
      %v1036 = vadd.f32 %v901, %v1020
      %v1037 = vadd.f32 %v902, %v1021
      %v1038 = vadd.f32 %v903, %v1022
      %v1039 = vadd.f32 %v904, %v1023
      %v1040 = vadd.f32 %v905, %v1024
      %v1041 = vadd.f32 %v906, %v1025
      %v1042 = vadd.f32 %v907, %v1026
      %v1043 = vlaneseq
      %v1044 = vshrl.u32 %v1043, 7
      %v1045 = vsub.s32 0, %v1044
      %v1046 = vrot.slane %v237, %v1045
      %v1047 = vlaneseq
      %v1048 = vshrl.u32 %v1047, 7
      %v1049 = vsub.s32 0, %v1048
      %v1050 = vrot.slane %v238, %v1049
      %v1051 = vlaneseq
      %v1052 = vshrl.u32 %v1051, 7
      %v1053 = vsub.s32 0, %v1052
      %v1054 = vrot.slane %v239, %v1053
      %v1055 = vlaneseq
      %v1056 = vshrl.u32 %v1055, 7
      %v1057 = vsub.s32 0, %v1056
      %v1058 = vrot.slane %v240, %v1057
      %1063 = vrot.lane.b32.xlu0 %v1046, 64
      %v1064 = vpop.permute.xlu0 %1063
      %1065 = vrot.lane.b32.xlu0 %v1050, 64
      %v1066 = vpop.permute.xlu0 %1065
      %1067 = vrot.lane.b32.xlu0 %v1054, 64
      %v1068 = vpop.permute.xlu0 %1067
      %1069 = vrot.lane.b32.xlu0 %v1058, 64
      %v1070 = vpop.permute.xlu0 %1069
      %v1071 = vsel %vm411, %v1064, %v1066
      %v1072 = vsel %vm411, %v1066, %v1068
      %v1073 = vsel %vm411, %v1068, %v1070
      %v1079 = vmul.f32 %v218, %v1064
      %v1080 = vmul.f32 %v219, %v1071
      %v1081 = vmul.f32 %v220, %v1072
      %v1082 = vmul.f32 %v221, %v1073
      %v1083 = vmul.f32 %v222, %v1070
      %v1084 = vmul.f32 %v223, %v1064
      %v1085 = vmul.f32 %v224, %v1071
      %v1086 = vmul.f32 %v225, %v1072
      %v1087 = vmul.f32 %v226, %v1073
      %v1088 = vmul.f32 %v227, %v1070
      %v1089 = vmul.f32 %v228, %v1064
      %v1090 = vmul.f32 %v229, %v1071
      %v1091 = vmul.f32 %v230, %v1072
      %v1092 = vmul.f32 %v231, %v1073
      %v1093 = vmul.f32 %v232, %v1070
      %v1109 = vrot.slane %v1079, 2
      %v1110 = vrot.slane %v1084, 2
      %v1111 = vsel %vm871, %v1109, %v1110
      %v1112 = vrot.slane %v1080, 2
      %v1113 = vrot.slane %v1085, 2
      %v1114 = vsel %vm871, %v1112, %v1113
      %v1115 = vrot.slane %v1081, 2
      %v1116 = vrot.slane %v1086, 2
      %v1117 = vsel %vm871, %v1115, %v1116
      %v1118 = vrot.slane %v1082, 2
      %v1119 = vrot.slane %v1087, 2
      %v1120 = vsel %vm871, %v1118, %v1119
      %v1121 = vrot.slane %v1083, 2
      %v1122 = vrot.slane %v1088, 2
      %v1123 = vsel %vm871, %v1121, %v1122
      %v1124 = vrot.slane %v1089, 2
      %v1125 = vsel %vm871, %v1110, %v1124
      %v1126 = vrot.slane %v1090, 2
      %v1127 = vsel %vm871, %v1113, %v1126
      %v1128 = vrot.slane %v1091, 2
      %v1129 = vsel %vm871, %v1116, %v1128
      %v1130 = vrot.slane %v1092, 2
      %v1131 = vsel %vm871, %v1119, %v1130
      %v1132 = vrot.slane %v1093, 2
      %v1133 = vsel %vm871, %v1122, %v1132
      %1134 = vrot.lane.b32.xlu0 %v1111, 64
      %v1135 = vpop.permute.xlu0 %1134
      %1136 = vrot.lane.b32.xlu0 %v1114, 64
      %v1137 = vpop.permute.xlu0 %1136
      %1138 = vrot.lane.b32.xlu0 %v1117, 64
      %v1139 = vpop.permute.xlu0 %1138
      %1140 = vrot.lane.b32.xlu0 %v1120, 64
      %v1141 = vpop.permute.xlu0 %1140
      %1142 = vrot.lane.b32.xlu0 %v1123, 64
      %v1143 = vpop.permute.xlu0 %1142
      %1144 = vrot.lane.b32.xlu0 %v1125, 64
      %v1145 = vpop.permute.xlu0 %1144
      %1146 = vrot.lane.b32.xlu0 %v1127, 64
      %v1147 = vpop.permute.xlu0 %1146
      %1148 = vrot.lane.b32.xlu0 %v1129, 64
      %v1149 = vpop.permute.xlu0 %1148
      %1150 = vrot.lane.b32.xlu0 %v1131, 64
      %v1151 = vpop.permute.xlu0 %1150
      %1152 = vrot.lane.b32.xlu0 %v1133, 64
      %v1153 = vpop.permute.xlu0 %1152
      %v1154 = vsel %vm411, %v1135, %v1137
      %v1155 = vsel %vm411, %v1137, %v1139
      %v1156 = vsel %vm411, %v1139, %v1141
      %v1157 = vsel %vm411, %v1141, %v1143
      %v1158 = vsel %vm411, %v1145, %v1147
      %v1159 = vsel %vm411, %v1147, %v1149
      %v1160 = vsel %vm411, %v1149, %v1151
      %v1161 = vsel %vm411, %v1151, %v1153
      %v1170 = vadd.f32 %v1035, %v1154
      %v1171 = vadd.f32 %v1036, %v1155
      %v1172 = vadd.f32 %v1037, %v1156
      %v1173 = vadd.f32 %v1038, %v1157
      %v1174 = vadd.f32 %v1039, %v1158
      %v1175 = vadd.f32 %v1040, %v1159
      %v1176 = vadd.f32 %v1041, %v1160
      %v1177 = vadd.f32 %v1042, %v1161
      %v1178 = vmul.f32 %v1170, 0.5
      %v1179 = vmul.f32 %v1171, 0.5
      %v1180 = vmul.f32 %v1172, 0.5
      %v1181 = vmul.f32 %v1173, 0.5
      %v1182 = vmul.f32 %v1174, 0.5
      %v1183 = vmul.f32 %v1175, 0.5
      %v1184 = vmul.f32 %v1176, 0.5
      %v1185 = vmul.f32 %v1177, 0.5
      %v1186 = vmul.f32 %v1170, 0.70710677
      %v1187 = vmul.f32 %v1171, 0.70710677
      %v1188 = vmul.f32 %v1172, 0.70710677
      %v1189 = vmul.f32 %v1173, 0.70710677
      %v1190 = vmul.f32 %v1174, 0.70710677
      %v1191 = vmul.f32 %v1175, 0.70710677
      %v1192 = vmul.f32 %v1176, 0.70710677
      %v1193 = vmul.f32 %v1177, 0.70710677
      %v1194 = vmax.f32 %v1186, -4.0
      %v1195 = vmax.f32 %v1187, -4.0
      %v1196 = vmax.f32 %v1188, -4.0
      %v1197 = vmax.f32 %v1189, -4.0
      %v1198 = vmax.f32 %v1190, -4.0
      %v1199 = vmax.f32 %v1191, -4.0
      %v1200 = vmax.f32 %v1192, -4.0
      %v1201 = vmax.f32 %v1193, -4.0
      %v1202 = vmin.f32 %v1194, 4.0
      %v1203 = vmin.f32 %v1195, 4.0
      %v1204 = vmin.f32 %v1196, 4.0
      %v1205 = vmin.f32 %v1197, 4.0
      %v1206 = vmin.f32 %v1198, 4.0
      %v1207 = vmin.f32 %v1199, 4.0
      %v1208 = vmin.f32 %v1200, 4.0
      %v1209 = vmin.f32 %v1201, 4.0
      %v1210 = vmul.f32 %v1202, %v1202
      %v1211 = vmul.f32 %v1203, %v1203
      %v1212 = vmul.f32 %v1204, %v1204
      %v1213 = vmul.f32 %v1205, %v1205
      %v1214 = vmul.f32 %v1206, %v1206
      %v1215 = vmul.f32 %v1207, %v1207
      %v1216 = vmul.f32 %v1208, %v1208
      %v1217 = vmul.f32 %v1209, %v1209
      %v1218 = vmul.f32 %v1210, -2.7261424e-10
      %v1219 = vmul.f32 %v1211, -2.7261424e-10
      %v1220 = vmul.f32 %v1212, -2.7261424e-10
      %v1221 = vmul.f32 %v1213, -2.7261424e-10
      %v1222 = vmul.f32 %v1214, -2.7261424e-10
      %v1223 = vmul.f32 %v1215, -2.7261424e-10
      %v1224 = vmul.f32 %v1216, -2.7261424e-10
      %v1225 = vmul.f32 %v1217, -2.7261424e-10
      %v1226 = vadd.f32 %v1218, 2.7706815e-08
      %v1227 = vadd.f32 %v1219, 2.7706815e-08
      %v1228 = vadd.f32 %v1220, 2.7706815e-08
      %v1229 = vadd.f32 %v1221, 2.7706815e-08
      %v1230 = vadd.f32 %v1222, 2.7706815e-08
      %v1231 = vadd.f32 %v1223, 2.7706815e-08
      %v1232 = vadd.f32 %v1224, 2.7706815e-08
      %v1233 = vadd.f32 %v1225, 2.7706815e-08
      %v1234 = vmul.f32 %v1226, %v1210
      %v1235 = vmul.f32 %v1227, %v1211
      %v1236 = vmul.f32 %v1228, %v1212
      %v1237 = vmul.f32 %v1229, %v1213
      %v1238 = vmul.f32 %v1230, %v1214
      %v1239 = vmul.f32 %v1231, %v1215
      %v1240 = vmul.f32 %v1232, %v1216
      %v1241 = vmul.f32 %v1233, %v1217
      %v1242 = vadd.f32 %v1234, -2.101024e-06
      %v1243 = vadd.f32 %v1235, -2.101024e-06
      %v1244 = vadd.f32 %v1236, -2.101024e-06
      %v1245 = vadd.f32 %v1237, -2.101024e-06
      %v1246 = vadd.f32 %v1238, -2.101024e-06
      %v1247 = vadd.f32 %v1239, -2.101024e-06
      %v1248 = vadd.f32 %v1240, -2.101024e-06
      %v1249 = vadd.f32 %v1241, -2.101024e-06
      %v1250 = vmul.f32 %v1242, %v1210
      %v1251 = vmul.f32 %v1243, %v1211
      %v1252 = vmul.f32 %v1244, %v1212
      %v1253 = vmul.f32 %v1245, %v1213
      %v1254 = vmul.f32 %v1246, %v1214
      %v1255 = vmul.f32 %v1247, %v1215
      %v1256 = vmul.f32 %v1248, %v1216
      %v1257 = vmul.f32 %v1249, %v1217
      %v1258 = vadd.f32 %v1250, -5.6925062e-05
      %v1259 = vadd.f32 %v1251, -5.6925062e-05
      %v1260 = vadd.f32 %v1252, -5.6925062e-05
      %v1261 = vadd.f32 %v1253, -5.6925062e-05
      %v1262 = vadd.f32 %v1254, -5.6925062e-05
      %v1263 = vadd.f32 %v1255, -5.6925062e-05
      %v1264 = vadd.f32 %v1256, -5.6925062e-05
      %v1265 = vadd.f32 %v1257, -5.6925062e-05
      %v1266 = vmul.f32 %v1258, %v1210
      %v1267 = vmul.f32 %v1259, %v1211
      %v1268 = vmul.f32 %v1260, %v1212
      %v1269 = vmul.f32 %v1261, %v1213
      %v1270 = vmul.f32 %v1262, %v1214
      %v1271 = vmul.f32 %v1263, %v1215
      %v1272 = vmul.f32 %v1264, %v1216
      %v1273 = vmul.f32 %v1265, %v1217
      %v1274 = vadd.f32 %v1266, -0.00073499064
      %v1275 = vadd.f32 %v1267, -0.00073499064
      %v1276 = vadd.f32 %v1268, -0.00073499064
      %v1277 = vadd.f32 %v1269, -0.00073499064
      %v1278 = vadd.f32 %v1270, -0.00073499064
      %v1279 = vadd.f32 %v1271, -0.00073499064
      %v1280 = vadd.f32 %v1272, -0.00073499064
      %v1281 = vadd.f32 %v1273, -0.00073499064
      %v1282 = vmul.f32 %v1274, %v1210
      %v1283 = vmul.f32 %v1275, %v1211
      %v1284 = vmul.f32 %v1276, %v1212
      %v1285 = vmul.f32 %v1277, %v1213
      %v1286 = vmul.f32 %v1278, %v1214
      %v1287 = vmul.f32 %v1279, %v1215
      %v1288 = vmul.f32 %v1280, %v1216
      %v1289 = vmul.f32 %v1281, %v1217
      %v1290 = vadd.f32 %v1282, -0.0029546
      %v1291 = vadd.f32 %v1283, -0.0029546
      %v1292 = vadd.f32 %v1284, -0.0029546
      %v1293 = vadd.f32 %v1285, -0.0029546
      %v1294 = vadd.f32 %v1286, -0.0029546
      %v1295 = vadd.f32 %v1287, -0.0029546
      %v1296 = vadd.f32 %v1288, -0.0029546
      %v1297 = vadd.f32 %v1289, -0.0029546
      %v1298 = vmul.f32 %v1290, %v1210
      %v1299 = vmul.f32 %v1291, %v1211
      %v1300 = vmul.f32 %v1292, %v1212
      %v1301 = vmul.f32 %v1293, %v1213
      %v1302 = vmul.f32 %v1294, %v1214
      %v1303 = vmul.f32 %v1295, %v1215
      %v1304 = vmul.f32 %v1296, %v1216
      %v1305 = vmul.f32 %v1297, %v1217
      %v1306 = vadd.f32 %v1298, -0.016096033
      %v1307 = vadd.f32 %v1299, -0.016096033
      %v1308 = vadd.f32 %v1300, -0.016096033
      %v1309 = vadd.f32 %v1301, -0.016096033
      %v1310 = vadd.f32 %v1302, -0.016096033
      %v1311 = vadd.f32 %v1303, -0.016096033
      %v1312 = vadd.f32 %v1304, -0.016096033
      %v1313 = vadd.f32 %v1305, -0.016096033
      %v1314 = vmul.f32 %v1306, %v1202
      %v1315 = vmul.f32 %v1307, %v1203
      %v1316 = vmul.f32 %v1308, %v1204
      %v1317 = vmul.f32 %v1309, %v1205
      %v1318 = vmul.f32 %v1310, %v1206
      %v1319 = vmul.f32 %v1311, %v1207
      %v1320 = vmul.f32 %v1312, %v1208
      %v1321 = vmul.f32 %v1313, %v1209
      %v1322 = vmul.f32 %v1210, -1.45660715e-05
      %v1323 = vmul.f32 %v1211, -1.45660715e-05
      %v1324 = vmul.f32 %v1212, -1.45660715e-05
      %v1325 = vmul.f32 %v1213, -1.45660715e-05
      %v1326 = vmul.f32 %v1214, -1.45660715e-05
      %v1327 = vmul.f32 %v1215, -1.45660715e-05
      %v1328 = vmul.f32 %v1216, -1.45660715e-05
      %v1329 = vmul.f32 %v1217, -1.45660715e-05
      %v1330 = vadd.f32 %v1322, -0.00021337405
      %v1331 = vadd.f32 %v1323, -0.00021337405
      %v1332 = vadd.f32 %v1324, -0.00021337405
      %v1333 = vadd.f32 %v1325, -0.00021337405
      %v1334 = vadd.f32 %v1326, -0.00021337405
      %v1335 = vadd.f32 %v1327, -0.00021337405
      %v1336 = vadd.f32 %v1328, -0.00021337405
      %v1337 = vadd.f32 %v1329, -0.00021337405
      %v1338 = vmul.f32 %v1330, %v1210
      %v1339 = vmul.f32 %v1331, %v1211
      %v1340 = vmul.f32 %v1332, %v1212
      %v1341 = vmul.f32 %v1333, %v1213
      %v1342 = vmul.f32 %v1334, %v1214
      %v1343 = vmul.f32 %v1335, %v1215
      %v1344 = vmul.f32 %v1336, %v1216
      %v1345 = vmul.f32 %v1337, %v1217
      %v1346 = vadd.f32 %v1338, -0.001682827
      %v1347 = vadd.f32 %v1339, -0.001682827
      %v1348 = vadd.f32 %v1340, -0.001682827
      %v1349 = vadd.f32 %v1341, -0.001682827
      %v1350 = vadd.f32 %v1342, -0.001682827
      %v1351 = vadd.f32 %v1343, -0.001682827
      %v1352 = vadd.f32 %v1344, -0.001682827
      %v1353 = vadd.f32 %v1345, -0.001682827
      %v1354 = vmul.f32 %v1346, %v1210
      %v1355 = vmul.f32 %v1347, %v1211
      %v1356 = vmul.f32 %v1348, %v1212
      %v1357 = vmul.f32 %v1349, %v1213
      %v1358 = vmul.f32 %v1350, %v1214
      %v1359 = vmul.f32 %v1351, %v1215
      %v1360 = vmul.f32 %v1352, %v1216
      %v1361 = vmul.f32 %v1353, %v1217
      %v1362 = vadd.f32 %v1354, -0.0073733293
      %v1363 = vadd.f32 %v1355, -0.0073733293
      %v1364 = vadd.f32 %v1356, -0.0073733293
      %v1365 = vadd.f32 %v1357, -0.0073733293
      %v1366 = vadd.f32 %v1358, -0.0073733293
      %v1367 = vadd.f32 %v1359, -0.0073733293
      %v1368 = vadd.f32 %v1360, -0.0073733293
      %v1369 = vadd.f32 %v1361, -0.0073733293
      %v1370 = vmul.f32 %v1362, %v1210
      %v1371 = vmul.f32 %v1363, %v1211
      %v1372 = vmul.f32 %v1364, %v1212
      %v1373 = vmul.f32 %v1365, %v1213
      %v1374 = vmul.f32 %v1366, %v1214
      %v1375 = vmul.f32 %v1367, %v1215
      %v1376 = vmul.f32 %v1368, %v1216
      %v1377 = vmul.f32 %v1369, %v1217
      %v1378 = vadd.f32 %v1370, -0.014264739
      %v1379 = vadd.f32 %v1371, -0.014264739
      %v1380 = vadd.f32 %v1372, -0.014264739
      %v1381 = vadd.f32 %v1373, -0.014264739
      %v1382 = vadd.f32 %v1374, -0.014264739
      %v1383 = vadd.f32 %v1375, -0.014264739
      %v1384 = vadd.f32 %v1376, -0.014264739
      %v1385 = vadd.f32 %v1377, -0.014264739
      %v1386 = vrcp.pop %v1378
      %v1387 = vmul.f32 %v1314, %v1386
      %v1388 = vrcp.pop %v1379
      %v1389 = vmul.f32 %v1315, %v1388
      %v1390 = vrcp.pop %v1380
      %v1391 = vmul.f32 %v1316, %v1390
      %v1392 = vrcp.pop %v1381
      %v1393 = vmul.f32 %v1317, %v1392
      %v1394 = vrcp.pop %v1382
      %v1395 = vmul.f32 %v1318, %v1394
      %v1396 = vrcp.pop %v1383
      %v1397 = vmul.f32 %v1319, %v1396
      %v1398 = vrcp.pop %v1384
      %v1399 = vmul.f32 %v1320, %v1398
      %v1400 = vrcp.pop %v1385
      %v1401 = vmul.f32 %v1321, %v1400
      %v1402 = vadd.f32 %v1387, 1.0
      %v1403 = vadd.f32 %v1389, 1.0
      %v1404 = vadd.f32 %v1391, 1.0
      %v1405 = vadd.f32 %v1393, 1.0
      %v1406 = vadd.f32 %v1395, 1.0
      %v1407 = vadd.f32 %v1397, 1.0
      %v1408 = vadd.f32 %v1399, 1.0
      %v1409 = vadd.f32 %v1401, 1.0
      %v1410 = vmul.f32 %v1178, %v1402
      %v1411 = vmul.f32 %v1179, %v1403
      %v1412 = vmul.f32 %v1180, %v1404
      %v1413 = vmul.f32 %v1181, %v1405
      %v1414 = vmul.f32 %v1182, %v1406
      %v1415 = vmul.f32 %v1183, %v1407
      %v1416 = vmul.f32 %v1184, %v1408
      %v1417 = vmul.f32 %v1185, %v1409
      %1426 = vrot.lane.b32.xlu0 %v1410, 32
      %v1427 = vpop.permute.xlu0 %1426
      %1428 = vrot.lane.b32.xlu0 %v1411, 32
      %v1429 = vpop.permute.xlu0 %1428
      %1430 = vrot.lane.b32.xlu0 %v1412, 32
      %v1431 = vpop.permute.xlu0 %1430
      %1432 = vrot.lane.b32.xlu0 %v1413, 32
      %v1433 = vpop.permute.xlu0 %1432
      %1434 = vrot.lane.b32.xlu0 %v1414, 32
      %v1435 = vpop.permute.xlu0 %1434
      %1436 = vrot.lane.b32.xlu0 %v1415, 32
      %v1437 = vpop.permute.xlu0 %1436
      %1438 = vrot.lane.b32.xlu0 %v1416, 32
      %v1439 = vpop.permute.xlu0 %1438
      %1440 = vrot.lane.b32.xlu0 %v1417, 32
      %v1441 = vpop.permute.xlu0 %1440
      %v1442 = vsel %vm309, %v1427, %v1429
      %v1443 = vsel %vm309, %v1429, %v1431
      %v1444 = vsel %vm309, %v1431, %v1433
      %v1445 = vsel %vm309, %v1435, %v1437
      %v1446 = vsel %vm309, %v1437, %v1439
      %v1447 = vsel %vm309, %v1439, %v1441
      %v1452 = vsel %vm309, 0.0, %v1427
      %v1453 = vsel %vm309, 0.0, %v1435
      %v1454 = vsel %vm309, %v1433, 0.0
      %v1455 = vsel %vm309, %v1441, 0.0
      %vm1460 = vcmask 1040384
      %v1461 = vrot.slane %v1452, 7
      %v1462 = vrot.slane %v1442, 7
      %v1463 = vrot.slane %v1443, 7
      %v1464 = vrot.slane %v1444, 7
      %v1465 = vrot.slane %v1454, 7
      %v1466 = vrot.slane %v1453, 7
      %v1467 = vsel %vm1460, %v1461, %v1466
      %v1468 = vrot.slane %v1445, 7
      %v1469 = vsel %vm1460, %v1462, %v1468
      %v1470 = vrot.slane %v1446, 7
      %v1471 = vsel %vm1460, %v1463, %v1470
      %v1472 = vrot.slane %v1447, 7
      %v1473 = vsel %vm1460, %v1464, %v1472
      %v1474 = vrot.slane %v1455, 7
      %v1475 = vsel %vm1460, %v1465, %v1474
      %v1491 = vsel %vm1460, 0.0, %v1461
      %v1492 = vsel %vm1460, 0.0, %v1462
      %v1493 = vsel %vm1460, 0.0, %v1463
      %v1494 = vsel %vm1460, 0.0, %v1464
      %v1495 = vsel %vm1460, 0.0, %v1465
      %v1496 = vsel %vm1460, %v1466, 0.0
      %v1497 = vsel %vm1460, %v1468, 0.0
      %v1498 = vsel %vm1460, %v1470, 0.0
      %v1499 = vsel %vm1460, %v1472, 0.0
      %v1500 = vsel %vm1460, %v1474, 0.0
      %v1501 = vld [vmem:[%s212] sm:$0xff]
      %v1502 = vld [vmem:[%s212 + $0x8] sm:$0xff]
      %v1503 = vld [vmem:[%s212 + $0x10] sm:$0xff]
      %v1504 = vld [vmem:[%s212 + $0x18] sm:$0xff]
      %v1505 = vld [vmem:[%s212 + $0x20] sm:$0xff]
      %v1506 = vld [vmem:[%s212 + $0x28] sm:$0xff]
      %v1507 = vld [vmem:[%s212 + $0x30] sm:$0xff]
      %v1508 = vld [vmem:[%s212 + $0x38] sm:$0xff]
      %v1509 = vlaneseq
      %v1510 = vshrl.u32 %v1509, 7
      %v1511 = vsub.s32 0, %v1510
      %v1512 = vrot.slane %v241, %v1511
      %v1513 = vlaneseq
      %v1514 = vshrl.u32 %v1513, 7
      %v1515 = vsub.s32 0, %v1514
      %v1516 = vrot.slane %v242, %v1515
      %v1517 = vlaneseq
      %v1518 = vshrl.u32 %v1517, 7
      %v1519 = vsub.s32 0, %v1518
      %v1520 = vrot.slane %v243, %v1519
      %v1521 = vlaneseq
      %v1522 = vshrl.u32 %v1521, 7
      %v1523 = vsub.s32 0, %v1522
      %v1524 = vrot.slane %v244, %v1523
      %v1525 = vmul.f32 %v1491, %v1512
      %v1526 = vmul.f32 %v1492, %v1516
      %v1527 = vmul.f32 %v1493, %v1520
      %v1528 = vmul.f32 %v1494, %v1524
      %v1529 = vmul.f32 %v1467, %v1512
      %v1530 = vmul.f32 %v1469, %v1516
      %v1531 = vmul.f32 %v1471, %v1520
      %v1532 = vmul.f32 %v1473, %v1524
      %v1533 = vadd.f32 %v1501, %v1525
      %v1534 = vadd.f32 %v1502, %v1526
      %v1535 = vadd.f32 %v1503, %v1527
      %v1536 = vadd.f32 %v1504, %v1528
      %v1537 = vadd.f32 %v1505, %v1529
      %v1538 = vadd.f32 %v1506, %v1530
      %v1539 = vadd.f32 %v1507, %v1531
      %v1540 = vadd.f32 %v1508, %v1532
      %v1541 = vlaneseq
      %v1542 = vshrl.u32 %v1541, 7
      %v1543 = vsub.s32 1, %v1542
      %v1544 = vrot.slane %v241, %v1543
      %v1545 = vlaneseq
      %v1546 = vshrl.u32 %v1545, 7
      %v1547 = vsub.s32 1, %v1546
      %v1548 = vrot.slane %v242, %v1547
      %v1549 = vlaneseq
      %v1550 = vshrl.u32 %v1549, 7
      %v1551 = vsub.s32 1, %v1550
      %v1552 = vrot.slane %v243, %v1551
      %v1553 = vlaneseq
      %v1554 = vshrl.u32 %v1553, 7
      %v1555 = vsub.s32 1, %v1554
      %v1556 = vrot.slane %v244, %v1555
      %1561 = vrot.lane.b32.xlu0 %v1544, 32
      %v1562 = vpop.permute.xlu0 %1561
      %1563 = vrot.lane.b32.xlu0 %v1548, 32
      %v1564 = vpop.permute.xlu0 %1563
      %1565 = vrot.lane.b32.xlu0 %v1552, 32
      %v1566 = vpop.permute.xlu0 %1565
      %1567 = vrot.lane.b32.xlu0 %v1556, 32
      %v1568 = vpop.permute.xlu0 %1567
      %v1569 = vsel %vm309, %v1562, %v1564
      %v1570 = vsel %vm309, %v1564, %v1566
      %v1571 = vsel %vm309, %v1566, %v1568
      %v1577 = vmul.f32 %v1491, %v1562
      %v1578 = vmul.f32 %v1492, %v1569
      %v1579 = vmul.f32 %v1493, %v1570
      %v1580 = vmul.f32 %v1494, %v1571
      %v1581 = vmul.f32 %v1495, %v1568
      %v1582 = vmul.f32 %v1467, %v1562
      %v1583 = vmul.f32 %v1469, %v1569
      %v1584 = vmul.f32 %v1471, %v1570
      %v1585 = vmul.f32 %v1473, %v1571
      %v1586 = vmul.f32 %v1475, %v1568
      %1597 = vrot.lane.b32.xlu0 %v1577, 96
      %v1598 = vpop.permute.xlu0 %1597
      %1599 = vrot.lane.b32.xlu0 %v1578, 96
      %v1600 = vpop.permute.xlu0 %1599
      %1601 = vrot.lane.b32.xlu0 %v1579, 96
      %v1602 = vpop.permute.xlu0 %1601
      %1603 = vrot.lane.b32.xlu0 %v1580, 96
      %v1604 = vpop.permute.xlu0 %1603
      %1605 = vrot.lane.b32.xlu0 %v1581, 96
      %v1606 = vpop.permute.xlu0 %1605
      %1607 = vrot.lane.b32.xlu0 %v1582, 96
      %v1608 = vpop.permute.xlu0 %1607
      %1609 = vrot.lane.b32.xlu0 %v1583, 96
      %v1610 = vpop.permute.xlu0 %1609
      %1611 = vrot.lane.b32.xlu0 %v1584, 96
      %v1612 = vpop.permute.xlu0 %1611
      %1613 = vrot.lane.b32.xlu0 %v1585, 96
      %v1614 = vpop.permute.xlu0 %1613
      %1615 = vrot.lane.b32.xlu0 %v1586, 96
      %v1616 = vpop.permute.xlu0 %1615
      %v1617 = vsel %vm358, %v1598, %v1600
      %v1618 = vsel %vm358, %v1600, %v1602
      %v1619 = vsel %vm358, %v1602, %v1604
      %v1620 = vsel %vm358, %v1604, %v1606
      %v1621 = vsel %vm358, %v1608, %v1610
      %v1622 = vsel %vm358, %v1610, %v1612
      %v1623 = vsel %vm358, %v1612, %v1614
      %v1624 = vsel %vm358, %v1614, %v1616
      %v1633 = vadd.f32 %v1533, %v1617
      %v1634 = vadd.f32 %v1534, %v1618
      %v1635 = vadd.f32 %v1535, %v1619
      %v1636 = vadd.f32 %v1536, %v1620
      %v1637 = vadd.f32 %v1537, %v1621
      %v1638 = vadd.f32 %v1538, %v1622
      %v1639 = vadd.f32 %v1539, %v1623
      %v1640 = vadd.f32 %v1540, %v1624
      %v1641 = vlaneseq
      %v1642 = vshrl.u32 %v1641, 7
      %v1643 = vsub.s32 2, %v1642
      %v1644 = vrot.slane %v241, %v1643
      %v1645 = vlaneseq
      %v1646 = vshrl.u32 %v1645, 7
      %v1647 = vsub.s32 2, %v1646
      %v1648 = vrot.slane %v242, %v1647
      %v1649 = vlaneseq
      %v1650 = vshrl.u32 %v1649, 7
      %v1651 = vsub.s32 2, %v1650
      %v1652 = vrot.slane %v243, %v1651
      %v1653 = vlaneseq
      %v1654 = vshrl.u32 %v1653, 7
      %v1655 = vsub.s32 2, %v1654
      %v1656 = vrot.slane %v244, %v1655
      %1661 = vrot.lane.b32.xlu0 %v1644, 64
      %v1662 = vpop.permute.xlu0 %1661
      %1663 = vrot.lane.b32.xlu0 %v1648, 64
      %v1664 = vpop.permute.xlu0 %1663
      %1665 = vrot.lane.b32.xlu0 %v1652, 64
      %v1666 = vpop.permute.xlu0 %1665
      %1667 = vrot.lane.b32.xlu0 %v1656, 64
      %v1668 = vpop.permute.xlu0 %1667
      %v1669 = vsel %vm411, %v1662, %v1664
      %v1670 = vsel %vm411, %v1664, %v1666
      %v1671 = vsel %vm411, %v1666, %v1668
      %v1677 = vmul.f32 %v1491, %v1662
      %v1678 = vmul.f32 %v1492, %v1669
      %v1679 = vmul.f32 %v1493, %v1670
      %v1680 = vmul.f32 %v1494, %v1671
      %v1681 = vmul.f32 %v1495, %v1668
      %v1682 = vmul.f32 %v1467, %v1662
      %v1683 = vmul.f32 %v1469, %v1669
      %v1684 = vmul.f32 %v1471, %v1670
      %v1685 = vmul.f32 %v1473, %v1671
      %v1686 = vmul.f32 %v1475, %v1668
      %1697 = vrot.lane.b32.xlu0 %v1677, 64
      %v1698 = vpop.permute.xlu0 %1697
      %1699 = vrot.lane.b32.xlu0 %v1678, 64
      %v1700 = vpop.permute.xlu0 %1699
      %1701 = vrot.lane.b32.xlu0 %v1679, 64
      %v1702 = vpop.permute.xlu0 %1701
      %1703 = vrot.lane.b32.xlu0 %v1680, 64
      %v1704 = vpop.permute.xlu0 %1703
      %1705 = vrot.lane.b32.xlu0 %v1681, 64
      %v1706 = vpop.permute.xlu0 %1705
      %1707 = vrot.lane.b32.xlu0 %v1682, 64
      %v1708 = vpop.permute.xlu0 %1707
      %1709 = vrot.lane.b32.xlu0 %v1683, 64
      %v1710 = vpop.permute.xlu0 %1709
      %1711 = vrot.lane.b32.xlu0 %v1684, 64
      %v1712 = vpop.permute.xlu0 %1711
      %1713 = vrot.lane.b32.xlu0 %v1685, 64
      %v1714 = vpop.permute.xlu0 %1713
      %1715 = vrot.lane.b32.xlu0 %v1686, 64
      %v1716 = vpop.permute.xlu0 %1715
      %v1717 = vsel %vm411, %v1698, %v1700
      %v1718 = vsel %vm411, %v1700, %v1702
      %v1719 = vsel %vm411, %v1702, %v1704
      %v1720 = vsel %vm411, %v1704, %v1706
      %v1721 = vsel %vm411, %v1708, %v1710
      %v1722 = vsel %vm411, %v1710, %v1712
      %v1723 = vsel %vm411, %v1712, %v1714
      %v1724 = vsel %vm411, %v1714, %v1716
      %v1733 = vadd.f32 %v1633, %v1717
      %v1734 = vadd.f32 %v1634, %v1718
      %v1735 = vadd.f32 %v1635, %v1719
      %v1736 = vadd.f32 %v1636, %v1720
      %v1737 = vadd.f32 %v1637, %v1721
      %v1738 = vadd.f32 %v1638, %v1722
      %v1739 = vadd.f32 %v1639, %v1723
      %v1740 = vadd.f32 %v1640, %v1724
      %v1741 = vlaneseq
      %v1742 = vshrl.u32 %v1741, 7
      %v1743 = vsub.s32 3, %v1742
      %v1744 = vrot.slane %v241, %v1743
      %v1745 = vlaneseq
      %v1746 = vshrl.u32 %v1745, 7
      %v1747 = vsub.s32 3, %v1746
      %v1748 = vrot.slane %v242, %v1747
      %v1749 = vlaneseq
      %v1750 = vshrl.u32 %v1749, 7
      %v1751 = vsub.s32 3, %v1750
      %v1752 = vrot.slane %v243, %v1751
      %v1753 = vlaneseq
      %v1754 = vshrl.u32 %v1753, 7
      %v1755 = vsub.s32 3, %v1754
      %v1756 = vrot.slane %v244, %v1755
      %v1757 = vmul.f32 %v1491, %v1744
      %v1758 = vmul.f32 %v1492, %v1748
      %v1759 = vmul.f32 %v1493, %v1752
      %v1760 = vmul.f32 %v1494, %v1756
      %v1761 = vmul.f32 %v1467, %v1744
      %v1762 = vmul.f32 %v1469, %v1748
      %v1763 = vmul.f32 %v1471, %v1752
      %v1764 = vmul.f32 %v1473, %v1756
      %v1765 = vmul.f32 %v1496, %v1744
      %v1766 = vmul.f32 %v1497, %v1748
      %v1767 = vmul.f32 %v1498, %v1752
      %v1768 = vmul.f32 %v1499, %v1756
      %v1781 = vrot.slane %v1757, 1
      %v1782 = vrot.slane %v1761, 1
      %v1783 = vsel %vm524, %v1781, %v1782
      %v1784 = vrot.slane %v1758, 1
      %v1785 = vrot.slane %v1762, 1
      %v1786 = vsel %vm524, %v1784, %v1785
      %v1787 = vrot.slane %v1759, 1
      %v1788 = vrot.slane %v1763, 1
      %v1789 = vsel %vm524, %v1787, %v1788
      %v1790 = vrot.slane %v1760, 1
      %v1791 = vrot.slane %v1764, 1
      %v1792 = vsel %vm524, %v1790, %v1791
      %v1793 = vrot.slane %v1765, 1
      %v1794 = vsel %vm524, %v1782, %v1793
      %v1795 = vrot.slane %v1766, 1
      %v1796 = vsel %vm524, %v1785, %v1795
      %v1797 = vrot.slane %v1767, 1
      %v1798 = vsel %vm524, %v1788, %v1797
      %v1799 = vrot.slane %v1768, 1
      %v1800 = vsel %vm524, %v1791, %v1799
      %v1809 = vadd.f32 %v1733, %v1783
      %v1810 = vadd.f32 %v1734, %v1786
      %v1811 = vadd.f32 %v1735, %v1789
      %v1812 = vadd.f32 %v1736, %v1792
      %v1813 = vadd.f32 %v1737, %v1794
      %v1814 = vadd.f32 %v1738, %v1796
      %v1815 = vadd.f32 %v1739, %v1798
      %v1816 = vadd.f32 %v1740, %v1800
      %v1817 = vlaneseq
      %v1818 = vshrl.u32 %v1817, 7
      %v1819 = vsub.s32 4, %v1818
      %v1820 = vrot.slane %v241, %v1819
      %v1821 = vlaneseq
      %v1822 = vshrl.u32 %v1821, 7
      %v1823 = vsub.s32 4, %v1822
      %v1824 = vrot.slane %v242, %v1823
      %v1825 = vlaneseq
      %v1826 = vshrl.u32 %v1825, 7
      %v1827 = vsub.s32 4, %v1826
      %v1828 = vrot.slane %v243, %v1827
      %v1829 = vlaneseq
      %v1830 = vshrl.u32 %v1829, 7
      %v1831 = vsub.s32 4, %v1830
      %v1832 = vrot.slane %v244, %v1831
      %1837 = vrot.lane.b32.xlu0 %v1820, 32
      %v1838 = vpop.permute.xlu0 %1837
      %1839 = vrot.lane.b32.xlu0 %v1824, 32
      %v1840 = vpop.permute.xlu0 %1839
      %1841 = vrot.lane.b32.xlu0 %v1828, 32
      %v1842 = vpop.permute.xlu0 %1841
      %1843 = vrot.lane.b32.xlu0 %v1832, 32
      %v1844 = vpop.permute.xlu0 %1843
      %v1845 = vsel %vm309, %v1838, %v1840
      %v1846 = vsel %vm309, %v1840, %v1842
      %v1847 = vsel %vm309, %v1842, %v1844
      %v1853 = vmul.f32 %v1491, %v1838
      %v1854 = vmul.f32 %v1492, %v1845
      %v1855 = vmul.f32 %v1493, %v1846
      %v1856 = vmul.f32 %v1494, %v1847
      %v1857 = vmul.f32 %v1495, %v1844
      %v1858 = vmul.f32 %v1467, %v1838
      %v1859 = vmul.f32 %v1469, %v1845
      %v1860 = vmul.f32 %v1471, %v1846
      %v1861 = vmul.f32 %v1473, %v1847
      %v1862 = vmul.f32 %v1475, %v1844
      %v1863 = vmul.f32 %v1496, %v1838
      %v1864 = vmul.f32 %v1497, %v1845
      %v1865 = vmul.f32 %v1498, %v1846
      %v1866 = vmul.f32 %v1499, %v1847
      %v1867 = vmul.f32 %v1500, %v1844
      %v1883 = vrot.slane %v1853, 1
      %v1884 = vrot.slane %v1858, 1
      %v1885 = vsel %vm524, %v1883, %v1884
      %v1886 = vrot.slane %v1854, 1
      %v1887 = vrot.slane %v1859, 1
      %v1888 = vsel %vm524, %v1886, %v1887
      %v1889 = vrot.slane %v1855, 1
      %v1890 = vrot.slane %v1860, 1
      %v1891 = vsel %vm524, %v1889, %v1890
      %v1892 = vrot.slane %v1856, 1
      %v1893 = vrot.slane %v1861, 1
      %v1894 = vsel %vm524, %v1892, %v1893
      %v1895 = vrot.slane %v1857, 1
      %v1896 = vrot.slane %v1862, 1
      %v1897 = vsel %vm524, %v1895, %v1896
      %v1898 = vrot.slane %v1863, 1
      %v1899 = vsel %vm524, %v1884, %v1898
      %v1900 = vrot.slane %v1864, 1
      %v1901 = vsel %vm524, %v1887, %v1900
      %v1902 = vrot.slane %v1865, 1
      %v1903 = vsel %vm524, %v1890, %v1902
      %v1904 = vrot.slane %v1866, 1
      %v1905 = vsel %vm524, %v1893, %v1904
      %v1906 = vrot.slane %v1867, 1
      %v1907 = vsel %vm524, %v1896, %v1906
      %1908 = vrot.lane.b32.xlu0 %v1885, 96
      %v1909 = vpop.permute.xlu0 %1908
      %1910 = vrot.lane.b32.xlu0 %v1888, 96
      %v1911 = vpop.permute.xlu0 %1910
      %1912 = vrot.lane.b32.xlu0 %v1891, 96
      %v1913 = vpop.permute.xlu0 %1912
      %1914 = vrot.lane.b32.xlu0 %v1894, 96
      %v1915 = vpop.permute.xlu0 %1914
      %1916 = vrot.lane.b32.xlu0 %v1897, 96
      %v1917 = vpop.permute.xlu0 %1916
      %1918 = vrot.lane.b32.xlu0 %v1899, 96
      %v1919 = vpop.permute.xlu0 %1918
      %1920 = vrot.lane.b32.xlu0 %v1901, 96
      %v1921 = vpop.permute.xlu0 %1920
      %1922 = vrot.lane.b32.xlu0 %v1903, 96
      %v1923 = vpop.permute.xlu0 %1922
      %1924 = vrot.lane.b32.xlu0 %v1905, 96
      %v1925 = vpop.permute.xlu0 %1924
      %1926 = vrot.lane.b32.xlu0 %v1907, 96
      %v1927 = vpop.permute.xlu0 %1926
      %v1928 = vsel %vm358, %v1909, %v1911
      %v1929 = vsel %vm358, %v1911, %v1913
      %v1930 = vsel %vm358, %v1913, %v1915
      %v1931 = vsel %vm358, %v1915, %v1917
      %v1932 = vsel %vm358, %v1919, %v1921
      %v1933 = vsel %vm358, %v1921, %v1923
      %v1934 = vsel %vm358, %v1923, %v1925
      %v1935 = vsel %vm358, %v1925, %v1927
      %v1944 = vadd.f32 %v1809, %v1928
      %v1945 = vadd.f32 %v1810, %v1929
      %v1946 = vadd.f32 %v1811, %v1930
      %v1947 = vadd.f32 %v1812, %v1931
      %v1948 = vadd.f32 %v1813, %v1932
      %v1949 = vadd.f32 %v1814, %v1933
      %v1950 = vadd.f32 %v1815, %v1934
      %v1951 = vadd.f32 %v1816, %v1935
      %v1952 = vlaneseq
      %v1953 = vshrl.u32 %v1952, 7
      %v1954 = vsub.s32 5, %v1953
      %v1955 = vrot.slane %v241, %v1954
      %v1956 = vlaneseq
      %v1957 = vshrl.u32 %v1956, 7
      %v1958 = vsub.s32 5, %v1957
      %v1959 = vrot.slane %v242, %v1958
      %v1960 = vlaneseq
      %v1961 = vshrl.u32 %v1960, 7
      %v1962 = vsub.s32 5, %v1961
      %v1963 = vrot.slane %v243, %v1962
      %v1964 = vlaneseq
      %v1965 = vshrl.u32 %v1964, 7
      %v1966 = vsub.s32 5, %v1965
      %v1967 = vrot.slane %v244, %v1966
      %1972 = vrot.lane.b32.xlu0 %v1955, 64
      %v1973 = vpop.permute.xlu0 %1972
      %1974 = vrot.lane.b32.xlu0 %v1959, 64
      %v1975 = vpop.permute.xlu0 %1974
      %1976 = vrot.lane.b32.xlu0 %v1963, 64
      %v1977 = vpop.permute.xlu0 %1976
      %1978 = vrot.lane.b32.xlu0 %v1967, 64
      %v1979 = vpop.permute.xlu0 %1978
      %v1980 = vsel %vm411, %v1973, %v1975
      %v1981 = vsel %vm411, %v1975, %v1977
      %v1982 = vsel %vm411, %v1977, %v1979
      %v1988 = vmul.f32 %v1491, %v1973
      %v1989 = vmul.f32 %v1492, %v1980
      %v1990 = vmul.f32 %v1493, %v1981
      %v1991 = vmul.f32 %v1494, %v1982
      %v1992 = vmul.f32 %v1495, %v1979
      %v1993 = vmul.f32 %v1467, %v1973
      %v1994 = vmul.f32 %v1469, %v1980
      %v1995 = vmul.f32 %v1471, %v1981
      %v1996 = vmul.f32 %v1473, %v1982
      %v1997 = vmul.f32 %v1475, %v1979
      %v1998 = vmul.f32 %v1496, %v1973
      %v1999 = vmul.f32 %v1497, %v1980
      %v2000 = vmul.f32 %v1498, %v1981
      %v2001 = vmul.f32 %v1499, %v1982
      %v2002 = vmul.f32 %v1500, %v1979
      %v2018 = vrot.slane %v1988, 1
      %v2019 = vrot.slane %v1993, 1
      %v2020 = vsel %vm524, %v2018, %v2019
      %v2021 = vrot.slane %v1989, 1
      %v2022 = vrot.slane %v1994, 1
      %v2023 = vsel %vm524, %v2021, %v2022
      %v2024 = vrot.slane %v1990, 1
      %v2025 = vrot.slane %v1995, 1
      %v2026 = vsel %vm524, %v2024, %v2025
      %v2027 = vrot.slane %v1991, 1
      %v2028 = vrot.slane %v1996, 1
      %v2029 = vsel %vm524, %v2027, %v2028
      %v2030 = vrot.slane %v1992, 1
      %v2031 = vrot.slane %v1997, 1
      %v2032 = vsel %vm524, %v2030, %v2031
      %v2033 = vrot.slane %v1998, 1
      %v2034 = vsel %vm524, %v2019, %v2033
      %v2035 = vrot.slane %v1999, 1
      %v2036 = vsel %vm524, %v2022, %v2035
      %v2037 = vrot.slane %v2000, 1
      %v2038 = vsel %vm524, %v2025, %v2037
      %v2039 = vrot.slane %v2001, 1
      %v2040 = vsel %vm524, %v2028, %v2039
      %v2041 = vrot.slane %v2002, 1
      %v2042 = vsel %vm524, %v2031, %v2041
      %2043 = vrot.lane.b32.xlu0 %v2020, 64
      %v2044 = vpop.permute.xlu0 %2043
      %2045 = vrot.lane.b32.xlu0 %v2023, 64
      %v2046 = vpop.permute.xlu0 %2045
      %2047 = vrot.lane.b32.xlu0 %v2026, 64
      %v2048 = vpop.permute.xlu0 %2047
      %2049 = vrot.lane.b32.xlu0 %v2029, 64
      %v2050 = vpop.permute.xlu0 %2049
      %2051 = vrot.lane.b32.xlu0 %v2032, 64
      %v2052 = vpop.permute.xlu0 %2051
      %2053 = vrot.lane.b32.xlu0 %v2034, 64
      %v2054 = vpop.permute.xlu0 %2053
      %2055 = vrot.lane.b32.xlu0 %v2036, 64
      %v2056 = vpop.permute.xlu0 %2055
      %2057 = vrot.lane.b32.xlu0 %v2038, 64
      %v2058 = vpop.permute.xlu0 %2057
      %2059 = vrot.lane.b32.xlu0 %v2040, 64
      %v2060 = vpop.permute.xlu0 %2059
      %2061 = vrot.lane.b32.xlu0 %v2042, 64
      %v2062 = vpop.permute.xlu0 %2061
      %v2063 = vsel %vm411, %v2044, %v2046
      %v2064 = vsel %vm411, %v2046, %v2048
      %v2065 = vsel %vm411, %v2048, %v2050
      %v2066 = vsel %vm411, %v2050, %v2052
      %v2067 = vsel %vm411, %v2054, %v2056
      %v2068 = vsel %vm411, %v2056, %v2058
      %v2069 = vsel %vm411, %v2058, %v2060
      %v2070 = vsel %vm411, %v2060, %v2062
      %v2079 = vadd.f32 %v1944, %v2063
      %v2080 = vadd.f32 %v1945, %v2064
      %v2081 = vadd.f32 %v1946, %v2065
      %v2082 = vadd.f32 %v1947, %v2066
      %v2083 = vadd.f32 %v1948, %v2067
      %v2084 = vadd.f32 %v1949, %v2068
      %v2085 = vadd.f32 %v1950, %v2069
      %v2086 = vadd.f32 %v1951, %v2070
      %v2087 = vlaneseq
      %v2088 = vshrl.u32 %v2087, 7
      %v2089 = vsub.s32 6, %v2088
      %v2090 = vrot.slane %v241, %v2089
      %v2091 = vlaneseq
      %v2092 = vshrl.u32 %v2091, 7
      %v2093 = vsub.s32 6, %v2092
      %v2094 = vrot.slane %v242, %v2093
      %v2095 = vlaneseq
      %v2096 = vshrl.u32 %v2095, 7
      %v2097 = vsub.s32 6, %v2096
      %v2098 = vrot.slane %v243, %v2097
      %v2099 = vlaneseq
      %v2100 = vshrl.u32 %v2099, 7
      %v2101 = vsub.s32 6, %v2100
      %v2102 = vrot.slane %v244, %v2101
      %v2103 = vmul.f32 %v1491, %v2090
      %v2104 = vmul.f32 %v1492, %v2094
      %v2105 = vmul.f32 %v1493, %v2098
      %v2106 = vmul.f32 %v1494, %v2102
      %v2107 = vmul.f32 %v1467, %v2090
      %v2108 = vmul.f32 %v1469, %v2094
      %v2109 = vmul.f32 %v1471, %v2098
      %v2110 = vmul.f32 %v1473, %v2102
      %v2111 = vmul.f32 %v1496, %v2090
      %v2112 = vmul.f32 %v1497, %v2094
      %v2113 = vmul.f32 %v1498, %v2098
      %v2114 = vmul.f32 %v1499, %v2102
      %v2127 = vrot.slane %v2103, 2
      %v2128 = vrot.slane %v2107, 2
      %v2129 = vsel %vm871, %v2127, %v2128
      %v2130 = vrot.slane %v2104, 2
      %v2131 = vrot.slane %v2108, 2
      %v2132 = vsel %vm871, %v2130, %v2131
      %v2133 = vrot.slane %v2105, 2
      %v2134 = vrot.slane %v2109, 2
      %v2135 = vsel %vm871, %v2133, %v2134
      %v2136 = vrot.slane %v2106, 2
      %v2137 = vrot.slane %v2110, 2
      %v2138 = vsel %vm871, %v2136, %v2137
      %v2139 = vrot.slane %v2111, 2
      %v2140 = vsel %vm871, %v2128, %v2139
      %v2141 = vrot.slane %v2112, 2
      %v2142 = vsel %vm871, %v2131, %v2141
      %v2143 = vrot.slane %v2113, 2
      %v2144 = vsel %vm871, %v2134, %v2143
      %v2145 = vrot.slane %v2114, 2
      %v2146 = vsel %vm871, %v2137, %v2145
      %v2155 = vadd.f32 %v2079, %v2129
      %v2156 = vadd.f32 %v2080, %v2132
      %v2157 = vadd.f32 %v2081, %v2135
      %v2158 = vadd.f32 %v2082, %v2138
      %v2159 = vadd.f32 %v2083, %v2140
      %v2160 = vadd.f32 %v2084, %v2142
      %v2161 = vadd.f32 %v2085, %v2144
      %v2162 = vadd.f32 %v2086, %v2146
      %v2163 = vlaneseq
      %v2164 = vshrl.u32 %v2163, 7
      %v2165 = vsub.s32 7, %v2164
      %v2166 = vrot.slane %v241, %v2165
      %v2167 = vlaneseq
      %v2168 = vshrl.u32 %v2167, 7
      %v2169 = vsub.s32 7, %v2168
      %v2170 = vrot.slane %v242, %v2169
      %v2171 = vlaneseq
      %v2172 = vshrl.u32 %v2171, 7
      %v2173 = vsub.s32 7, %v2172
      %v2174 = vrot.slane %v243, %v2173
      %v2175 = vlaneseq
      %v2176 = vshrl.u32 %v2175, 7
      %v2177 = vsub.s32 7, %v2176
      %v2178 = vrot.slane %v244, %v2177
      %2183 = vrot.lane.b32.xlu0 %v2166, 32
      %v2184 = vpop.permute.xlu0 %2183
      %2185 = vrot.lane.b32.xlu0 %v2170, 32
      %v2186 = vpop.permute.xlu0 %2185
      %2187 = vrot.lane.b32.xlu0 %v2174, 32
      %v2188 = vpop.permute.xlu0 %2187
      %2189 = vrot.lane.b32.xlu0 %v2178, 32
      %v2190 = vpop.permute.xlu0 %2189
      %v2191 = vsel %vm309, %v2184, %v2186
      %v2192 = vsel %vm309, %v2186, %v2188
      %v2193 = vsel %vm309, %v2188, %v2190
      %v2199 = vmul.f32 %v1491, %v2184
      %v2200 = vmul.f32 %v1492, %v2191
      %v2201 = vmul.f32 %v1493, %v2192
      %v2202 = vmul.f32 %v1494, %v2193
      %v2203 = vmul.f32 %v1495, %v2190
      %v2204 = vmul.f32 %v1467, %v2184
      %v2205 = vmul.f32 %v1469, %v2191
      %v2206 = vmul.f32 %v1471, %v2192
      %v2207 = vmul.f32 %v1473, %v2193
      %v2208 = vmul.f32 %v1475, %v2190
      %v2209 = vmul.f32 %v1496, %v2184
      %v2210 = vmul.f32 %v1497, %v2191
      %v2211 = vmul.f32 %v1498, %v2192
      %v2212 = vmul.f32 %v1499, %v2193
      %v2213 = vmul.f32 %v1500, %v2190
      %v2229 = vrot.slane %v2199, 2
      %v2230 = vrot.slane %v2204, 2
      %v2231 = vsel %vm871, %v2229, %v2230
      %v2232 = vrot.slane %v2200, 2
      %v2233 = vrot.slane %v2205, 2
      %v2234 = vsel %vm871, %v2232, %v2233
      %v2235 = vrot.slane %v2201, 2
      %v2236 = vrot.slane %v2206, 2
      %v2237 = vsel %vm871, %v2235, %v2236
      %v2238 = vrot.slane %v2202, 2
      %v2239 = vrot.slane %v2207, 2
      %v2240 = vsel %vm871, %v2238, %v2239
      %v2241 = vrot.slane %v2203, 2
      %v2242 = vrot.slane %v2208, 2
      %v2243 = vsel %vm871, %v2241, %v2242
      %v2244 = vrot.slane %v2209, 2
      %v2245 = vsel %vm871, %v2230, %v2244
      %v2246 = vrot.slane %v2210, 2
      %v2247 = vsel %vm871, %v2233, %v2246
      %v2248 = vrot.slane %v2211, 2
      %v2249 = vsel %vm871, %v2236, %v2248
      %v2250 = vrot.slane %v2212, 2
      %v2251 = vsel %vm871, %v2239, %v2250
      %v2252 = vrot.slane %v2213, 2
      %v2253 = vsel %vm871, %v2242, %v2252
      %2254 = vrot.lane.b32.xlu0 %v2231, 96
      %v2255 = vpop.permute.xlu0 %2254
      %2256 = vrot.lane.b32.xlu0 %v2234, 96
      %v2257 = vpop.permute.xlu0 %2256
      %2258 = vrot.lane.b32.xlu0 %v2237, 96
      %v2259 = vpop.permute.xlu0 %2258
      %2260 = vrot.lane.b32.xlu0 %v2240, 96
      %v2261 = vpop.permute.xlu0 %2260
      %2262 = vrot.lane.b32.xlu0 %v2243, 96
      %v2263 = vpop.permute.xlu0 %2262
      %2264 = vrot.lane.b32.xlu0 %v2245, 96
      %v2265 = vpop.permute.xlu0 %2264
      %2266 = vrot.lane.b32.xlu0 %v2247, 96
      %v2267 = vpop.permute.xlu0 %2266
      %2268 = vrot.lane.b32.xlu0 %v2249, 96
      %v2269 = vpop.permute.xlu0 %2268
      %2270 = vrot.lane.b32.xlu0 %v2251, 96
      %v2271 = vpop.permute.xlu0 %2270
      %2272 = vrot.lane.b32.xlu0 %v2253, 96
      %v2273 = vpop.permute.xlu0 %2272
      %v2274 = vsel %vm358, %v2255, %v2257
      %v2275 = vsel %vm358, %v2257, %v2259
      %v2276 = vsel %vm358, %v2259, %v2261
      %v2277 = vsel %vm358, %v2261, %v2263
      %v2278 = vsel %vm358, %v2265, %v2267
      %v2279 = vsel %vm358, %v2267, %v2269
      %v2280 = vsel %vm358, %v2269, %v2271
      %v2281 = vsel %vm358, %v2271, %v2273
      %v2290 = vadd.f32 %v2155, %v2274
      %v2291 = vadd.f32 %v2156, %v2275
      %v2292 = vadd.f32 %v2157, %v2276
      %v2293 = vadd.f32 %v2158, %v2277
      %v2294 = vadd.f32 %v2159, %v2278
      %v2295 = vadd.f32 %v2160, %v2279
      %v2296 = vadd.f32 %v2161, %v2280
      %v2297 = vadd.f32 %v2162, %v2281
      %v2298 = vlaneseq
      %v2299 = vshrl.u32 %v2298, 7
      %v2300 = vsub.s32 0, %v2299
      %v2301 = vrot.slane %v245, %v2300
      %v2302 = vlaneseq
      %v2303 = vshrl.u32 %v2302, 7
      %v2304 = vsub.s32 0, %v2303
      %v2305 = vrot.slane %v246, %v2304
      %v2306 = vlaneseq
      %v2307 = vshrl.u32 %v2306, 7
      %v2308 = vsub.s32 0, %v2307
      %v2309 = vrot.slane %v247, %v2308
      %v2310 = vlaneseq
      %v2311 = vshrl.u32 %v2310, 7
      %v2312 = vsub.s32 0, %v2311
      %v2313 = vrot.slane %v248, %v2312
      %2318 = vrot.lane.b32.xlu0 %v2301, 64
      %v2319 = vpop.permute.xlu0 %2318
      %2320 = vrot.lane.b32.xlu0 %v2305, 64
      %v2321 = vpop.permute.xlu0 %2320
      %2322 = vrot.lane.b32.xlu0 %v2309, 64
      %v2323 = vpop.permute.xlu0 %2322
      %2324 = vrot.lane.b32.xlu0 %v2313, 64
      %v2325 = vpop.permute.xlu0 %2324
      %v2326 = vsel %vm411, %v2319, %v2321
      %v2327 = vsel %vm411, %v2321, %v2323
      %v2328 = vsel %vm411, %v2323, %v2325
      %v2334 = vmul.f32 %v1491, %v2319
      %v2335 = vmul.f32 %v1492, %v2326
      %v2336 = vmul.f32 %v1493, %v2327
      %v2337 = vmul.f32 %v1494, %v2328
      %v2338 = vmul.f32 %v1495, %v2325
      %v2339 = vmul.f32 %v1467, %v2319
      %v2340 = vmul.f32 %v1469, %v2326
      %v2341 = vmul.f32 %v1471, %v2327
      %v2342 = vmul.f32 %v1473, %v2328
      %v2343 = vmul.f32 %v1475, %v2325
      %v2344 = vmul.f32 %v1496, %v2319
      %v2345 = vmul.f32 %v1497, %v2326
      %v2346 = vmul.f32 %v1498, %v2327
      %v2347 = vmul.f32 %v1499, %v2328
      %v2348 = vmul.f32 %v1500, %v2325
      %v2364 = vrot.slane %v2334, 2
      %v2365 = vrot.slane %v2339, 2
      %v2366 = vsel %vm871, %v2364, %v2365
      %v2367 = vrot.slane %v2335, 2
      %v2368 = vrot.slane %v2340, 2
      %v2369 = vsel %vm871, %v2367, %v2368
      %v2370 = vrot.slane %v2336, 2
      %v2371 = vrot.slane %v2341, 2
      %v2372 = vsel %vm871, %v2370, %v2371
      %v2373 = vrot.slane %v2337, 2
      %v2374 = vrot.slane %v2342, 2
      %v2375 = vsel %vm871, %v2373, %v2374
      %v2376 = vrot.slane %v2338, 2
      %v2377 = vrot.slane %v2343, 2
      %v2378 = vsel %vm871, %v2376, %v2377
      %v2379 = vrot.slane %v2344, 2
      %v2380 = vsel %vm871, %v2365, %v2379
      %v2381 = vrot.slane %v2345, 2
      %v2382 = vsel %vm871, %v2368, %v2381
      %v2383 = vrot.slane %v2346, 2
      %v2384 = vsel %vm871, %v2371, %v2383
      %v2385 = vrot.slane %v2347, 2
      %v2386 = vsel %vm871, %v2374, %v2385
      %v2387 = vrot.slane %v2348, 2
      %v2388 = vsel %vm871, %v2377, %v2387
      %2389 = vrot.lane.b32.xlu0 %v2366, 64
      %v2390 = vpop.permute.xlu0 %2389
      %2391 = vrot.lane.b32.xlu0 %v2369, 64
      %v2392 = vpop.permute.xlu0 %2391
      %2393 = vrot.lane.b32.xlu0 %v2372, 64
      %v2394 = vpop.permute.xlu0 %2393
      %2395 = vrot.lane.b32.xlu0 %v2375, 64
      %v2396 = vpop.permute.xlu0 %2395
      %2397 = vrot.lane.b32.xlu0 %v2378, 64
      %v2398 = vpop.permute.xlu0 %2397
      %2399 = vrot.lane.b32.xlu0 %v2380, 64
      %v2400 = vpop.permute.xlu0 %2399
      %2401 = vrot.lane.b32.xlu0 %v2382, 64
      %v2402 = vpop.permute.xlu0 %2401
      %2403 = vrot.lane.b32.xlu0 %v2384, 64
      %v2404 = vpop.permute.xlu0 %2403
      %2405 = vrot.lane.b32.xlu0 %v2386, 64
      %v2406 = vpop.permute.xlu0 %2405
      %2407 = vrot.lane.b32.xlu0 %v2388, 64
      %v2408 = vpop.permute.xlu0 %2407
      %v2409 = vsel %vm411, %v2390, %v2392
      %v2410 = vsel %vm411, %v2392, %v2394
      %v2411 = vsel %vm411, %v2394, %v2396
      %v2412 = vsel %vm411, %v2396, %v2398
      %v2413 = vsel %vm411, %v2400, %v2402
      %v2414 = vsel %vm411, %v2402, %v2404
      %v2415 = vsel %vm411, %v2404, %v2406
      %v2416 = vsel %vm411, %v2406, %v2408
      %v2425 = vadd.f32 %v2290, %v2409
      %v2426 = vadd.f32 %v2291, %v2410
      %v2427 = vadd.f32 %v2292, %v2411
      %v2428 = vadd.f32 %v2293, %v2412
      %v2429 = vadd.f32 %v2294, %v2413
      %v2430 = vadd.f32 %v2295, %v2414
      %v2431 = vadd.f32 %v2296, %v2415
      %v2432 = vadd.f32 %v2297, %v2416
      %2433 = vst [vmem:[%s217] sm:$0xff] %v2425
      %2434 = vst [vmem:[%s217 + $0x8] sm:$0xff] %v2426
      %2435 = vst [vmem:[%s217 + $0x10] sm:$0xff] %v2427
      %2436 = vst [vmem:[%s217 + $0x18] sm:$0xff] %v2428
      %2437 = vst [vmem:[%s217 + $0x20] sm:$0xff] %v2429
      %2438 = vst [vmem:[%s217 + $0x28] sm:$0xff] %v2430
      %2439 = vst [vmem:[%s217 + $0x30] sm:$0xff] %v2431
      %2440 = vst [vmem:[%s217 + $0x38] sm:$0xff] %v2432
      %p2441 = scmp.lt.s32.totalorder %s15, 1
      %s2442 = scalar_select %p2441, %s15, 1
      %s2443 = smul.addr %s2442, 8
      %s2444 = smul.addr %s2443, 8
      %s2445 = scalar_lea.vmem %s4, %s2444
      // Predicated region
      $region37: #{psa_forward.3} parent=35 // pred_check
        %p2446 = pneg %p127
      $region38: #{psa_forward.3} parent=35 // pred_check_branch
        %2448 = sbr.rel (%p2446) target = $region40
      $region39: #{psa_forward.3} parent=35 // pred_region
        _
      $region40: #{psa_forward.3} parent=35 // pred_fallthru
        _
    $region36: #{psa_forward.3} parent=5 // pred_fallthru
      _
    %p2449 = scmp.le.s32.totalorder 2, %s10
    // Predicated region
    $region41: #{psa_forward.3} parent=5 // pred_check
      %p2450 = pneg %p2449
    $region42: #{psa_forward.3} parent=5 // pred_check_branch
      %2452 = sbr.rel (%p2450) target = $region44
    $region43: #{psa_forward.3} parent=5 // pred_region
      %s2453 = ssub.s32 %s10, 2
      // Predicated region
      $region45: #{psa_forward.3} parent=43 // pred_check
        %p2454 = pneg %p133
      $region46: #{psa_forward.3} parent=43 // pred_check_branch
        %2456 = sbr.rel (%p2454) target = $region48
      $region47: #{psa_forward.3} parent=43 // pred_region
        %p2457 = scmp.lt.s32.totalorder %s16, 1
        %s2458 = scalar_select %p2457, %s16, 1
        %s2459 = smul.addr %s2458, 8
        %s2460 = smul.addr %s2459, 8
        %s2461 = scalar_lea.vmem %s4, %s2460
      $region48: #{psa_forward.3} parent=43 // pred_fallthru
        _
    $region44: #{psa_forward.3} parent=5 // pred_fallthru
      _
  $region6: #{psa_forward.3} parent=0 // loop_footer
    %s14 = sadd.s32 1, %s10
  $region7: #{psa_forward.3} parent=0 // loop_footer_branch
    %9 = sbr.rel target = $region3
  $region8: #{psa_forward.3} parent=0 // loop_exit
    _

// kernel: psa_forward.2
$region0: #{psa_forward.2}
  #allocation0 [shape = 'u32[]', space=smem, size = 0x4, offset = 0x4, fixed_abs, tag = 'smem constant byte address 0x4 - core index']
  #allocation1 [shape = 'u32[144,128]{1,0:T(1,128)}', space=vmem, size = 0x12000, scoped, tag = 'internal scratch']
  #allocation2 [shape = 'f32[32,32]{1,0:T(8,128)}', space=vmem, size = 0x4000, scoped, tag = 'scratch operand']
  %s0 = inlined_call_operand.vmem [shape: f32[4], index: 0, kind: input, shape index: {}]
  %s1 = inlined_call_operand.vmem [shape: f32[4], index: 1, kind: input, shape index: {}]
  %s2 = inlined_call_operand.vmem [shape: f32[2,256,32], index: 2, kind: input, shape index: {}]
  %s3 = inlined_call_operand.vmem [shape: f32[2,64,32], index: 3, kind: input, shape index: {}]
  %s4 = inlined_call_operand.vmem [shape: f32[32,96], index: 4, kind: input, shape index: {}]
  %s5 = inlined_call_operand.vmem [shape: f32[32,64], index: 5, kind: input, shape index: {}]
  %s6 = inlined_call_operand.vmem [shape: f32[32,32], index: 6, kind: input, shape index: {}]
  %s7 = inlined_call_operand.vmem [shape: f32[1,32], index: 7, kind: input, shape index: {}]
  %s8 = inlined_call_operand.vmem [shape: f32[2,256,32], index: 8, kind: output, shape index: {0}]
  %s9 = inlined_call_operand.vmem [shape: f32[2,256,32], index: 9, kind: output, shape index: {1}]
  %10 = xla_tuple %s8, %s9
  %s11 = sld [smem:[#allocation0]]
  $region81: #{psa_forward.2} parent=0
    _
  %s13 = ssub.s32 1, %s11
  %s14 = scalar_select 0, %s13, %s11
  $region1: #{psa_forward.2} parent=0
    #allocation3 [shape = 'u8[512]{0}', space=smem, size = 0x200, scoped, tag = 'input window, operand 0, single buffered']
    #allocation4 [shape = 's32[2]{0}', space=sflag, size = 0x8, scoped, tag = 'scoped memory for psa_forward.2']
    #allocation5 [shape = 'u8[512]{0}', space=smem, size = 0x200, scoped, tag = 'input window, operand 1, single buffered']
    #allocation6 [shape = 's32[1]{0}', space=sflag, size = 0x4, scoped, tag = 'scoped memory for psa_forward.2']
    %15 = vsyncpa [#allocation4], 0
    %16 = vsyncpa [#allocation6], 0
    loop: start=0, step=1, limit=4
    $region2: #{psa_forward.2} parent=1 // loop_pre_header
      _
    $region3: #{psa_forward.2} parent=1 // loop_header
      %s18 = sphi 0, %s22
      %p19 = scmp.ge.s32.totalorder %s18, 4
      %s26 = sphi 0, %s26
      %s28 = sphi 0, %s26
      %s29 = sphi 0, %s28
      %s43 = sphi 0, %s29
      %s47 = sphi 0, %s47
      %s49 = sphi 0, %s47
      %s50 = sphi 0, %s49
      %s64 = sphi 0, %s50
      %s70 = sphi 0, %s72
      %s73 = sphi 0, %s70
      %s74 = sphi 0, %s73
      %s90 = sphi 0, %s74
      %s96 = sphi 0, %s98
      %s99 = sphi 0, %s96
      %s100 = sphi 0, %s99
      %s116 = sphi 0, %s100
      %s120 = sphi 0, %s120
      %s122 = sphi 0, %s120
      %s123 = sphi 0, %s122
      %s137 = sphi 0, %s123
      %s141 = sphi 0, %s141
      %s143 = sphi 0, %s141
      %s144 = sphi 0, %s143
      %s158 = sphi 0, %s144
      %s162 = sphi 0, %s162
      %s164 = sphi 0, %s162
      %s165 = sphi 0, %s164
      %s179 = sphi 0, %s165
      %s183 = sphi 0, %s183
      %s185 = sphi 0, %s183
      %s186 = sphi 0, %s185
      %s200 = sphi 0, %s186
      %s206 = sphi 0, %s208
      %s209 = sphi 0, %s206
      %s210 = sphi 0, %s209
      %s226 = sphi 0, %s210
      %s232 = sphi 0, %s234
      %s235 = sphi 0, %s232
      %s236 = sphi 0, %s235
      %s252 = sphi 0, %s236
    $region4: #{psa_forward.2} parent=1 // loop_header_branch
      %21 = sbr.rel (%p19) target = $region8
    $region5: #{psa_forward.2} parent=1 // loop_body
      %s23 = ssub.s32 %s18, 1
      %s24 = ssub.s32 %s18, 2
      %s25 = sadd.s32 %s18, 1
      %s27 = sadd.s32 %s26, 1
      %p30 = scmp.eq.s32.totalorder %s18, 1
      %p31 = scmp.ne.s32.totalorder %s26, %s28
      %p32 = scmp.eq.s32.totalorder %s18, 0
      %p33 = por %p31, %p32
      %p34 = scmp.ne.s32.totalorder %s26, %s28
      %p35 = scmp.eq.s32.totalorder %s23, 1
      %p36 = por %p34, %p35
      %p37 = scmp.ne.s32.totalorder %s28, %s29
      %p38 = scmp.eq.s32.totalorder %s23, 0
      %p39 = por %p37, %p38
      %p40 = scmp.ne.s32.totalorder %s28, %s29
      %p41 = scmp.eq.s32.totalorder %s24, 1
      %p42 = por %p40, %p41
      %p44 = scmp.ne.s32.totalorder %s29, %s43
      %p45 = scmp.eq.s32.totalorder %s24, 0
      %p46 = por %p44, %p45
      %s48 = sadd.s32 %s47, 1
      %p51 = scmp.eq.s32.totalorder %s18, 1
      %p52 = scmp.ne.s32.totalorder %s47, %s49
      %p53 = scmp.eq.s32.totalorder %s18, 0
      %p54 = por %p52, %p53
      %p55 = scmp.ne.s32.totalorder %s47, %s49
      %p56 = scmp.eq.s32.totalorder %s23, 1
      %p57 = por %p55, %p56
      %p58 = scmp.ne.s32.totalorder %s49, %s50
      %p59 = scmp.eq.s32.totalorder %s23, 0
      %p60 = por %p58, %p59
      %p61 = scmp.ne.s32.totalorder %s49, %s50
      %p62 = scmp.eq.s32.totalorder %s24, 1
      %p63 = por %p61, %p62
      %p65 = scmp.ne.s32.totalorder %s50, %s64
      %p66 = scmp.eq.s32.totalorder %s24, 0
      %p67 = por %p65, %p66
      %s68 = ssub.s32 %s18, %s25
      %p69 = scmp.eq.s32.totalorder %s68, 0
      %s71 = sadd.s32 %s70, 1
      %s72 = scalar_select %p69, %s70, %s71
      %p75 = pneg %p69
      %p76 = scmp.eq.s32.totalorder %s18, 1
      %p77 = por %p75, %p76
      %p78 = scmp.ne.s32.totalorder %s70, %s73
      %p79 = scmp.eq.s32.totalorder %s18, 0
      %p80 = por %p78, %p79
      %p81 = scmp.ne.s32.totalorder %s70, %s73
      %p82 = scmp.eq.s32.totalorder %s23, 1
      %p83 = por %p81, %p82
      %p84 = scmp.ne.s32.totalorder %s73, %s74
      %p85 = scmp.eq.s32.totalorder %s23, 0
      %p86 = por %p84, %p85
      %p87 = scmp.ne.s32.totalorder %s73, %s74
      %p88 = scmp.eq.s32.totalorder %s24, 1
      %p89 = por %p87, %p88
      %p91 = scmp.ne.s32.totalorder %s74, %s90
      %p92 = scmp.eq.s32.totalorder %s24, 0
      %p93 = por %p91, %p92
      %s94 = ssub.s32 %s18, %s25
      %p95 = scmp.eq.s32.totalorder %s94, 0
      %s97 = sadd.s32 %s96, 1
      %s98 = scalar_select %p95, %s96, %s97
      %p101 = pneg %p95
      %p102 = scmp.eq.s32.totalorder %s18, 1
      %p103 = por %p101, %p102
      %p104 = scmp.ne.s32.totalorder %s96, %s99
      %p105 = scmp.eq.s32.totalorder %s18, 0
      %p106 = por %p104, %p105
      %p107 = scmp.ne.s32.totalorder %s96, %s99
      %p108 = scmp.eq.s32.totalorder %s23, 1
      %p109 = por %p107, %p108
      %p110 = scmp.ne.s32.totalorder %s99, %s100
      %p111 = scmp.eq.s32.totalorder %s23, 0
      %p112 = por %p110, %p111
      %p113 = scmp.ne.s32.totalorder %s99, %s100
      %p114 = scmp.eq.s32.totalorder %s24, 1
      %p115 = por %p113, %p114
      %p117 = scmp.ne.s32.totalorder %s100, %s116
      %p118 = scmp.eq.s32.totalorder %s24, 0
      %p119 = por %p117, %p118
      %s121 = sadd.s32 %s120, 1
      %p124 = scmp.eq.s32.totalorder %s18, 1
      %p125 = scmp.ne.s32.totalorder %s120, %s122
      %p126 = scmp.eq.s32.totalorder %s18, 0
      %p127 = por %p125, %p126
      %p128 = scmp.ne.s32.totalorder %s120, %s122
      %p129 = scmp.eq.s32.totalorder %s23, 1
      %p130 = por %p128, %p129
      %p131 = scmp.ne.s32.totalorder %s122, %s123
      %p132 = scmp.eq.s32.totalorder %s23, 0
      %p133 = por %p131, %p132
      %p134 = scmp.ne.s32.totalorder %s122, %s123
      %p135 = scmp.eq.s32.totalorder %s24, 1
      %p136 = por %p134, %p135
      %p138 = scmp.ne.s32.totalorder %s123, %s137
      %p139 = scmp.eq.s32.totalorder %s24, 0
      %p140 = por %p138, %p139
      %s142 = sadd.s32 %s141, 1
      %p145 = scmp.eq.s32.totalorder %s18, 1
      %p146 = scmp.ne.s32.totalorder %s141, %s143
      %p147 = scmp.eq.s32.totalorder %s18, 0
      %p148 = por %p146, %p147
      %p149 = scmp.ne.s32.totalorder %s141, %s143
      %p150 = scmp.eq.s32.totalorder %s23, 1
      %p151 = por %p149, %p150
      %p152 = scmp.ne.s32.totalorder %s143, %s144
      %p153 = scmp.eq.s32.totalorder %s23, 0
      %p154 = por %p152, %p153
      %p155 = scmp.ne.s32.totalorder %s143, %s144
      %p156 = scmp.eq.s32.totalorder %s24, 1
      %p157 = por %p155, %p156
      %p159 = scmp.ne.s32.totalorder %s144, %s158
      %p160 = scmp.eq.s32.totalorder %s24, 0
      %p161 = por %p159, %p160
      %s163 = sadd.s32 %s162, 1
      %p166 = scmp.eq.s32.totalorder %s18, 1
      %p167 = scmp.ne.s32.totalorder %s162, %s164
      %p168 = scmp.eq.s32.totalorder %s18, 0
      %p169 = por %p167, %p168
      %p170 = scmp.ne.s32.totalorder %s162, %s164
      %p171 = scmp.eq.s32.totalorder %s23, 1
      %p172 = por %p170, %p171
      %p173 = scmp.ne.s32.totalorder %s164, %s165
      %p174 = scmp.eq.s32.totalorder %s23, 0
      %p175 = por %p173, %p174
      %p176 = scmp.ne.s32.totalorder %s164, %s165
      %p177 = scmp.eq.s32.totalorder %s24, 1
      %p178 = por %p176, %p177
      %p180 = scmp.ne.s32.totalorder %s165, %s179
      %p181 = scmp.eq.s32.totalorder %s24, 0
      %p182 = por %p180, %p181
      %s184 = sadd.s32 %s183, 1
      %p187 = scmp.eq.s32.totalorder %s18, 1
      %p188 = scmp.ne.s32.totalorder %s183, %s185
      %p189 = scmp.eq.s32.totalorder %s18, 0
      %p190 = por %p188, %p189
      %p191 = scmp.ne.s32.totalorder %s183, %s185
      %p192 = scmp.eq.s32.totalorder %s23, 1
      %p193 = por %p191, %p192
      %p194 = scmp.ne.s32.totalorder %s185, %s186
      %p195 = scmp.eq.s32.totalorder %s23, 0
      %p196 = por %p194, %p195
      %p197 = scmp.ne.s32.totalorder %s185, %s186
      %p198 = scmp.eq.s32.totalorder %s24, 1
      %p199 = por %p197, %p198
      %p201 = scmp.ne.s32.totalorder %s186, %s200
      %p202 = scmp.eq.s32.totalorder %s24, 0
      %p203 = por %p201, %p202
      %s204 = ssub.s32 %s18, %s25
      %p205 = scmp.eq.s32.totalorder %s204, 0
      %s207 = sadd.s32 %s206, 1
      %s208 = scalar_select %p205, %s206, %s207
      %p211 = pneg %p205
      %p212 = scmp.eq.s32.totalorder %s18, 1
      %p213 = por %p211, %p212
      %p214 = scmp.ne.s32.totalorder %s206, %s209
      %p215 = scmp.eq.s32.totalorder %s18, 0
      %p216 = por %p214, %p215
      %p217 = scmp.ne.s32.totalorder %s206, %s209
      %p218 = scmp.eq.s32.totalorder %s23, 1
      %p219 = por %p217, %p218
      %p220 = scmp.ne.s32.totalorder %s209, %s210
      %p221 = scmp.eq.s32.totalorder %s23, 0
      %p222 = por %p220, %p221
      %p223 = scmp.ne.s32.totalorder %s209, %s210
      %p224 = scmp.eq.s32.totalorder %s24, 1
      %p225 = por %p223, %p224
      %p227 = scmp.ne.s32.totalorder %s210, %s226
      %p228 = scmp.eq.s32.totalorder %s24, 0
      %p229 = por %p227, %p228
      %s230 = ssub.s32 %s18, %s25
      %p231 = scmp.eq.s32.totalorder %s230, 0
      %s233 = sadd.s32 %s232, 1
      %s234 = scalar_select %p231, %s232, %s233
      %p237 = pneg %p231
      %p238 = scmp.eq.s32.totalorder %s18, 1
      %p239 = por %p237, %p238
      %p240 = scmp.ne.s32.totalorder %s232, %s235
      %p241 = scmp.eq.s32.totalorder %s18, 0
      %p242 = por %p240, %p241
      %p243 = scmp.ne.s32.totalorder %s232, %s235
      %p244 = scmp.eq.s32.totalorder %s23, 1
      %p245 = por %p243, %p244
      %p246 = scmp.ne.s32.totalorder %s235, %s236
      %p247 = scmp.eq.s32.totalorder %s23, 0
      %p248 = por %p246, %p247
      %p249 = scmp.ne.s32.totalorder %s235, %s236
      %p250 = scmp.eq.s32.totalorder %s24, 1
      %p251 = por %p249, %p250
      %p253 = scmp.ne.s32.totalorder %s236, %s252
      %p254 = scmp.eq.s32.totalorder %s24, 0
      %p255 = por %p253, %p254
      %p256 = scmp.le.s32.totalorder 1, %s18
      %p257 = scmp.lt.s32.totalorder %s18, 3
      %p258 = pnand %p256, %p257
      %p259 = pneg %p258
      // Predicated region
      $region9: #{psa_forward.2} parent=5 // pred_check
        _
      $region10: #{psa_forward.2} parent=5 // pred_check_branch
        %261 = sbr.rel (%p258) target = $region12
      $region11: #{psa_forward.2} parent=5 // pred_region
        %s262 = ssub.s32 %s18, 1
        // Predicated region
        $region13: #{psa_forward.2} parent=11 // pred_check
          %p263 = pneg %p39
        $region14: #{psa_forward.2} parent=11 // pred_check_branch
          %265 = sbr.rel (%p263) target = $region16
        $region15: #{psa_forward.2} parent=11 // pred_region
          %s267 = ssub.s32 16, 16
          %268 = vsyncadd [#allocation4], %s267
          %s270 = sshll.u32 %s0, 4
          %s271 = int_to_ptr.vmem [resolvable:$true] %s270
          %273 = dma.vmem_to_smem %s271, 16, [#allocation3], [#allocation4]
        $region16: #{psa_forward.2} parent=11 // pred_fallthru
          _
        // Predicated region
        $region17: #{psa_forward.2} parent=11 // pred_check
          %p274 = pneg %p60
        $region18: #{psa_forward.2} parent=11 // pred_check_branch
          %276 = sbr.rel (%p274) target = $region20
        $region19: #{psa_forward.2} parent=11 // pred_region
          %s278 = ssub.s32 16, 16
          %279 = vsyncadd [#allocation6], %s278
          %s281 = sshll.u32 %s1, 4
          %s282 = int_to_ptr.vmem [resolvable:$true] %s281
          %284 = dma.vmem_to_smem %s282, 16, [#allocation5], [#allocation6]
        $region20: #{psa_forward.2} parent=11 // pred_fallthru
          _
        // Predicated region
        $region21: #{psa_forward.2} parent=11 // pred_check
          %p285 = pneg %p133
        $region22: #{psa_forward.2} parent=11 // pred_check_branch
          %287 = sbr.rel (%p285) target = $region24
        $region23: #{psa_forward.2} parent=11 // pred_region
          _
        $region24: #{psa_forward.2} parent=11 // pred_fallthru
          _
        // Predicated region
        $region25: #{psa_forward.2} parent=11 // pred_check
          %p288 = pneg %p154
        $region26: #{psa_forward.2} parent=11 // pred_check_branch
          %290 = sbr.rel (%p288) target = $region28
        $region27: #{psa_forward.2} parent=11 // pred_region
          _
        $region28: #{psa_forward.2} parent=11 // pred_fallthru
          _
        // Predicated region
        $region29: #{psa_forward.2} parent=11 // pred_check
          %p291 = pneg %p175
        $region30: #{psa_forward.2} parent=11 // pred_check_branch
          %293 = sbr.rel (%p291) target = $region32
        $region31: #{psa_forward.2} parent=11 // pred_region
          _
        $region32: #{psa_forward.2} parent=11 // pred_fallthru
          _
        // Predicated region
        $region33: #{psa_forward.2} parent=11 // pred_check
          %p294 = pneg %p196
        $region34: #{psa_forward.2} parent=11 // pred_check_branch
          %296 = sbr.rel (%p294) target = $region36
        $region35: #{psa_forward.2} parent=11 // pred_region
          _
        $region36: #{psa_forward.2} parent=11 // pred_fallthru
          _
      $region12: #{psa_forward.2} parent=5 // pred_fallthru
        _
      %p297 = scmp.lt.s32.totalorder %s18, 2
      // Predicated region
      $region37: #{psa_forward.2} parent=5 // pred_check
        %p298 = pneg %p297
      $region38: #{psa_forward.2} parent=5 // pred_check_branch
        %300 = sbr.rel (%p298) target = $region40
      $region39: #{psa_forward.2} parent=5 // pred_region
        // Predicated region
        $region41: #{psa_forward.2} parent=39 // pred_check
          %p301 = pneg %p80
        $region42: #{psa_forward.2} parent=39 // pred_check_branch
          %303 = sbr.rel (%p301) target = $region44
        $region43: #{psa_forward.2} parent=39 // pred_region
          %p304 = scmp.lt.s32.totalorder %s18, 1
          %s305 = scalar_select %p304, %s18, 1
          %s306 = smul.addr %s305, 32
          %s307 = smul.addr %s306, 8
          %s308 = scalar_lea.vmem %s2, %s307
        $region44: #{psa_forward.2} parent=39 // pred_fallthru
          _
        // Predicated region
        $region45: #{psa_forward.2} parent=39 // pred_check
          %p309 = pneg %p106
        $region46: #{psa_forward.2} parent=39 // pred_check_branch
          %311 = sbr.rel (%p309) target = $region48
        $region47: #{psa_forward.2} parent=39 // pred_region
          %p312 = scmp.lt.s32.totalorder %s18, 1
          %s313 = scalar_select %p312, %s18, 1
          %s314 = smul.addr %s313, 8
          %s315 = smul.addr %s314, 8
          %s316 = scalar_lea.vmem %s3, %s315
        $region48: #{psa_forward.2} parent=39 // pred_fallthru
          _
      $region40: #{psa_forward.2} parent=5 // pred_fallthru
        _
      %p317 = scmp.le.s32.totalorder 1, %s18
      %p318 = scmp.lt.s32.totalorder %s18, 3
      %p319 = pnand %p317, %p318
      %p320 = pneg %p319
      // Predicated region
      $region49: #{psa_forward.2} parent=5 // pred_check
        _
      $region50: #{psa_forward.2} parent=5 // pred_check_branch
        %322 = sbr.rel (%p319) target = $region52
      $region51: #{psa_forward.2} parent=5 // pred_region
        %s323 = ssub.s32 %s18, 1
        // Predicated region
        $region53: #{psa_forward.2} parent=51 // pred_check
          %p324 = pneg %p39
        $region54: #{psa_forward.2} parent=51 // pred_check_branch
          %326 = sbr.rel (%p324) target = $region56
        $region55: #{psa_forward.2} parent=51 // pred_region
          %327 = dma.done [#allocation4], 16
        $region56: #{psa_forward.2} parent=51 // pred_fallthru
          _
        // Predicated region
        $region57: #{psa_forward.2} parent=51 // pred_check
          %p328 = pneg %p60
        $region58: #{psa_forward.2} parent=51 // pred_check_branch
          %330 = sbr.rel (%p328) target = $region60
        $region59: #{psa_forward.2} parent=51 // pred_region
          %331 = dma.done [#allocation6], 16
        $region60: #{psa_forward.2} parent=51 // pred_fallthru
          _
        %332 = sfence
        %p333 = pneg %p39
        %p334 = pneg %p36
        %p335 = pneg %p60
        %p336 = pneg %p57
        %p337 = scmp.lt.s32.totalorder %s23, 1
        %s338 = scalar_select %p337, %s23, 1
        %s339 = smul.addr %s338, 32
        %s340 = smul.addr %s339, 8
        %s341 = scalar_lea.vmem %s2, %s340
        %p342 = pneg %p86
        %p343 = pneg %p83
        %p344 = scmp.lt.s32.totalorder %s23, 1
        %s345 = scalar_select %p344, %s23, 1
        %s346 = smul.addr %s345, 8
        %s347 = smul.addr %s346, 8
        %s348 = scalar_lea.vmem %s3, %s347
        %p349 = pneg %p112
        %p350 = pneg %p109
        %p351 = pneg %p133
        %p352 = pneg %p130
        %p353 = pneg %p154
        %p354 = pneg %p151
        %p355 = pneg %p175
        %p356 = pneg %p172
        %p357 = pneg %p196
        %p358 = pneg %p193
        %p359 = pneg %p222
        %p360 = pneg %p219
        %p361 = scmp.lt.s32.totalorder %s23, 1
        %s362 = scalar_select %p361, %s23, 1
        %s363 = smul.addr %s362, 32
        %s364 = smul.addr %s363, 8
        %s365 = scalar_lea.vmem %s8, %s364
        %p366 = pneg %p248
        %p367 = pneg %p245
        %p368 = scmp.lt.s32.totalorder %s23, 1
        %s369 = scalar_select %p368, %s23, 1
        %s370 = smul.addr %s369, 32
        %s371 = smul.addr %s370, 8
        %s372 = scalar_lea.vmem %s9, %s371
        %p373 = scmp.lt.s32.totalorder %s23, 1
        %s374 = scalar_select %p373, %s23, 1
        %s375 = smul.addr %s374, 32
        %s376 = smul.addr %s375, 8
        %s377 = scalar_lea.vmem %s2, %s376
        %p378 = scmp.lt.s32.totalorder %s23, 1
        %s379 = scalar_select %p378, %s23, 1
        %s380 = smul.addr %s379, 8
        %s381 = smul.addr %s380, 8
        %s382 = scalar_lea.vmem %s3, %s381
        %p383 = scmp.lt.s32.totalorder %s23, 1
        %s384 = scalar_select %p383, %s23, 1
        %s385 = smul.addr %s384, 32
        %s386 = smul.addr %s385, 8
        %s387 = scalar_lea.vmem %s8, %s386
        %p388 = scmp.lt.s32.totalorder %s23, 1
        %s389 = scalar_select %p388, %s23, 1
        %s390 = smul.addr %s389, 32
        %s391 = smul.addr %s390, 8
        %s392 = scalar_lea.vmem %s9, %s391
        %v393 = vld [vmem:[%s377] sm:$0xff]
        %v394 = vld [vmem:[%s377 + $0x8] sm:$0xff]
        %v395 = vld [vmem:[%s377 + $0x10] sm:$0xff]
        %v396 = vld [vmem:[%s377 + $0x18] sm:$0xff]
        %v397 = vld [vmem:[%s377 + $0x20] sm:$0xff]
        %v398 = vld [vmem:[%s377 + $0x28] sm:$0xff]
        %v399 = vld [vmem:[%s377 + $0x30] sm:$0xff]
        %v400 = vld [vmem:[%s377 + $0x38] sm:$0xff]
        %v401 = vld [vmem:[%s377 + $0x40] sm:$0xff]
        %v402 = vld [vmem:[%s377 + $0x48] sm:$0xff]
        %v403 = vld [vmem:[%s377 + $0x50] sm:$0xff]
        %v404 = vld [vmem:[%s377 + $0x58] sm:$0xff]
        %v405 = vld [vmem:[%s377 + $0x60] sm:$0xff]
        %v406 = vld [vmem:[%s377 + $0x68] sm:$0xff]
        %v407 = vld [vmem:[%s377 + $0x70] sm:$0xff]
        %v408 = vld [vmem:[%s377 + $0x78] sm:$0xff]
        %v409 = vld [vmem:[%s377 + $0x80] sm:$0xff]
        %v410 = vld [vmem:[%s377 + $0x88] sm:$0xff]
        %v411 = vld [vmem:[%s377 + $0x90] sm:$0xff]
        %v412 = vld [vmem:[%s377 + $0x98] sm:$0xff]
        %v413 = vld [vmem:[%s377 + $0xa0] sm:$0xff]
        %v414 = vld [vmem:[%s377 + $0xa8] sm:$0xff]
        %v415 = vld [vmem:[%s377 + $0xb0] sm:$0xff]
        %v416 = vld [vmem:[%s377 + $0xb8] sm:$0xff]
        %v417 = vld [vmem:[%s377 + $0xc0] sm:$0xff]
        %v418 = vld [vmem:[%s377 + $0xc8] sm:$0xff]
        %v419 = vld [vmem:[%s377 + $0xd0] sm:$0xff]
        %v420 = vld [vmem:[%s377 + $0xd8] sm:$0xff]
        %v421 = vld [vmem:[%s377 + $0xe0] sm:$0xff]
        %v422 = vld [vmem:[%s377 + $0xe8] sm:$0xff]
        %v423 = vld [vmem:[%s377 + $0xf0] sm:$0xff]
        %v424 = vld [vmem:[%s377 + $0xf8] sm:$0xff]
        %v425 = vld [vmem:[%s4] sm:$0xff]
        %v426 = vld [vmem:[%s4 + $0x8] sm:$0xff]
        %v427 = vld [vmem:[%s4 + $0x10] sm:$0xff]
        %v428 = vld [vmem:[%s4 + $0x18] sm:$0xff]
        %vm429 = vcmask 261120
        %v431 = vsel %vm429, %v393, 0
        %v434 = vsel %vm429, %v394, 0
        %v437 = vsel %vm429, %v395, 0
        %v440 = vsel %vm429, %v396, 0
        %v443 = vsel %vm429, %v397, 0
        %v446 = vsel %vm429, %v398, 0
        %v449 = vsel %vm429, %v399, 0
        %v452 = vsel %vm429, %v400, 0
        %v455 = vsel %vm429, %v401, 0
        %v458 = vsel %vm429, %v402, 0
        %v461 = vsel %vm429, %v403, 0
        %v464 = vsel %vm429, %v404, 0
        %v467 = vsel %vm429, %v405, 0
        %v470 = vsel %vm429, %v406, 0
        %v473 = vsel %vm429, %v407, 0
        %v476 = vsel %vm429, %v408, 0
        %v479 = vsel %vm429, %v409, 0
        %v482 = vsel %vm429, %v410, 0
        %v485 = vsel %vm429, %v411, 0
        %v488 = vsel %vm429, %v412, 0
        %v491 = vsel %vm429, %v413, 0
        %v494 = vsel %vm429, %v414, 0
        %v497 = vsel %vm429, %v415, 0
        %v500 = vsel %vm429, %v416, 0
        %v503 = vsel %vm429, %v417, 0
        %v506 = vsel %vm429, %v418, 0
        %v509 = vsel %vm429, %v419, 0
        %v512 = vsel %vm429, %v420, 0
        %v515 = vsel %vm429, %v421, 0
        %v518 = vsel %vm429, %v422, 0
        %v521 = vsel %vm429, %v423, 0
        %v524 = vsel %vm429, %v424, 0
        %526 = vmatprep.subr.mxu0 0.0
        %527 = vmatpush1.msra.mxu0 0.0
        %528 = vmatprep.subr.mxu0 0.0
        %529 = vmatpush1.msra.mxu0 0.0
        %530 = vmatprep.subr.mxu0 0.0
        %531 = vmatpush1.msra.mxu0 0.0
        %532 = vmatprep.subr.mxu0 0.0
        %533 = vmatpush1.msra.mxu0 0.0
        %534 = vmatprep.subr.mxu0 0.0
        %535 = vmatpush1.msra.mxu0 0.0
        %536 = vmatprep.subr.mxu0 0.0
        %537 = vmatpush1.msra.mxu0 0.0
        %538 = vmatprep.subr.mxu0 0.0
        %539 = vmatpush1.msra.mxu0 0.0
        %540 = vmatprep.subr.mxu0 0.0
        %541 = vmatpush1.msra.mxu0 0.0
        %542 = vmatprep.subr.mxu0 0.0
        %543 = vmatpush1.msra.mxu0 0.0
        %544 = vmatprep.subr.mxu0 0.0
        %545 = vmatpush1.msra.mxu0 0.0
        %546 = vmatprep.subr.mxu0 0.0
        %547 = vmatpush1.msra.mxu0 0.0
        %548 = vmatprep.subr.mxu0 0.0
        %549 = vmatpush1.msra.mxu0 0.0
        %550 = vmatprep.subr.mxu0 0.0
        %551 = vmatpush1.msra.mxu0 %v428
        %552 = vmatprep.subr.mxu0 0.0
        %553 = vmatpush1.msra.mxu0 %v427
        %554 = vmatprep.subr.mxu0 0.0
        %555 = vmatpush1.msra.mxu0 %v426
        %556 = vmatprep.subr.mxu0 0.0
        %557 = vmatpush1.msra.mxu0 %v425
        %558 = vmatprep.subr.mxu0 0.0
        %559 = vmatpush2.msra.mxu0 0.0
        %560 = vmatprep.subr.mxu0 0.0
        %561 = vmatpush2.msra.mxu0 0.0
        %562 = vmatprep.subr.mxu0 0.0
        %563 = vmatpush2.msra.mxu0 0.0
        %564 = vmatprep.subr.mxu0 0.0
        %565 = vmatpush2.msra.mxu0 0.0
        %566 = vmatprep.subr.mxu0 0.0
        %567 = vmatpush2.msra.mxu0 0.0
        %568 = vmatprep.subr.mxu0 0.0
        %569 = vmatpush2.msra.mxu0 0.0
        %570 = vmatprep.subr.mxu0 0.0
        %571 = vmatpush2.msra.mxu0 0.0
        %572 = vmatprep.subr.mxu0 0.0
        %573 = vmatpush2.msra.mxu0 0.0
        %574 = vmatprep.subr.mxu0 0.0
        %575 = vmatpush2.msra.mxu0 0.0
        %576 = vmatprep.subr.mxu0 0.0
        %577 = vmatpush2.msra.mxu0 0.0
        %578 = vmatprep.subr.mxu0 0.0
        %579 = vmatpush2.msra.mxu0 0.0
        %580 = vmatprep.subr.mxu0 0.0
        %581 = vmatpush2.msra.mxu0 0.0
        %582 = vmatprep.subr.mxu0 0.0
        %583 = vmatpush2.msra.mxu0 0.0
        %584 = vmatprep.subr.mxu0 0.0
        %585 = vmatpush2.msra.mxu0 0.0
        %586 = vmatprep.subr.mxu0 0.0
        %587 = vmatpush2.msra.mxu0 0.0
        %588 = vmatprep.subr.mxu0 0.0
        %589 = vmatpush2.msra.mxu0 0.0
        %590 = vmatprep.mubr.f32.mxu0 0.0
        %591 = vmatmul.mubr.f32.gmra.mxu0 %v431
        %v592 = vpop.f32.mrf.mxu0
        %v593 = vadd.f32 0.0, %v592
        %v594 = vpop.f32.mrf.mxu0
        %595 = vmatprep.mubr.f32.mxu0 0.0
        %596 = vmatmul.mubr.f32.gmra.mxu0 %v434
        %v597 = vpop.f32.mrf.mxu0
        %v598 = vadd.f32 0.0, %v597
        %v599 = vpop.f32.mrf.mxu0
        %600 = vmatprep.mubr.f32.mxu0 0.0
        %601 = vmatmul.mubr.f32.gmra.mxu0 %v437
        %v602 = vpop.f32.mrf.mxu0
        %v603 = vadd.f32 0.0, %v602
        %v604 = vpop.f32.mrf.mxu0
        %605 = vmatprep.mubr.f32.mxu0 0.0
        %606 = vmatmul.mubr.f32.gmra.mxu0 %v440
        %v607 = vpop.f32.mrf.mxu0
        %v608 = vadd.f32 0.0, %v607
        %v609 = vpop.f32.mrf.mxu0
        %610 = vmatprep.mubr.f32.mxu0 0.0
        %611 = vmatmul.mubr.f32.gmra.mxu0 %v443
        %v612 = vpop.f32.mrf.mxu0
        %v613 = vadd.f32 0.0, %v612
        %v614 = vpop.f32.mrf.mxu0
        %615 = vmatprep.mubr.f32.mxu0 0.0
        %616 = vmatmul.mubr.f32.gmra.mxu0 %v446
        %v617 = vpop.f32.mrf.mxu0
        %v618 = vadd.f32 0.0, %v617
        %v619 = vpop.f32.mrf.mxu0
        %620 = vmatprep.mubr.f32.mxu0 0.0
        %621 = vmatmul.mubr.f32.gmra.mxu0 %v449
        %v622 = vpop.f32.mrf.mxu0
        %v623 = vadd.f32 0.0, %v622
        %v624 = vpop.f32.mrf.mxu0
        %625 = vmatprep.mubr.f32.mxu0 0.0
        %626 = vmatmul.mubr.f32.gmra.mxu0 %v452
        %v627 = vpop.f32.mrf.mxu0
        %v628 = vadd.f32 0.0, %v627
        %v629 = vpop.f32.mrf.mxu0
        %630 = vmatprep.mubr.f32.mxu0 0.0
        %631 = vmatmul.mubr.f32.gmra.mxu0 %v455
        %v632 = vpop.f32.mrf.mxu0
        %v633 = vadd.f32 0.0, %v632
        %v634 = vpop.f32.mrf.mxu0
        %635 = vmatprep.mubr.f32.mxu0 0.0
        %636 = vmatmul.mubr.f32.gmra.mxu0 %v458
        %v637 = vpop.f32.mrf.mxu0
        %v638 = vadd.f32 0.0, %v637
        %v639 = vpop.f32.mrf.mxu0
        %640 = vmatprep.mubr.f32.mxu0 0.0
        %641 = vmatmul.mubr.f32.gmra.mxu0 %v461
        %v642 = vpop.f32.mrf.mxu0
        %v643 = vadd.f32 0.0, %v642
        %v644 = vpop.f32.mrf.mxu0
        %645 = vmatprep.mubr.f32.mxu0 0.0
        %646 = vmatmul.mubr.f32.gmra.mxu0 %v464
        %v647 = vpop.f32.mrf.mxu0
        %v648 = vadd.f32 0.0, %v647
        %v649 = vpop.f32.mrf.mxu0
        %650 = vmatprep.mubr.f32.mxu0 0.0
        %651 = vmatmul.mubr.f32.gmra.mxu0 %v467
        %v652 = vpop.f32.mrf.mxu0
        %v653 = vadd.f32 0.0, %v652
        %v654 = vpop.f32.mrf.mxu0
        %655 = vmatprep.mubr.f32.mxu0 0.0
        %656 = vmatmul.mubr.f32.gmra.mxu0 %v470
        %v657 = vpop.f32.mrf.mxu0
        %v658 = vadd.f32 0.0, %v657
        %v659 = vpop.f32.mrf.mxu0
        %660 = vmatprep.mubr.f32.mxu0 0.0
        %661 = vmatmul.mubr.f32.gmra.mxu0 %v473
        %v662 = vpop.f32.mrf.mxu0
        %v663 = vadd.f32 0.0, %v662
        %v664 = vpop.f32.mrf.mxu0
        %665 = vmatprep.mubr.f32.mxu0 0.0
        %666 = vmatmul.mubr.f32.gmra.mxu0 %v476
        %v667 = vpop.f32.mrf.mxu0
        %v668 = vadd.f32 0.0, %v667
        %v669 = vpop.f32.mrf.mxu0
        %670 = vmatprep.mubr.f32.mxu0 0.0
        %671 = vmatmul.mubr.f32.gmra.mxu0 %v479
        %v672 = vpop.f32.mrf.mxu0
        %v673 = vadd.f32 0.0, %v672
        %v674 = vpop.f32.mrf.mxu0
        %675 = vmatprep.mubr.f32.mxu0 0.0
        %676 = vmatmul.mubr.f32.gmra.mxu0 %v482
        %v677 = vpop.f32.mrf.mxu0
        %v678 = vadd.f32 0.0, %v677
        %v679 = vpop.f32.mrf.mxu0
        %680 = vmatprep.mubr.f32.mxu0 0.0
        %681 = vmatmul.mubr.f32.gmra.mxu0 %v485
        %v682 = vpop.f32.mrf.mxu0
        %v683 = vadd.f32 0.0, %v682
        %v684 = vpop.f32.mrf.mxu0
        %685 = vmatprep.mubr.f32.mxu0 0.0
        %686 = vmatmul.mubr.f32.gmra.mxu0 %v488
        %v687 = vpop.f32.mrf.mxu0
        %v688 = vadd.f32 0.0, %v687
        %v689 = vpop.f32.mrf.mxu0
        %690 = vmatprep.mubr.f32.mxu0 0.0
        %691 = vmatmul.mubr.f32.gmra.mxu0 %v491
        %v692 = vpop.f32.mrf.mxu0
        %v693 = vadd.f32 0.0, %v692
        %v694 = vpop.f32.mrf.mxu0
        %695 = vmatprep.mubr.f32.mxu0 0.0
        %696 = vmatmul.mubr.f32.gmra.mxu0 %v494
        %v697 = vpop.f32.mrf.mxu0
        %v698 = vadd.f32 0.0, %v697
        %v699 = vpop.f32.mrf.mxu0
        %700 = vmatprep.mubr.f32.mxu0 0.0
        %701 = vmatmul.mubr.f32.gmra.mxu0 %v497
        %v702 = vpop.f32.mrf.mxu0
        %v703 = vadd.f32 0.0, %v702
        %v704 = vpop.f32.mrf.mxu0
        %705 = vmatprep.mubr.f32.mxu0 0.0
        %706 = vmatmul.mubr.f32.gmra.mxu0 %v500
        %v707 = vpop.f32.mrf.mxu0
        %v708 = vadd.f32 0.0, %v707
        %v709 = vpop.f32.mrf.mxu0
        %710 = vmatprep.mubr.f32.mxu0 0.0
        %711 = vmatmul.mubr.f32.gmra.mxu0 %v503
        %v712 = vpop.f32.mrf.mxu0
        %v713 = vadd.f32 0.0, %v712
        %v714 = vpop.f32.mrf.mxu0
        %715 = vmatprep.mubr.f32.mxu0 0.0
        %716 = vmatmul.mubr.f32.gmra.mxu0 %v506
        %v717 = vpop.f32.mrf.mxu0
        %v718 = vadd.f32 0.0, %v717
        %v719 = vpop.f32.mrf.mxu0
        %720 = vmatprep.mubr.f32.mxu0 0.0
        %721 = vmatmul.mubr.f32.gmra.mxu0 %v509
        %v722 = vpop.f32.mrf.mxu0
        %v723 = vadd.f32 0.0, %v722
        %v724 = vpop.f32.mrf.mxu0
        %725 = vmatprep.mubr.f32.mxu0 0.0
        %726 = vmatmul.mubr.f32.gmra.mxu0 %v512
        %v727 = vpop.f32.mrf.mxu0
        %v728 = vadd.f32 0.0, %v727
        %v729 = vpop.f32.mrf.mxu0
        %730 = vmatprep.mubr.f32.mxu0 0.0
        %731 = vmatmul.mubr.f32.gmra.mxu0 %v515
        %v732 = vpop.f32.mrf.mxu0
        %v733 = vadd.f32 0.0, %v732
        %v734 = vpop.f32.mrf.mxu0
        %735 = vmatprep.mubr.f32.mxu0 0.0
        %736 = vmatmul.mubr.f32.gmra.mxu0 %v518
        %v737 = vpop.f32.mrf.mxu0
        %v738 = vadd.f32 0.0, %v737
        %v739 = vpop.f32.mrf.mxu0
        %740 = vmatprep.mubr.f32.mxu0 0.0
        %741 = vmatmul.mubr.f32.gmra.mxu0 %v521
        %v742 = vpop.f32.mrf.mxu0
        %v743 = vadd.f32 0.0, %v742
        %v744 = vpop.f32.mrf.mxu0
        %745 = vmatprep.mubr.f32.mxu0 0.0
        %746 = vmatmul.mubr.f32.gmra.mxu0 %v524
        %v747 = vpop.f32.mrf.mxu0
        %v748 = vadd.f32 0.0, %v747
        %v749 = vpop.f32.mrf.mxu0
        %750 = vdwg.mxu0
        %v751 = vld [vmem:[%s382] sm:$0xff]
        %v752 = vld [vmem:[%s382 + $0x8] sm:$0xff]
        %v753 = vld [vmem:[%s382 + $0x10] sm:$0xff]
        %v754 = vld [vmem:[%s382 + $0x18] sm:$0xff]
        %v755 = vld [vmem:[%s382 + $0x20] sm:$0xff]
        %v756 = vld [vmem:[%s382 + $0x28] sm:$0xff]
        %v757 = vld [vmem:[%s382 + $0x30] sm:$0xff]
        %v758 = vld [vmem:[%s382 + $0x38] sm:$0xff]
        %v759 = vld [vmem:[%s5] sm:$0xff]
        %v760 = vld [vmem:[%s5 + $0x8] sm:$0xff]
        %v761 = vld [vmem:[%s5 + $0x10] sm:$0xff]
        %v762 = vld [vmem:[%s5 + $0x18] sm:$0xff]
        %v764 = vsel %vm429, %v751, 0
        %v767 = vsel %vm429, %v752, 0
        %v770 = vsel %vm429, %v753, 0
        %v773 = vsel %vm429, %v754, 0
        %v776 = vsel %vm429, %v755, 0
        %v779 = vsel %vm429, %v756, 0
        %v782 = vsel %vm429, %v757, 0
        %v785 = vsel %vm429, %v758, 0
        %787 = vmatprep.subr.mxu0 0.0
        %788 = vmatpush1.msra.mxu0 0.0
        %789 = vmatprep.subr.mxu0 0.0
        %790 = vmatpush1.msra.mxu0 0.0
        %791 = vmatprep.subr.mxu0 0.0
        %792 = vmatpush1.msra.mxu0 0.0
        %793 = vmatprep.subr.mxu0 0.0
        %794 = vmatpush1.msra.mxu0 0.0
        %795 = vmatprep.subr.mxu0 0.0
        %796 = vmatpush1.msra.mxu0 0.0
        %797 = vmatprep.subr.mxu0 0.0
        %798 = vmatpush1.msra.mxu0 0.0
        %799 = vmatprep.subr.mxu0 0.0
        %800 = vmatpush1.msra.mxu0 0.0
        %801 = vmatprep.subr.mxu0 0.0
        %802 = vmatpush1.msra.mxu0 0.0
        %803 = vmatprep.subr.mxu0 0.0
        %804 = vmatpush1.msra.mxu0 0.0
        %805 = vmatprep.subr.mxu0 0.0
        %806 = vmatpush1.msra.mxu0 0.0
        %807 = vmatprep.subr.mxu0 0.0
        %808 = vmatpush1.msra.mxu0 0.0
        %809 = vmatprep.subr.mxu0 0.0
        %810 = vmatpush1.msra.mxu0 0.0
        %811 = vmatprep.subr.mxu0 0.0
        %812 = vmatpush1.msra.mxu0 %v762
        %813 = vmatprep.subr.mxu0 0.0
        %814 = vmatpush1.msra.mxu0 %v761
        %815 = vmatprep.subr.mxu0 0.0
        %816 = vmatpush1.msra.mxu0 %v760
        %817 = vmatprep.subr.mxu0 0.0
        %818 = vmatpush1.msra.mxu0 %v759
        %819 = vmatprep.subr.mxu0 0.0
        %820 = vmatpush2.msra.mxu0 0.0
        %821 = vmatprep.subr.mxu0 0.0
        %822 = vmatpush2.msra.mxu0 0.0
        %823 = vmatprep.subr.mxu0 0.0
        %824 = vmatpush2.msra.mxu0 0.0
        %825 = vmatprep.subr.mxu0 0.0
        %826 = vmatpush2.msra.mxu0 0.0
        %827 = vmatprep.subr.mxu0 0.0
        %828 = vmatpush2.msra.mxu0 0.0
        %829 = vmatprep.subr.mxu0 0.0
        %830 = vmatpush2.msra.mxu0 0.0
        %831 = vmatprep.subr.mxu0 0.0
        %832 = vmatpush2.msra.mxu0 0.0
        %833 = vmatprep.subr.mxu0 0.0
        %834 = vmatpush2.msra.mxu0 0.0
        %835 = vmatprep.subr.mxu0 0.0
        %836 = vmatpush2.msra.mxu0 0.0
        %837 = vmatprep.subr.mxu0 0.0
        %838 = vmatpush2.msra.mxu0 0.0
        %839 = vmatprep.subr.mxu0 0.0
        %840 = vmatpush2.msra.mxu0 0.0
        %841 = vmatprep.subr.mxu0 0.0
        %842 = vmatpush2.msra.mxu0 0.0
        %843 = vmatprep.subr.mxu0 0.0
        %844 = vmatpush2.msra.mxu0 0.0
        %845 = vmatprep.subr.mxu0 0.0
        %846 = vmatpush2.msra.mxu0 0.0
        %847 = vmatprep.subr.mxu0 0.0
        %848 = vmatpush2.msra.mxu0 0.0
        %849 = vmatprep.subr.mxu0 0.0
        %850 = vmatpush2.msra.mxu0 0.0
        %851 = vmatprep.mubr.f32.mxu0 0.0
        %852 = vmatmul.mubr.f32.gmra.mxu0 %v764
        %v853 = vpop.f32.mrf.mxu0
        %v854 = vadd.f32 0.0, %v853
        %v855 = vpop.f32.mrf.mxu0
        %856 = vmatprep.mubr.f32.mxu0 0.0
        %857 = vmatmul.mubr.f32.gmra.mxu0 %v767
        %v858 = vpop.f32.mrf.mxu0
        %v859 = vadd.f32 0.0, %v858
        %v860 = vpop.f32.mrf.mxu0
        %861 = vmatprep.mubr.f32.mxu0 0.0
        %862 = vmatmul.mubr.f32.gmra.mxu0 %v770
        %v863 = vpop.f32.mrf.mxu0
        %v864 = vadd.f32 0.0, %v863
        %v865 = vpop.f32.mrf.mxu0
        %866 = vmatprep.mubr.f32.mxu0 0.0
        %867 = vmatmul.mubr.f32.gmra.mxu0 %v773
        %v868 = vpop.f32.mrf.mxu0
        %v869 = vadd.f32 0.0, %v868
        %v870 = vpop.f32.mrf.mxu0
        %871 = vmatprep.mubr.f32.mxu0 0.0
        %872 = vmatmul.mubr.f32.gmra.mxu0 %v776
        %v873 = vpop.f32.mrf.mxu0
        %v874 = vadd.f32 0.0, %v873
        %v875 = vpop.f32.mrf.mxu0
        %876 = vmatprep.mubr.f32.mxu0 0.0
        %877 = vmatmul.mubr.f32.gmra.mxu0 %v779
        %v878 = vpop.f32.mrf.mxu0
        %v879 = vadd.f32 0.0, %v878
        %v880 = vpop.f32.mrf.mxu0
        %881 = vmatprep.mubr.f32.mxu0 0.0
        %882 = vmatmul.mubr.f32.gmra.mxu0 %v782
        %v883 = vpop.f32.mrf.mxu0
        %v884 = vadd.f32 0.0, %v883
        %v885 = vpop.f32.mrf.mxu0
        %886 = vmatprep.mubr.f32.mxu0 0.0
        %887 = vmatmul.mubr.f32.gmra.mxu0 %v785
        %v888 = vpop.f32.mrf.mxu0
        %v889 = vadd.f32 0.0, %v888
        %v890 = vpop.f32.mrf.mxu0
        %891 = vdwg.mxu0
        %v892 = vmul.f32 %v593, %v593
        %v893 = vmul.f32 %v598, %v598
        %v894 = vmul.f32 %v603, %v603
        %v895 = vmul.f32 %v608, %v608
        %v896 = vmul.f32 %v613, %v613
        %v897 = vmul.f32 %v618, %v618
        %v898 = vmul.f32 %v623, %v623
        %v899 = vmul.f32 %v628, %v628
        %v900 = vmul.f32 %v633, %v633
        %v901 = vmul.f32 %v638, %v638
        %v902 = vmul.f32 %v643, %v643
        %v903 = vmul.f32 %v648, %v648
        %v904 = vmul.f32 %v653, %v653
        %v905 = vmul.f32 %v658, %v658
        %v906 = vmul.f32 %v663, %v663
        %v907 = vmul.f32 %v668, %v668
        %v908 = vmul.f32 %v673, %v673
        %v909 = vmul.f32 %v678, %v678
        %v910 = vmul.f32 %v683, %v683
        %v911 = vmul.f32 %v688, %v688
        %v912 = vmul.f32 %v693, %v693
        %v913 = vmul.f32 %v698, %v698
        %v914 = vmul.f32 %v703, %v703
        %v915 = vmul.f32 %v708, %v708
        %v916 = vmul.f32 %v713, %v713
        %v917 = vmul.f32 %v718, %v718
        %v918 = vmul.f32 %v723, %v723
        %v919 = vmul.f32 %v728, %v728
        %v920 = vmul.f32 %v733, %v733
        %v921 = vmul.f32 %v738, %v738
        %v922 = vmul.f32 %v743, %v743
        %v923 = vmul.f32 %v748, %v748
        %vm924 = vcmask 785408
        %v925 = vsel %vm924, %v892, 0.0
        %v926 = vsel %vm924, %v893, 0.0
        %v927 = vadd.f32 %v925, %v926
        %v928 = vsel %vm924, %v894, 0.0
        %v929 = vadd.f32 %v927, %v928
        %v930 = vsel %vm924, %v895, 0.0
        %v931 = vadd.f32 %v929, %v930
        %v932 = vsel %vm924, %v896, 0.0
        %v933 = vadd.f32 %v931, %v932
        %v934 = vsel %vm924, %v897, 0.0
        %v935 = vadd.f32 %v933, %v934
        %v936 = vsel %vm924, %v898, 0.0
        %v937 = vadd.f32 %v935, %v936
        %v938 = vsel %vm924, %v899, 0.0
        %v939 = vadd.f32 %v937, %v938
        %v940 = vsel %vm924, %v900, 0.0
        %v941 = vadd.f32 %v939, %v940
        %v942 = vsel %vm924, %v901, 0.0
        %v943 = vadd.f32 %v941, %v942
        %v944 = vsel %vm924, %v902, 0.0
        %v945 = vadd.f32 %v943, %v944
        %v946 = vsel %vm924, %v903, 0.0
        %v947 = vadd.f32 %v945, %v946
        %v948 = vsel %vm924, %v904, 0.0
        %v949 = vadd.f32 %v947, %v948
        %v950 = vsel %vm924, %v905, 0.0
        %v951 = vadd.f32 %v949, %v950
        %v952 = vsel %vm924, %v906, 0.0
        %v953 = vadd.f32 %v951, %v952
        %v954 = vsel %vm924, %v907, 0.0
        %v955 = vadd.f32 %v953, %v954
        %v956 = vsel %vm924, %v908, 0.0
        %v957 = vadd.f32 %v955, %v956
        %v958 = vsel %vm924, %v909, 0.0
        %v959 = vadd.f32 %v957, %v958
        %v960 = vsel %vm924, %v910, 0.0
        %v961 = vadd.f32 %v959, %v960
        %v962 = vsel %vm924, %v911, 0.0
        %v963 = vadd.f32 %v961, %v962
        %v964 = vsel %vm924, %v912, 0.0
        %v965 = vadd.f32 %v963, %v964
        %v966 = vsel %vm924, %v913, 0.0
        %v967 = vadd.f32 %v965, %v966
        %v968 = vsel %vm924, %v914, 0.0
        %v969 = vadd.f32 %v967, %v968
        %v970 = vsel %vm924, %v915, 0.0
        %v971 = vadd.f32 %v969, %v970
        %v972 = vsel %vm924, %v916, 0.0
        %v973 = vadd.f32 %v971, %v972
        %v974 = vsel %vm924, %v917, 0.0
        %v975 = vadd.f32 %v973, %v974
        %v976 = vsel %vm924, %v918, 0.0
        %v977 = vadd.f32 %v975, %v976
        %v978 = vsel %vm924, %v919, 0.0
        %v979 = vadd.f32 %v977, %v978
        %v980 = vsel %vm924, %v920, 0.0
        %v981 = vadd.f32 %v979, %v980
        %v982 = vsel %vm924, %v921, 0.0
        %v983 = vadd.f32 %v981, %v982
        %v984 = vsel %vm924, %v922, 0.0
        %v985 = vadd.f32 %v983, %v984
        %v986 = vsel %vm924, %v923, 0.0
        %v987 = vadd.f32 %v985, %v986
        %v988 = vrot.slane %v987, 4
        %v989 = vadd.f32 %v987, %v988
        %v990 = vrot.slane %v989, 2
        %v991 = vadd.f32 %v989, %v990
        %v992 = vrot.slane %v991, 1
        %v993 = vadd.f32 %v991, %v992
        %v994 = vrsqrt.pop %v993
        %v995 = vmul.f32 %v993, %v994
        %vm996 = vcmp.eq.f32.partialorder %v993, inf
        %v997 = vsel %vm996, %v993, %v995
        %vm998 = vcmp.eq.f32.partialorder %v993, 0.0
        %v999 = vand.u32 %v993, 2147483648
        %v1000 = vsel %vm998, %v999, %v997
        %v1001 = vmax.f32 %v1000, 1e-12
        %v1002 = vrcp.pop %v1001
        %v1003 = vmul.f32 1.0, %v1002
        %v1004 = vmul.f32 %v854, %v854
        %v1005 = vmul.f32 %v859, %v859
        %v1006 = vmul.f32 %v864, %v864
        %v1007 = vmul.f32 %v869, %v869
        %v1008 = vmul.f32 %v874, %v874
        %v1009 = vmul.f32 %v879, %v879
        %v1010 = vmul.f32 %v884, %v884
        %v1011 = vmul.f32 %v889, %v889
        %vm1012 = vcmask 523264
        %v1013 = vsel %vm1012, %v1004, 0.0
        %v1014 = vsel %vm1012, %v1005, 0.0
        %v1015 = vadd.f32 %v1013, %v1014
        %v1016 = vsel %vm1012, %v1006, 0.0
        %v1017 = vadd.f32 %v1015, %v1016
        %v1018 = vsel %vm1012, %v1007, 0.0
        %v1019 = vadd.f32 %v1017, %v1018
        %v1020 = vsel %vm1012, %v1008, 0.0
        %v1021 = vadd.f32 %v1019, %v1020
        %v1022 = vsel %vm1012, %v1009, 0.0
        %v1023 = vadd.f32 %v1021, %v1022
        %v1024 = vsel %vm1012, %v1010, 0.0
        %v1025 = vadd.f32 %v1023, %v1024
        %v1026 = vsel %vm1012, %v1011, 0.0
        %v1027 = vadd.f32 %v1025, %v1026
        %v1028 = vrot.slane %v1027, 4
        %v1029 = vadd.f32 %v1027, %v1028
        %v1030 = vrot.slane %v1029, 2
        %v1031 = vadd.f32 %v1029, %v1030
        %v1032 = vrot.slane %v1031, 1
        %v1033 = vadd.f32 %v1031, %v1032
        %v1034 = vrsqrt.pop %v1033
        %v1035 = vmul.f32 %v1033, %v1034
        %vm1036 = vcmp.eq.f32.partialorder %v1033, inf
        %v1037 = vsel %vm1036, %v1033, %v1035
        %vm1038 = vcmp.eq.f32.partialorder %v1033, 0.0
        %v1039 = vand.u32 %v1033, 2147483648
        %v1040 = vsel %vm1038, %v1039, %v1037
        %v1041 = vmax.f32 %v1040, 1e-12
        %v1042 = vrcp.pop %v1041
        %v1043 = vmul.f32 1.0, %v1042
        %v1044 = vmul.f32 %v593, %v1003
        %v1045 = vmul.f32 %v598, %v1003
        %v1046 = vmul.f32 %v603, %v1003
        %v1047 = vmul.f32 %v608, %v1003
        %v1048 = vmul.f32 %v613, %v1003
        %v1049 = vmul.f32 %v618, %v1003
        %v1050 = vmul.f32 %v623, %v1003
        %v1051 = vmul.f32 %v628, %v1003
        %v1052 = vmul.f32 %v633, %v1003
        %v1053 = vmul.f32 %v638, %v1003
        %v1054 = vmul.f32 %v643, %v1003
        %v1055 = vmul.f32 %v648, %v1003
        %v1056 = vmul.f32 %v653, %v1003
        %v1057 = vmul.f32 %v658, %v1003
        %v1058 = vmul.f32 %v663, %v1003
        %v1059 = vmul.f32 %v668, %v1003
        %v1060 = vmul.f32 %v673, %v1003
        %v1061 = vmul.f32 %v678, %v1003
        %v1062 = vmul.f32 %v683, %v1003
        %v1063 = vmul.f32 %v688, %v1003
        %v1064 = vmul.f32 %v693, %v1003
        %v1065 = vmul.f32 %v698, %v1003
        %v1066 = vmul.f32 %v703, %v1003
        %v1067 = vmul.f32 %v708, %v1003
        %v1068 = vmul.f32 %v713, %v1003
        %v1069 = vmul.f32 %v718, %v1003
        %v1070 = vmul.f32 %v723, %v1003
        %v1071 = vmul.f32 %v728, %v1003
        %v1072 = vmul.f32 %v733, %v1003
        %v1073 = vmul.f32 %v738, %v1003
        %v1074 = vmul.f32 %v743, %v1003
        %v1075 = vmul.f32 %v748, %v1003
        %v1076 = vmul.f32 %v854, %v1043
        %v1077 = vmul.f32 %v859, %v1043
        %v1078 = vmul.f32 %v864, %v1043
        %v1079 = vmul.f32 %v869, %v1043
        %v1080 = vmul.f32 %v874, %v1043
        %v1081 = vmul.f32 %v879, %v1043
        %v1082 = vmul.f32 %v884, %v1043
        %v1083 = vmul.f32 %v889, %v1043
        %1116 = vrot.lane.b32.xlu0 %v1044, 96
        %v1117 = vpop.permute.xlu0 %1116
        %1118 = vrot.lane.b32.xlu0 %v1045, 96
        %v1119 = vpop.permute.xlu0 %1118
        %1120 = vrot.lane.b32.xlu0 %v1046, 96
        %v1121 = vpop.permute.xlu0 %1120
        %1122 = vrot.lane.b32.xlu0 %v1047, 96
        %v1123 = vpop.permute.xlu0 %1122
        %1124 = vrot.lane.b32.xlu0 %v1048, 96
        %v1125 = vpop.permute.xlu0 %1124
        %1126 = vrot.lane.b32.xlu0 %v1049, 96
        %v1127 = vpop.permute.xlu0 %1126
        %1128 = vrot.lane.b32.xlu0 %v1050, 96
        %v1129 = vpop.permute.xlu0 %1128
        %1130 = vrot.lane.b32.xlu0 %v1051, 96
        %v1131 = vpop.permute.xlu0 %1130
        %1132 = vrot.lane.b32.xlu0 %v1052, 96
        %v1133 = vpop.permute.xlu0 %1132
        %1134 = vrot.lane.b32.xlu0 %v1053, 96
        %v1135 = vpop.permute.xlu0 %1134
        %1136 = vrot.lane.b32.xlu0 %v1054, 96
        %v1137 = vpop.permute.xlu0 %1136
        %1138 = vrot.lane.b32.xlu0 %v1055, 96
        %v1139 = vpop.permute.xlu0 %1138
        %1140 = vrot.lane.b32.xlu0 %v1056, 96
        %v1141 = vpop.permute.xlu0 %1140
        %1142 = vrot.lane.b32.xlu0 %v1057, 96
        %v1143 = vpop.permute.xlu0 %1142
        %1144 = vrot.lane.b32.xlu0 %v1058, 96
        %v1145 = vpop.permute.xlu0 %1144
        %1146 = vrot.lane.b32.xlu0 %v1059, 96
        %v1147 = vpop.permute.xlu0 %1146
        %1148 = vrot.lane.b32.xlu0 %v1060, 96
        %v1149 = vpop.permute.xlu0 %1148
        %1150 = vrot.lane.b32.xlu0 %v1061, 96
        %v1151 = vpop.permute.xlu0 %1150
        %1152 = vrot.lane.b32.xlu0 %v1062, 96
        %v1153 = vpop.permute.xlu0 %1152
        %1154 = vrot.lane.b32.xlu0 %v1063, 96
        %v1155 = vpop.permute.xlu0 %1154
        %1156 = vrot.lane.b32.xlu0 %v1064, 96
        %v1157 = vpop.permute.xlu0 %1156
        %1158 = vrot.lane.b32.xlu0 %v1065, 96
        %v1159 = vpop.permute.xlu0 %1158
        %1160 = vrot.lane.b32.xlu0 %v1066, 96
        %v1161 = vpop.permute.xlu0 %1160
        %1162 = vrot.lane.b32.xlu0 %v1067, 96
        %v1163 = vpop.permute.xlu0 %1162
        %1164 = vrot.lane.b32.xlu0 %v1068, 96
        %v1165 = vpop.permute.xlu0 %1164
        %1166 = vrot.lane.b32.xlu0 %v1069, 96
        %v1167 = vpop.permute.xlu0 %1166
        %1168 = vrot.lane.b32.xlu0 %v1070, 96
        %v1169 = vpop.permute.xlu0 %1168
        %1170 = vrot.lane.b32.xlu0 %v1071, 96
        %v1171 = vpop.permute.xlu0 %1170
        %1172 = vrot.lane.b32.xlu0 %v1072, 96
        %v1173 = vpop.permute.xlu0 %1172
        %1174 = vrot.lane.b32.xlu0 %v1073, 96
        %v1175 = vpop.permute.xlu0 %1174
        %1176 = vrot.lane.b32.xlu0 %v1074, 96
        %v1177 = vpop.permute.xlu0 %1176
        %1178 = vrot.lane.b32.xlu0 %v1075, 96
        %v1179 = vpop.permute.xlu0 %1178
        %1212 = vxpose.xlu0.b32.start [1/16] %v1117, 128
        %1213 = vxpose.xlu0.b32.cont [2/16] %v1119, 128
        %1214 = vxpose.xlu0.b32.cont [3/16] %v1121, 128
        %1215 = vxpose.xlu0.b32.cont [4/16] %v1123, 128
        %1216 = vxpose.xlu0.b32.cont [5/16] %v1125, 128
        %1217 = vxpose.xlu0.b32.cont [6/16] %v1127, 128
        %1218 = vxpose.xlu0.b32.cont [7/16] %v1129, 128
        %1219 = vxpose.xlu0.b32.cont [8/16] %v1131, 128
        %1220 = vxpose.xlu0.b32.cont [9/16] %v1133, 128
        %1221 = vxpose.xlu0.b32.cont [10/16] %v1135, 128
        %1222 = vxpose.xlu0.b32.cont [11/16] %v1137, 128
        %1223 = vxpose.xlu0.b32.cont [12/16] %v1139, 128
        %1224 = vxpose.xlu0.b32.cont [13/16] %v1141, 128
        %1225 = vxpose.xlu0.b32.cont [14/16] %v1143, 128
        %1226 = vxpose.xlu0.b32.cont [15/16] %v1145, 128
        %1227 = vxpose.xlu0.b32.end [16/16] %v1147, 128
        %v1228 = vpop.trf.xlu0
        %v1229 = vpop.trf.xlu0
        %v1230 = vpop.trf.xlu0
        %v1231 = vpop.trf.xlu0
        %v1232 = vpop.trf.xlu0
        %v1233 = vpop.trf.xlu0
        %v1234 = vpop.trf.xlu0
        %v1235 = vpop.trf.xlu0
        %v1236 = vpop.trf.xlu0
        %v1237 = vpop.trf.xlu0
        %v1238 = vpop.trf.xlu0
        %v1239 = vpop.trf.xlu0
        %v1240 = vpop.trf.xlu0
        %v1241 = vpop.trf.xlu0
        %v1242 = vpop.trf.xlu0
        %v1243 = vpop.trf.xlu0
        %1244 = vxpose.xlu0.b32.start [1/16] %v1149, 128
        %1245 = vxpose.xlu0.b32.cont [2/16] %v1151, 128
        %1246 = vxpose.xlu0.b32.cont [3/16] %v1153, 128
        %1247 = vxpose.xlu0.b32.cont [4/16] %v1155, 128
        %1248 = vxpose.xlu0.b32.cont [5/16] %v1157, 128
        %1249 = vxpose.xlu0.b32.cont [6/16] %v1159, 128
        %1250 = vxpose.xlu0.b32.cont [7/16] %v1161, 128
        %1251 = vxpose.xlu0.b32.cont [8/16] %v1163, 128
        %1252 = vxpose.xlu0.b32.cont [9/16] %v1165, 128
        %1253 = vxpose.xlu0.b32.cont [10/16] %v1167, 128
        %1254 = vxpose.xlu0.b32.cont [11/16] %v1169, 128
        %1255 = vxpose.xlu0.b32.cont [12/16] %v1171, 128
        %1256 = vxpose.xlu0.b32.cont [13/16] %v1173, 128
        %1257 = vxpose.xlu0.b32.cont [14/16] %v1175, 128
        %1258 = vxpose.xlu0.b32.cont [15/16] %v1177, 128
        %1259 = vxpose.xlu0.b32.end [16/16] %v1179, 128
        %v1260 = vpop.trf.xlu0
        %v1261 = vpop.trf.xlu0
        %v1262 = vpop.trf.xlu0
        %v1263 = vpop.trf.xlu0
        %v1264 = vpop.trf.xlu0
        %v1265 = vpop.trf.xlu0
        %v1266 = vpop.trf.xlu0
        %v1267 = vpop.trf.xlu0
        %v1268 = vpop.trf.xlu0
        %v1269 = vpop.trf.xlu0
        %v1270 = vpop.trf.xlu0
        %v1271 = vpop.trf.xlu0
        %v1272 = vpop.trf.xlu0
        %v1273 = vpop.trf.xlu0
        %v1274 = vpop.trf.xlu0
        %v1275 = vpop.trf.xlu0
        %1276 = vmatprep.subr.mxu0 0.0
        %1277 = vmatpush1.msra.mxu0 %v668
        %1278 = vmatprep.subr.mxu0 0.0
        %1279 = vmatpush1.msra.mxu0 %v663
        %1280 = vmatprep.subr.mxu0 0.0
        %1281 = vmatpush1.msra.mxu0 %v658
        %1282 = vmatprep.subr.mxu0 0.0
        %1283 = vmatpush1.msra.mxu0 %v653
        %1284 = vmatprep.subr.mxu0 0.0
        %1285 = vmatpush1.msra.mxu0 %v648
        %1286 = vmatprep.subr.mxu0 0.0
        %1287 = vmatpush1.msra.mxu0 %v643
        %1288 = vmatprep.subr.mxu0 0.0
        %1289 = vmatpush1.msra.mxu0 %v638
        %1290 = vmatprep.subr.mxu0 0.0
        %1291 = vmatpush1.msra.mxu0 %v633
        %1292 = vmatprep.subr.mxu0 0.0
        %1293 = vmatpush1.msra.mxu0 %v628
        %1294 = vmatprep.subr.mxu0 0.0
        %1295 = vmatpush1.msra.mxu0 %v623
        %1296 = vmatprep.subr.mxu0 0.0
        %1297 = vmatpush1.msra.mxu0 %v618
        %1298 = vmatprep.subr.mxu0 0.0
        %1299 = vmatpush1.msra.mxu0 %v613
        %1300 = vmatprep.subr.mxu0 0.0
        %1301 = vmatpush1.msra.mxu0 %v608
        %1302 = vmatprep.subr.mxu0 0.0
        %1303 = vmatpush1.msra.mxu0 %v603
        %1304 = vmatprep.subr.mxu0 0.0
        %1305 = vmatpush1.msra.mxu0 %v598
        %1306 = vmatprep.subr.mxu0 0.0
        %1307 = vmatpush1.msra.mxu0 %v593
        %1308 = vmatprep.subr.mxu0 0.0
        %1309 = vmatpush2.msra.mxu0 %v748
        %1310 = vmatprep.subr.mxu0 0.0
        %1311 = vmatpush2.msra.mxu0 %v743
        %1312 = vmatprep.subr.mxu0 0.0
        %1313 = vmatpush2.msra.mxu0 %v738
        %1314 = vmatprep.subr.mxu0 0.0
        %1315 = vmatpush2.msra.mxu0 %v733
        %1316 = vmatprep.subr.mxu0 0.0
        %1317 = vmatpush2.msra.mxu0 %v728
        %1318 = vmatprep.subr.mxu0 0.0
        %1319 = vmatpush2.msra.mxu0 %v723
        %1320 = vmatprep.subr.mxu0 0.0
        %1321 = vmatpush2.msra.mxu0 %v718
        %1322 = vmatprep.subr.mxu0 0.0
        %1323 = vmatpush2.msra.mxu0 %v713
        %1324 = vmatprep.subr.mxu0 0.0
        %1325 = vmatpush2.msra.mxu0 %v708
        %1326 = vmatprep.subr.mxu0 0.0
        %1327 = vmatpush2.msra.mxu0 %v703
        %1328 = vmatprep.subr.mxu0 0.0
        %1329 = vmatpush2.msra.mxu0 %v698
        %1330 = vmatprep.subr.mxu0 0.0
        %1331 = vmatpush2.msra.mxu0 %v693
        %1332 = vmatprep.subr.mxu0 0.0
        %1333 = vmatpush2.msra.mxu0 %v688
        %1334 = vmatprep.subr.mxu0 0.0
        %1335 = vmatpush2.msra.mxu0 %v683
        %1336 = vmatprep.subr.mxu0 0.0
        %1337 = vmatpush2.msra.mxu0 %v678
        %1338 = vmatprep.subr.mxu0 0.0
        %1339 = vmatpush2.msra.mxu0 %v673
        %1340 = vmatprep.mubr.f32.mxu0 %v1260
        %1341 = vmatmul.mubr.f32.gmra.mxu0 %v1228
        %v1342 = vpop.f32.mrf.mxu0
        %v1343 = vadd.f32 0.0, %v1342
        %v1344 = vpop.f32.mrf.mxu0
        %1345 = vmatprep.mubr.f32.mxu0 %v1261
        %1346 = vmatmul.mubr.f32.gmra.mxu0 %v1229
        %v1347 = vpop.f32.mrf.mxu0
        %v1348 = vadd.f32 0.0, %v1347
        %v1349 = vpop.f32.mrf.mxu0
        %1350 = vmatprep.mubr.f32.mxu0 %v1262
        %1351 = vmatmul.mubr.f32.gmra.mxu0 %v1230
        %v1352 = vpop.f32.mrf.mxu0
        %v1353 = vadd.f32 0.0, %v1352
        %v1354 = vpop.f32.mrf.mxu0
        %1355 = vmatprep.mubr.f32.mxu0 %v1263
        %1356 = vmatmul.mubr.f32.gmra.mxu0 %v1231
        %v1357 = vpop.f32.mrf.mxu0
        %v1358 = vadd.f32 0.0, %v1357
        %v1359 = vpop.f32.mrf.mxu0
        %1360 = vdwg.mxu0
        %1369 = vrot.lane.b32.xlu0 %v1076, 96
        %v1370 = vpop.permute.xlu0 %1369
        %1371 = vrot.lane.b32.xlu0 %v1077, 96
        %v1372 = vpop.permute.xlu0 %1371
        %1373 = vrot.lane.b32.xlu0 %v1078, 96
        %v1374 = vpop.permute.xlu0 %1373
        %1375 = vrot.lane.b32.xlu0 %v1079, 96
        %v1376 = vpop.permute.xlu0 %1375
        %1377 = vrot.lane.b32.xlu0 %v1080, 96
        %v1378 = vpop.permute.xlu0 %1377
        %1379 = vrot.lane.b32.xlu0 %v1081, 96
        %v1380 = vpop.permute.xlu0 %1379
        %1381 = vrot.lane.b32.xlu0 %v1082, 96
        %v1382 = vpop.permute.xlu0 %1381
        %1383 = vrot.lane.b32.xlu0 %v1083, 96
        %v1384 = vpop.permute.xlu0 %1383
        %1393 = vxpose.xlu0.b32.start [1/16] %v1370, 128
        %1394 = vxpose.xlu0.b32.cont [2/16] %v1372, 128
        %1395 = vxpose.xlu0.b32.cont [3/16] %v1374, 128
        %1396 = vxpose.xlu0.b32.cont [4/16] %v1376, 128
        %1397 = vxpose.xlu0.b32.cont [5/16] %v1378, 128
        %1398 = vxpose.xlu0.b32.cont [6/16] %v1380, 128
        %1399 = vxpose.xlu0.b32.cont [7/16] %v1382, 128
        %1400 = vxpose.xlu0.b32.cont [8/16] %v1384, 128
        %1401 = vxpose.xlu0.b32.cont [9/16] 0.0, 128
        %1402 = vxpose.xlu0.b32.cont [10/16] 0.0, 128
        %1403 = vxpose.xlu0.b32.cont [11/16] 0.0, 128
        %1404 = vxpose.xlu0.b32.cont [12/16] 0.0, 128
        %1405 = vxpose.xlu0.b32.cont [13/16] 0.0, 128
        %1406 = vxpose.xlu0.b32.cont [14/16] 0.0, 128
        %1407 = vxpose.xlu0.b32.cont [15/16] 0.0, 128
        %1408 = vxpose.xlu0.b32.end [16/16] 0.0, 128
        %v1409 = vpop.trf.xlu0
        %v1410 = vpop.trf.xlu0
        %v1411 = vpop.trf.xlu0
        %v1412 = vpop.trf.xlu0
        %v1413 = vpop.trf.xlu0
        %v1414 = vpop.trf.xlu0
        %v1415 = vpop.trf.xlu0
        %v1416 = vpop.trf.xlu0
        %v1417 = vpop.trf.xlu0
        %v1418 = vpop.trf.xlu0
        %v1419 = vpop.trf.xlu0
        %v1420 = vpop.trf.xlu0
        %v1421 = vpop.trf.xlu0
        %v1422 = vpop.trf.xlu0
        %v1423 = vpop.trf.xlu0
        %v1424 = vpop.trf.xlu0
        %v1426 = vsel %vm1012, %v1409, 0
        %v1429 = vsel %vm1012, %v1410, 0
        %v1432 = vsel %vm1012, %v1411, 0
        %v1435 = vsel %vm1012, %v1412, 0
        %1437 = vmatprep.subr.mxu0 0.0
        %1438 = vmatpush1.msra.mxu0 0.0
        %1439 = vmatprep.subr.mxu0 0.0
        %1440 = vmatpush1.msra.mxu0 0.0
        %1441 = vmatprep.subr.mxu0 0.0
        %1442 = vmatpush1.msra.mxu0 0.0
        %1443 = vmatprep.subr.mxu0 0.0
        %1444 = vmatpush1.msra.mxu0 0.0
        %1445 = vmatprep.subr.mxu0 0.0
        %1446 = vmatpush1.msra.mxu0 0.0
        %1447 = vmatprep.subr.mxu0 0.0
        %1448 = vmatpush1.msra.mxu0 0.0
        %1449 = vmatprep.subr.mxu0 0.0
        %1450 = vmatpush1.msra.mxu0 0.0
        %1451 = vmatprep.subr.mxu0 0.0
        %1452 = vmatpush1.msra.mxu0 0.0
        %1453 = vmatprep.subr.mxu0 0.0
        %1454 = vmatpush1.msra.mxu0 %v889
        %1455 = vmatprep.subr.mxu0 0.0
        %1456 = vmatpush1.msra.mxu0 %v884
        %1457 = vmatprep.subr.mxu0 0.0
        %1458 = vmatpush1.msra.mxu0 %v879
        %1459 = vmatprep.subr.mxu0 0.0
        %1460 = vmatpush1.msra.mxu0 %v874
        %1461 = vmatprep.subr.mxu0 0.0
        %1462 = vmatpush1.msra.mxu0 %v869
        %1463 = vmatprep.subr.mxu0 0.0
        %1464 = vmatpush1.msra.mxu0 %v864
        %1465 = vmatprep.subr.mxu0 0.0
        %1466 = vmatpush1.msra.mxu0 %v859
        %1467 = vmatprep.subr.mxu0 0.0
        %1468 = vmatpush1.msra.mxu0 %v854
        %1469 = vmatprep.subr.mxu0 0.0
        %1470 = vmatpush2.msra.mxu0 0.0
        %1471 = vmatprep.subr.mxu0 0.0
        %1472 = vmatpush2.msra.mxu0 0.0
        %1473 = vmatprep.subr.mxu0 0.0
        %1474 = vmatpush2.msra.mxu0 0.0
        %1475 = vmatprep.subr.mxu0 0.0
        %1476 = vmatpush2.msra.mxu0 0.0
        %1477 = vmatprep.subr.mxu0 0.0
        %1478 = vmatpush2.msra.mxu0 0.0
        %1479 = vmatprep.subr.mxu0 0.0
        %1480 = vmatpush2.msra.mxu0 0.0
        %1481 = vmatprep.subr.mxu0 0.0
        %1482 = vmatpush2.msra.mxu0 0.0
        %1483 = vmatprep.subr.mxu0 0.0
        %1484 = vmatpush2.msra.mxu0 0.0
        %1485 = vmatprep.subr.mxu0 0.0
        %1486 = vmatpush2.msra.mxu0 0.0
        %1487 = vmatprep.subr.mxu0 0.0
        %1488 = vmatpush2.msra.mxu0 0.0
        %1489 = vmatprep.subr.mxu0 0.0
        %1490 = vmatpush2.msra.mxu0 0.0
        %1491 = vmatprep.subr.mxu0 0.0
        %1492 = vmatpush2.msra.mxu0 0.0
        %1493 = vmatprep.subr.mxu0 0.0
        %1494 = vmatpush2.msra.mxu0 0.0
        %1495 = vmatprep.subr.mxu0 0.0
        %1496 = vmatpush2.msra.mxu0 0.0
        %1497 = vmatprep.subr.mxu0 0.0
        %1498 = vmatpush2.msra.mxu0 0.0
        %1499 = vmatprep.subr.mxu0 0.0
        %1500 = vmatpush2.msra.mxu0 0.0
        %1501 = vmatprep.mubr.f32.mxu0 0.0
        %1502 = vmatmul.mubr.f32.gmra.mxu0 %v1426
        %v1503 = vpop.f32.mrf.mxu0
        %v1504 = vadd.f32 0.0, %v1503
        %v1505 = vpop.f32.mrf.mxu0
        %1506 = vmatprep.mubr.f32.mxu0 0.0
        %1507 = vmatmul.mubr.f32.gmra.mxu0 %v1429
        %v1508 = vpop.f32.mrf.mxu0
        %v1509 = vadd.f32 0.0, %v1508
        %v1510 = vpop.f32.mrf.mxu0
        %1511 = vmatprep.mubr.f32.mxu0 0.0
        %1512 = vmatmul.mubr.f32.gmra.mxu0 %v1432
        %v1513 = vpop.f32.mrf.mxu0
        %v1514 = vadd.f32 0.0, %v1513
        %v1515 = vpop.f32.mrf.mxu0
        %1516 = vmatprep.mubr.f32.mxu0 0.0
        %1517 = vmatmul.mubr.f32.gmra.mxu0 %v1435
        %v1518 = vpop.f32.mrf.mxu0
        %v1519 = vadd.f32 0.0, %v1518
        %v1520 = vpop.f32.mrf.mxu0
        %1521 = vdwg.mxu0
        %v1522 = vld [vmem:[%s6] sm:$0xff]
        %v1523 = vld [vmem:[%s6 + $0x8] sm:$0xff]
        %v1524 = vld [vmem:[%s6 + $0x10] sm:$0xff]
        %v1525 = vld [vmem:[%s6 + $0x18] sm:$0xff]
        %s1526 = sld [smem:[#allocation3]]
        %v1527 = vstv %s1526
        %v1528 = vmul.f32 %v1003, %v1527
        %v1529 = vmul.f32 %v1343, %v1528
        %vm1530 = vcmask 64512
        %v1531 = vsel %vm1530, %v1529, -inf
        %1532 = vmax.xlane.f32.xlu0 %v1531
        %v1533 = vpop.xlane.xlu0 %1532
        %v1534 = vsub.f32 %v1529, %v1533
        %v1535 = vmul.f32 %v1534, 1.442695
        %v1536 = vpow.pop %v1535
        %v1537 = vsel %vm1530, %v1536, 0.0
        %1538 = vadd.xlane.f32.xlu0 %v1537
        %v1539 = vpop.xlane.xlu0 %1538
        %v1540 = vrcp.pop %v1539
        %v1541 = vmul.f32 %v1536, %v1540
        %s1542 = sld [smem:[#allocation5]]
        %v1543 = vstv %s1542
        %v1544 = vmul.f32 %v1043, %v1543
        %v1545 = vmul.f32 %v1504, %v1544
        %v1546 = vsel %vm1530, %v1545, -inf
        %1547 = vmax.xlane.f32.xlu0 %v1546
        %v1548 = vpop.xlane.xlu0 %1547
        %v1549 = vsub.f32 %v1545, %v1548
        %v1550 = vmul.f32 %v1549, 1.442695
        %v1551 = vpow.pop %v1550
        %v1552 = vsel %vm1530, %v1551, 0.0
        %1553 = vadd.xlane.f32.xlu0 %v1552
        %v1554 = vpop.xlane.xlu0 %1553
        %v1555 = vrcp.pop %v1554
        %v1556 = vmul.f32 %v1551, %v1555
        %1557 = vxpose.xlu0.b32.start [1/16] %v1556, 128
        %1558 = vxpose.xlu0.b32.cont [2/16] 0.0, 128
        %1559 = vxpose.xlu0.b32.cont [3/16] 0.0, 128
        %1560 = vxpose.xlu0.b32.cont [4/16] 0.0, 128
        %1561 = vxpose.xlu0.b32.cont [5/16] 0.0, 128
        %1562 = vxpose.xlu0.b32.cont [6/16] 0.0, 128
        %1563 = vxpose.xlu0.b32.cont [7/16] 0.0, 128
        %1564 = vxpose.xlu0.b32.cont [8/16] 0.0, 128
        %1565 = vxpose.xlu0.b32.cont [9/16] 0.0, 128
        %1566 = vxpose.xlu0.b32.cont [10/16] 0.0, 128
        %1567 = vxpose.xlu0.b32.cont [11/16] 0.0, 128
        %1568 = vxpose.xlu0.b32.cont [12/16] 0.0, 128
        %1569 = vxpose.xlu0.b32.cont [13/16] 0.0, 128
        %1570 = vxpose.xlu0.b32.cont [14/16] 0.0, 128
        %1571 = vxpose.xlu0.b32.cont [15/16] 0.0, 128
        %1572 = vxpose.xlu0.b32.end [16/16] 0.0, 128
        %v1573 = vpop.trf.xlu0
        %v1574 = vpop.trf.xlu0
        %v1575 = vpop.trf.xlu0
        %v1576 = vpop.trf.xlu0
        %v1577 = vpop.trf.xlu0
        %v1578 = vpop.trf.xlu0
        %v1579 = vpop.trf.xlu0
        %v1580 = vpop.trf.xlu0
        %v1581 = vpop.trf.xlu0
        %v1582 = vpop.trf.xlu0
        %v1583 = vpop.trf.xlu0
        %v1584 = vpop.trf.xlu0
        %v1585 = vpop.trf.xlu0
        %v1586 = vpop.trf.xlu0
        %v1587 = vpop.trf.xlu0
        %v1588 = vpop.trf.xlu0
        %v1590 = vsel %vm1530, %v1573, 0
        %1592 = vmatprep.subr.mxu0 0.0
        %1593 = vmatpush1.msra.mxu0 0.0
        %1594 = vmatprep.subr.mxu0 0.0
        %1595 = vmatpush1.msra.mxu0 0.0
        %1596 = vmatprep.subr.mxu0 0.0
        %1597 = vmatpush1.msra.mxu0 0.0
        %1598 = vmatprep.subr.mxu0 0.0
        %1599 = vmatpush1.msra.mxu0 0.0
        %1600 = vmatprep.subr.mxu0 0.0
        %1601 = vmatpush1.msra.mxu0 0.0
        %1602 = vmatprep.subr.mxu0 0.0
        %1603 = vmatpush1.msra.mxu0 0.0
        %1604 = vmatprep.subr.mxu0 0.0
        %1605 = vmatpush1.msra.mxu0 0.0
        %1606 = vmatprep.subr.mxu0 0.0
        %1607 = vmatpush1.msra.mxu0 0.0
        %1608 = vmatprep.subr.mxu0 0.0
        %1609 = vmatpush1.msra.mxu0 0.0
        %1610 = vmatprep.subr.mxu0 0.0
        %1611 = vmatpush1.msra.mxu0 0.0
        %1612 = vmatprep.subr.mxu0 0.0
        %1613 = vmatpush1.msra.mxu0 0.0
        %1614 = vmatprep.subr.mxu0 0.0
        %1615 = vmatpush1.msra.mxu0 0.0
        %1616 = vmatprep.subr.mxu0 0.0
        %1617 = vmatpush1.msra.mxu0 0.0
        %1618 = vmatprep.subr.mxu0 0.0
        %1619 = vmatpush1.msra.mxu0 0.0
        %1620 = vmatprep.subr.mxu0 0.0
        %1621 = vmatpush1.msra.mxu0 0.0
        %1622 = vmatprep.subr.mxu0 0.0
        %1623 = vmatpush1.msra.mxu0 %v1522
        %1624 = vmatprep.subr.mxu0 0.0
        %1625 = vmatpush2.msra.mxu0 0.0
        %1626 = vmatprep.subr.mxu0 0.0
        %1627 = vmatpush2.msra.mxu0 0.0
        %1628 = vmatprep.subr.mxu0 0.0
        %1629 = vmatpush2.msra.mxu0 0.0
        %1630 = vmatprep.subr.mxu0 0.0
        %1631 = vmatpush2.msra.mxu0 0.0
        %1632 = vmatprep.subr.mxu0 0.0
        %1633 = vmatpush2.msra.mxu0 0.0
        %1634 = vmatprep.subr.mxu0 0.0
        %1635 = vmatpush2.msra.mxu0 0.0
        %1636 = vmatprep.subr.mxu0 0.0
        %1637 = vmatpush2.msra.mxu0 0.0
        %1638 = vmatprep.subr.mxu0 0.0
        %1639 = vmatpush2.msra.mxu0 0.0
        %1640 = vmatprep.subr.mxu0 0.0
        %1641 = vmatpush2.msra.mxu0 0.0
        %1642 = vmatprep.subr.mxu0 0.0
        %1643 = vmatpush2.msra.mxu0 0.0
        %1644 = vmatprep.subr.mxu0 0.0
        %1645 = vmatpush2.msra.mxu0 0.0
        %1646 = vmatprep.subr.mxu0 0.0
        %1647 = vmatpush2.msra.mxu0 0.0
        %1648 = vmatprep.subr.mxu0 0.0
        %1649 = vmatpush2.msra.mxu0 0.0
        %1650 = vmatprep.subr.mxu0 0.0
        %1651 = vmatpush2.msra.mxu0 0.0
        %1652 = vmatprep.subr.mxu0 0.0
        %1653 = vmatpush2.msra.mxu0 0.0
        %1654 = vmatprep.subr.mxu0 0.0
        %1655 = vmatpush2.msra.mxu0 0.0
        %1656 = vmatprep.mubr.f32.mxu0 0.0
        %1657 = vmatmul.mubr.f32.gmra.mxu0 %v1590
        %v1658 = vpop.f32.mrf.mxu0
        %v1659 = vadd.f32 0.0, %v1658
        %v1660 = vpop.f32.mrf.mxu0
        %1661 = vdwg.mxu0
        %1662 = vxpose.xlu0.b32.start [1/16] %v1541, 128
        %1663 = vxpose.xlu0.b32.cont [2/16] 0.0, 128
        %1664 = vxpose.xlu0.b32.cont [3/16] 0.0, 128
        %1665 = vxpose.xlu0.b32.cont [4/16] 0.0, 128
        %1666 = vxpose.xlu0.b32.cont [5/16] 0.0, 128
        %1667 = vxpose.xlu0.b32.cont [6/16] 0.0, 128
        %1668 = vxpose.xlu0.b32.cont [7/16] 0.0, 128
        %1669 = vxpose.xlu0.b32.cont [8/16] 0.0, 128
        %1670 = vxpose.xlu0.b32.cont [9/16] 0.0, 128
        %1671 = vxpose.xlu0.b32.cont [10/16] 0.0, 128
        %1672 = vxpose.xlu0.b32.cont [11/16] 0.0, 128
        %1673 = vxpose.xlu0.b32.cont [12/16] 0.0, 128
        %1674 = vxpose.xlu0.b32.cont [13/16] 0.0, 128
        %1675 = vxpose.xlu0.b32.cont [14/16] 0.0, 128
        %1676 = vxpose.xlu0.b32.cont [15/16] 0.0, 128
        %1677 = vxpose.xlu0.b32.end [16/16] 0.0, 128
        %v1678 = vpop.trf.xlu0
        %v1679 = vpop.trf.xlu0
        %v1680 = vpop.trf.xlu0
        %v1681 = vpop.trf.xlu0
        %v1682 = vpop.trf.xlu0
        %v1683 = vpop.trf.xlu0
        %v1684 = vpop.trf.xlu0
        %v1685 = vpop.trf.xlu0
        %v1686 = vpop.trf.xlu0
        %v1687 = vpop.trf.xlu0
        %v1688 = vpop.trf.xlu0
        %v1689 = vpop.trf.xlu0
        %v1690 = vpop.trf.xlu0
        %v1691 = vpop.trf.xlu0
        %v1692 = vpop.trf.xlu0
        %v1693 = vpop.trf.xlu0
        %v1695 = vsel %vm1530, %v1678, 0
        %1697 = vmatprep.subr.mxu0 0.0
        %1698 = vmatpush1.msra.mxu0 0.0
        %1699 = vmatprep.subr.mxu0 0.0
        %1700 = vmatpush1.msra.mxu0 0.0
        %1701 = vmatprep.subr.mxu0 0.0
        %1702 = vmatpush1.msra.mxu0 0.0
        %1703 = vmatprep.subr.mxu0 0.0
        %1704 = vmatpush1.msra.mxu0 0.0
        %1705 = vmatprep.subr.mxu0 0.0
        %1706 = vmatpush1.msra.mxu0 0.0
        %1707 = vmatprep.subr.mxu0 0.0
        %1708 = vmatpush1.msra.mxu0 0.0
        %1709 = vmatprep.subr.mxu0 0.0
        %1710 = vmatpush1.msra.mxu0 0.0
        %1711 = vmatprep.subr.mxu0 0.0
        %1712 = vmatpush1.msra.mxu0 0.0
        %1713 = vmatprep.subr.mxu0 0.0
        %1714 = vmatpush1.msra.mxu0 0.0
        %1715 = vmatprep.subr.mxu0 0.0
        %1716 = vmatpush1.msra.mxu0 0.0
        %1717 = vmatprep.subr.mxu0 0.0
        %1718 = vmatpush1.msra.mxu0 0.0
        %1719 = vmatprep.subr.mxu0 0.0
        %1720 = vmatpush1.msra.mxu0 0.0
        %1721 = vmatprep.subr.mxu0 0.0
        %1722 = vmatpush1.msra.mxu0 0.0
        %1723 = vmatprep.subr.mxu0 0.0
        %1724 = vmatpush1.msra.mxu0 0.0
        %1725 = vmatprep.subr.mxu0 0.0
        %1726 = vmatpush1.msra.mxu0 0.0
        %1727 = vmatprep.subr.mxu0 0.0
        %1728 = vmatpush1.msra.mxu0 %v1659
        %1729 = vmatprep.subr.mxu0 0.0
        %1730 = vmatpush2.msra.mxu0 0.0
        %1731 = vmatprep.subr.mxu0 0.0
        %1732 = vmatpush2.msra.mxu0 0.0
        %1733 = vmatprep.subr.mxu0 0.0
        %1734 = vmatpush2.msra.mxu0 0.0
        %1735 = vmatprep.subr.mxu0 0.0
        %1736 = vmatpush2.msra.mxu0 0.0
        %1737 = vmatprep.subr.mxu0 0.0
        %1738 = vmatpush2.msra.mxu0 0.0
        %1739 = vmatprep.subr.mxu0 0.0
        %1740 = vmatpush2.msra.mxu0 0.0
        %1741 = vmatprep.subr.mxu0 0.0
        %1742 = vmatpush2.msra.mxu0 0.0
        %1743 = vmatprep.subr.mxu0 0.0
        %1744 = vmatpush2.msra.mxu0 0.0
        %1745 = vmatprep.subr.mxu0 0.0
        %1746 = vmatpush2.msra.mxu0 0.0
        %1747 = vmatprep.subr.mxu0 0.0
        %1748 = vmatpush2.msra.mxu0 0.0
        %1749 = vmatprep.subr.mxu0 0.0
        %1750 = vmatpush2.msra.mxu0 0.0
        %1751 = vmatprep.subr.mxu0 0.0
        %1752 = vmatpush2.msra.mxu0 0.0
        %1753 = vmatprep.subr.mxu0 0.0
        %1754 = vmatpush2.msra.mxu0 0.0
        %1755 = vmatprep.subr.mxu0 0.0
        %1756 = vmatpush2.msra.mxu0 0.0
        %1757 = vmatprep.subr.mxu0 0.0
        %1758 = vmatpush2.msra.mxu0 0.0
        %1759 = vmatprep.subr.mxu0 0.0
        %1760 = vmatpush2.msra.mxu0 0.0
        %1761 = vmatprep.mubr.f32.mxu0 0.0
        %1762 = vmatmul.mubr.f32.gmra.mxu0 %v1695
        %v1763 = vpop.f32.mrf.mxu0
        %v1764 = vadd.f32 0.0, %v1763
        %v1765 = vpop.f32.mrf.mxu0
        %1766 = vdwg.mxu0
        %1767 = vst.msk [vmem:[#allocation2] sm:$0xff] %vm429, %v1764
        %s1768 = sld [smem:[#allocation3 + $0x1]]
        %v1769 = vstv %s1768
        %v1770 = vmul.f32 %v1003, %v1769
        %v1771 = vmul.f32 %v1348, %v1770
        %vm1772 = vcmask 130112
        %v1773 = vsel %vm1772, %v1771, -inf
        %1774 = vmax.xlane.f32.xlu0 %v1773
        %v1775 = vpop.xlane.xlu0 %1774
        %v1776 = vsub.f32 %v1771, %v1775
        %v1777 = vmul.f32 %v1776, 1.442695
        %v1778 = vpow.pop %v1777
        %1780 = vrot.lane.b32.xlu0 %v1778, 120
        %v1781 = vpop.permute.xlu0 %1780
        %v1783 = vsel %vm1530, %v1781, 0.0
        %1784 = vadd.xlane.f32.xlu0 %v1783
        %v1785 = vpop.xlane.xlu0 %1784
        %v1786 = vrcp.pop %v1785
        %v1787 = vmul.f32 %v1778, %v1786
        %s1788 = sld [smem:[#allocation5 + $0x1]]
        %v1789 = vstv %s1788
        %v1790 = vmul.f32 %v1043, %v1789
        %v1791 = vmul.f32 %v1509, %v1790
        %v1792 = vsel %vm1772, %v1791, -inf
        %1793 = vmax.xlane.f32.xlu0 %v1792
        %v1794 = vpop.xlane.xlu0 %1793
        %v1795 = vsub.f32 %v1791, %v1794
        %v1796 = vmul.f32 %v1795, 1.442695
        %v1797 = vpow.pop %v1796
        %1799 = vrot.lane.b32.xlu0 %v1797, 120
        %v1800 = vpop.permute.xlu0 %1799
        %v1802 = vsel %vm1530, %v1800, 0.0
        %1803 = vadd.xlane.f32.xlu0 %v1802
        %v1804 = vpop.xlane.xlu0 %1803
        %v1805 = vrcp.pop %v1804
        %v1806 = vmul.f32 %v1797, %v1805
        %1808 = vrot.lane.b32.xlu0 %v1806, 120
        %v1809 = vpop.permute.xlu0 %1808
        %1811 = vxpose.xlu0.b32.start [1/16] %v1809, 128
        %1812 = vxpose.xlu0.b32.cont [2/16] 0.0, 128
        %1813 = vxpose.xlu0.b32.cont [3/16] 0.0, 128
        %1814 = vxpose.xlu0.b32.cont [4/16] 0.0, 128
        %1815 = vxpose.xlu0.b32.cont [5/16] 0.0, 128
        %1816 = vxpose.xlu0.b32.cont [6/16] 0.0, 128
        %1817 = vxpose.xlu0.b32.cont [7/16] 0.0, 128
        %1818 = vxpose.xlu0.b32.cont [8/16] 0.0, 128
        %1819 = vxpose.xlu0.b32.cont [9/16] 0.0, 128
        %1820 = vxpose.xlu0.b32.cont [10/16] 0.0, 128
        %1821 = vxpose.xlu0.b32.cont [11/16] 0.0, 128
        %1822 = vxpose.xlu0.b32.cont [12/16] 0.0, 128
        %1823 = vxpose.xlu0.b32.cont [13/16] 0.0, 128
        %1824 = vxpose.xlu0.b32.cont [14/16] 0.0, 128
        %1825 = vxpose.xlu0.b32.cont [15/16] 0.0, 128
        %1826 = vxpose.xlu0.b32.end [16/16] 0.0, 128
        %v1827 = vpop.trf.xlu0
        %v1828 = vpop.trf.xlu0
        %v1829 = vpop.trf.xlu0
        %v1830 = vpop.trf.xlu0
        %v1831 = vpop.trf.xlu0
        %v1832 = vpop.trf.xlu0
        %v1833 = vpop.trf.xlu0
        %v1834 = vpop.trf.xlu0
        %v1835 = vpop.trf.xlu0
        %v1836 = vpop.trf.xlu0
        %v1837 = vpop.trf.xlu0
        %v1838 = vpop.trf.xlu0
        %v1839 = vpop.trf.xlu0
        %v1840 = vpop.trf.xlu0
        %v1841 = vpop.trf.xlu0
        %v1842 = vpop.trf.xlu0
        %v1844 = vsel %vm1530, %v1827, 0
        %1846 = vmatprep.subr.mxu0 0.0
        %1847 = vmatpush1.msra.mxu0 0.0
        %1848 = vmatprep.subr.mxu0 0.0
        %1849 = vmatpush1.msra.mxu0 0.0
        %1850 = vmatprep.subr.mxu0 0.0
        %1851 = vmatpush1.msra.mxu0 0.0
        %1852 = vmatprep.subr.mxu0 0.0
        %1853 = vmatpush1.msra.mxu0 0.0
        %1854 = vmatprep.subr.mxu0 0.0
        %1855 = vmatpush1.msra.mxu0 0.0
        %1856 = vmatprep.subr.mxu0 0.0
        %1857 = vmatpush1.msra.mxu0 0.0
        %1858 = vmatprep.subr.mxu0 0.0
        %1859 = vmatpush1.msra.mxu0 0.0
        %1860 = vmatprep.subr.mxu0 0.0
        %1861 = vmatpush1.msra.mxu0 0.0
        %1862 = vmatprep.subr.mxu0 0.0
        %1863 = vmatpush1.msra.mxu0 0.0
        %1864 = vmatprep.subr.mxu0 0.0
        %1865 = vmatpush1.msra.mxu0 0.0
        %1866 = vmatprep.subr.mxu0 0.0
        %1867 = vmatpush1.msra.mxu0 0.0
        %1868 = vmatprep.subr.mxu0 0.0
        %1869 = vmatpush1.msra.mxu0 0.0
        %1870 = vmatprep.subr.mxu0 0.0
        %1871 = vmatpush1.msra.mxu0 0.0
        %1872 = vmatprep.subr.mxu0 0.0
        %1873 = vmatpush1.msra.mxu0 0.0
        %1874 = vmatprep.subr.mxu0 0.0
        %1875 = vmatpush1.msra.mxu0 0.0
        %1876 = vmatprep.subr.mxu0 0.0
        %1877 = vmatpush1.msra.mxu0 %v1523
        %1878 = vmatprep.subr.mxu0 0.0
        %1879 = vmatpush2.msra.mxu0 0.0
        %1880 = vmatprep.subr.mxu0 0.0
        %1881 = vmatpush2.msra.mxu0 0.0
        %1882 = vmatprep.subr.mxu0 0.0
        %1883 = vmatpush2.msra.mxu0 0.0
        %1884 = vmatprep.subr.mxu0 0.0
        %1885 = vmatpush2.msra.mxu0 0.0
        %1886 = vmatprep.subr.mxu0 0.0
        %1887 = vmatpush2.msra.mxu0 0.0
        %1888 = vmatprep.subr.mxu0 0.0
        %1889 = vmatpush2.msra.mxu0 0.0
        %1890 = vmatprep.subr.mxu0 0.0
        %1891 = vmatpush2.msra.mxu0 0.0
        %1892 = vmatprep.subr.mxu0 0.0
        %1893 = vmatpush2.msra.mxu0 0.0
        %1894 = vmatprep.subr.mxu0 0.0
        %1895 = vmatpush2.msra.mxu0 0.0
        %1896 = vmatprep.subr.mxu0 0.0
        %1897 = vmatpush2.msra.mxu0 0.0
        %1898 = vmatprep.subr.mxu0 0.0
        %1899 = vmatpush2.msra.mxu0 0.0
        %1900 = vmatprep.subr.mxu0 0.0
        %1901 = vmatpush2.msra.mxu0 0.0
        %1902 = vmatprep.subr.mxu0 0.0
        %1903 = vmatpush2.msra.mxu0 0.0
        %1904 = vmatprep.subr.mxu0 0.0
        %1905 = vmatpush2.msra.mxu0 0.0
        %1906 = vmatprep.subr.mxu0 0.0
        %1907 = vmatpush2.msra.mxu0 0.0
        %1908 = vmatprep.subr.mxu0 0.0
        %1909 = vmatpush2.msra.mxu0 0.0
        %1910 = vmatprep.mubr.f32.mxu0 0.0
        %1911 = vmatmul.mubr.f32.gmra.mxu0 %v1844
        %v1912 = vpop.f32.mrf.mxu0
        %v1913 = vadd.f32 0.0, %v1912
        %v1914 = vpop.f32.mrf.mxu0
        %1915 = vdwg.mxu0
        %1917 = vrot.lane.b32.xlu0 %v1787, 120
        %v1918 = vpop.permute.xlu0 %1917
        %1920 = vxpose.xlu0.b32.start [1/16] %v1918, 128
        %1921 = vxpose.xlu0.b32.cont [2/16] 0.0, 128
        %1922 = vxpose.xlu0.b32.cont [3/16] 0.0, 128
        %1923 = vxpose.xlu0.b32.cont [4/16] 0.0, 128
        %1924 = vxpose.xlu0.b32.cont [5/16] 0.0, 128
        %1925 = vxpose.xlu0.b32.cont [6/16] 0.0, 128
        %1926 = vxpose.xlu0.b32.cont [7/16] 0.0, 128
        %1927 = vxpose.xlu0.b32.cont [8/16] 0.0, 128
        %1928 = vxpose.xlu0.b32.cont [9/16] 0.0, 128
        %1929 = vxpose.xlu0.b32.cont [10/16] 0.0, 128
        %1930 = vxpose.xlu0.b32.cont [11/16] 0.0, 128
        %1931 = vxpose.xlu0.b32.cont [12/16] 0.0, 128
        %1932 = vxpose.xlu0.b32.cont [13/16] 0.0, 128
        %1933 = vxpose.xlu0.b32.cont [14/16] 0.0, 128
        %1934 = vxpose.xlu0.b32.cont [15/16] 0.0, 128
        %1935 = vxpose.xlu0.b32.end [16/16] 0.0, 128
        %v1936 = vpop.trf.xlu0
        %v1937 = vpop.trf.xlu0
        %v1938 = vpop.trf.xlu0
        %v1939 = vpop.trf.xlu0
        %v1940 = vpop.trf.xlu0
        %v1941 = vpop.trf.xlu0
        %v1942 = vpop.trf.xlu0
        %v1943 = vpop.trf.xlu0
        %v1944 = vpop.trf.xlu0
        %v1945 = vpop.trf.xlu0
        %v1946 = vpop.trf.xlu0
        %v1947 = vpop.trf.xlu0
        %v1948 = vpop.trf.xlu0
        %v1949 = vpop.trf.xlu0
        %v1950 = vpop.trf.xlu0
        %v1951 = vpop.trf.xlu0
        %v1953 = vsel %vm1530, %v1936, 0
        %1955 = vmatprep.subr.mxu0 0.0
        %1956 = vmatpush1.msra.mxu0 0.0
        %1957 = vmatprep.subr.mxu0 0.0
        %1958 = vmatpush1.msra.mxu0 0.0
        %1959 = vmatprep.subr.mxu0 0.0
        %1960 = vmatpush1.msra.mxu0 0.0
        %1961 = vmatprep.subr.mxu0 0.0
        %1962 = vmatpush1.msra.mxu0 0.0
        %1963 = vmatprep.subr.mxu0 0.0
        %1964 = vmatpush1.msra.mxu0 0.0
        %1965 = vmatprep.subr.mxu0 0.0
        %1966 = vmatpush1.msra.mxu0 0.0
        %1967 = vmatprep.subr.mxu0 0.0
        %1968 = vmatpush1.msra.mxu0 0.0
        %1969 = vmatprep.subr.mxu0 0.0
        %1970 = vmatpush1.msra.mxu0 0.0
        %1971 = vmatprep.subr.mxu0 0.0
        %1972 = vmatpush1.msra.mxu0 0.0
        %1973 = vmatprep.subr.mxu0 0.0
        %1974 = vmatpush1.msra.mxu0 0.0
        %1975 = vmatprep.subr.mxu0 0.0
        %1976 = vmatpush1.msra.mxu0 0.0
        %1977 = vmatprep.subr.mxu0 0.0
        %1978 = vmatpush1.msra.mxu0 0.0
        %1979 = vmatprep.subr.mxu0 0.0
        %1980 = vmatpush1.msra.mxu0 0.0
        %1981 = vmatprep.subr.mxu0 0.0
        %1982 = vmatpush1.msra.mxu0 0.0
        %1983 = vmatprep.subr.mxu0 0.0
        %1984 = vmatpush1.msra.mxu0 0.0
        %1985 = vmatprep.subr.mxu0 0.0
        %1986 = vmatpush1.msra.mxu0 %v1913
        %1987 = vmatprep.subr.mxu0 0.0
        %1988 = vmatpush2.msra.mxu0 0.0
        %1989 = vmatprep.subr.mxu0 0.0
        %1990 = vmatpush2.msra.mxu0 0.0
        %1991 = vmatprep.subr.mxu0 0.0
        %1992 = vmatpush2.msra.mxu0 0.0
        %1993 = vmatprep.subr.mxu0 0.0
        %1994 = vmatpush2.msra.mxu0 0.0
        %1995 = vmatprep.subr.mxu0 0.0
        %1996 = vmatpush2.msra.mxu0 0.0
        %1997 = vmatprep.subr.mxu0 0.0
        %1998 = vmatpush2.msra.mxu0 0.0
        %1999 = vmatprep.subr.mxu0 0.0
        %2000 = vmatpush2.msra.mxu0 0.0
        %2001 = vmatprep.subr.mxu0 0.0
        %2002 = vmatpush2.msra.mxu0 0.0
        %2003 = vmatprep.subr.mxu0 0.0
        %2004 = vmatpush2.msra.mxu0 0.0
        %2005 = vmatprep.subr.mxu0 0.0
        %2006 = vmatpush2.msra.mxu0 0.0
        %2007 = vmatprep.subr.mxu0 0.0
        %2008 = vmatpush2.msra.mxu0 0.0
        %2009 = vmatprep.subr.mxu0 0.0
        %2010 = vmatpush2.msra.mxu0 0.0
        %2011 = vmatprep.subr.mxu0 0.0
        %2012 = vmatpush2.msra.mxu0 0.0
        %2013 = vmatprep.subr.mxu0 0.0
        %2014 = vmatpush2.msra.mxu0 0.0
        %2015 = vmatprep.subr.mxu0 0.0
        %2016 = vmatpush2.msra.mxu0 0.0
        %2017 = vmatprep.subr.mxu0 0.0
        %2018 = vmatpush2.msra.mxu0 0.0
        %2019 = vmatprep.mubr.f32.mxu0 0.0
        %2020 = vmatmul.mubr.f32.gmra.mxu0 %v1953
        %v2021 = vpop.f32.mrf.mxu0
        %v2022 = vadd.f32 0.0, %v2021
        %v2023 = vpop.f32.mrf.mxu0
        %2024 = vdwg.mxu0
        %2025 = vst.msk [vmem:[#allocation2 + $0x8] sm:$0xff] %vm429, %v2022
        %s2026 = sld [smem:[#allocation3 + $0x2]]
        %v2027 = vstv %s2026
        %v2028 = vmul.f32 %v1003, %v2027
        %v2029 = vmul.f32 %v1353, %v2028
        %vm2030 = vcmask 195712
        %v2031 = vsel %vm2030, %v2029, -inf
        %2032 = vmax.xlane.f32.xlu0 %v2031
        %v2033 = vpop.xlane.xlu0 %2032
        %v2034 = vsub.f32 %v2029, %v2033
        %v2035 = vmul.f32 %v2034, 1.442695
        %v2036 = vpow.pop %v2035
        %2038 = vrot.lane.b32.xlu0 %v2036, 112
        %v2039 = vpop.permute.xlu0 %2038
        %v2041 = vsel %vm1530, %v2039, 0.0
        %2042 = vadd.xlane.f32.xlu0 %v2041
        %v2043 = vpop.xlane.xlu0 %2042
        %v2044 = vrcp.pop %v2043
        %v2045 = vmul.f32 %v2036, %v2044
        %s2046 = sld [smem:[#allocation5 + $0x2]]
        %v2047 = vstv %s2046
        %v2048 = vmul.f32 %v1043, %v2047
        %v2049 = vmul.f32 %v1514, %v2048
        %v2050 = vsel %vm2030, %v2049, -inf
        %2051 = vmax.xlane.f32.xlu0 %v2050
        %v2052 = vpop.xlane.xlu0 %2051
        %v2053 = vsub.f32 %v2049, %v2052
        %v2054 = vmul.f32 %v2053, 1.442695
        %v2055 = vpow.pop %v2054
        %2057 = vrot.lane.b32.xlu0 %v2055, 112
        %v2058 = vpop.permute.xlu0 %2057
        %v2060 = vsel %vm1530, %v2058, 0.0
        %2061 = vadd.xlane.f32.xlu0 %v2060
        %v2062 = vpop.xlane.xlu0 %2061
        %v2063 = vrcp.pop %v2062
        %v2064 = vmul.f32 %v2055, %v2063
        %2066 = vrot.lane.b32.xlu0 %v2064, 112
        %v2067 = vpop.permute.xlu0 %2066
        %2069 = vxpose.xlu0.b32.start [1/16] %v2067, 128
        %2070 = vxpose.xlu0.b32.cont [2/16] 0.0, 128
        %2071 = vxpose.xlu0.b32.cont [3/16] 0.0, 128
        %2072 = vxpose.xlu0.b32.cont [4/16] 0.0, 128
        %2073 = vxpose.xlu0.b32.cont [5/16] 0.0, 128
        %2074 = vxpose.xlu0.b32.cont [6/16] 0.0, 128
        %2075 = vxpose.xlu0.b32.cont [7/16] 0.0, 128
        %2076 = vxpose.xlu0.b32.cont [8/16] 0.0, 128
        %2077 = vxpose.xlu0.b32.cont [9/16] 0.0, 128
        %2078 = vxpose.xlu0.b32.cont [10/16] 0.0, 128
        %2079 = vxpose.xlu0.b32.cont [11/16] 0.0, 128
        %2080 = vxpose.xlu0.b32.cont [12/16] 0.0, 128
        %2081 = vxpose.xlu0.b32.cont [13/16] 0.0, 128
        %2082 = vxpose.xlu0.b32.cont [14/16] 0.0, 128
        %2083 = vxpose.xlu0.b32.cont [15/16] 0.0, 128
        %2084 = vxpose.xlu0.b32.end [16/16] 0.0, 128
        %v2085 = vpop.trf.xlu0
        %v2086 = vpop.trf.xlu0
        %v2087 = vpop.trf.xlu0
        %v2088 = vpop.trf.xlu0
        %v2089 = vpop.trf.xlu0
        %v2090 = vpop.trf.xlu0
        %v2091 = vpop.trf.xlu0
        %v2092 = vpop.trf.xlu0
        %v2093 = vpop.trf.xlu0
        %v2094 = vpop.trf.xlu0
        %v2095 = vpop.trf.xlu0
        %v2096 = vpop.trf.xlu0
        %v2097 = vpop.trf.xlu0
        %v2098 = vpop.trf.xlu0
        %v2099 = vpop.trf.xlu0
        %v2100 = vpop.trf.xlu0
        %v2102 = vsel %vm1530, %v2085, 0
        %2104 = vmatprep.subr.mxu0 0.0
        %2105 = vmatpush1.msra.mxu0 0.0
        %2106 = vmatprep.subr.mxu0 0.0
        %2107 = vmatpush1.msra.mxu0 0.0
        %2108 = vmatprep.subr.mxu0 0.0
        %2109 = vmatpush1.msra.mxu0 0.0
        %2110 = vmatprep.subr.mxu0 0.0
        %2111 = vmatpush1.msra.mxu0 0.0
        %2112 = vmatprep.subr.mxu0 0.0
        %2113 = vmatpush1.msra.mxu0 0.0
        %2114 = vmatprep.subr.mxu0 0.0
        %2115 = vmatpush1.msra.mxu0 0.0
        %2116 = vmatprep.subr.mxu0 0.0
        %2117 = vmatpush1.msra.mxu0 0.0
        %2118 = vmatprep.subr.mxu0 0.0
        %2119 = vmatpush1.msra.mxu0 0.0
        %2120 = vmatprep.subr.mxu0 0.0
        %2121 = vmatpush1.msra.mxu0 0.0
        %2122 = vmatprep.subr.mxu0 0.0
        %2123 = vmatpush1.msra.mxu0 0.0
        %2124 = vmatprep.subr.mxu0 0.0
        %2125 = vmatpush1.msra.mxu0 0.0
        %2126 = vmatprep.subr.mxu0 0.0
        %2127 = vmatpush1.msra.mxu0 0.0
        %2128 = vmatprep.subr.mxu0 0.0
        %2129 = vmatpush1.msra.mxu0 0.0
        %2130 = vmatprep.subr.mxu0 0.0
        %2131 = vmatpush1.msra.mxu0 0.0
        %2132 = vmatprep.subr.mxu0 0.0
        %2133 = vmatpush1.msra.mxu0 0.0
        %2134 = vmatprep.subr.mxu0 0.0
        %2135 = vmatpush1.msra.mxu0 %v1524
        %2136 = vmatprep.subr.mxu0 0.0
        %2137 = vmatpush2.msra.mxu0 0.0
        %2138 = vmatprep.subr.mxu0 0.0
        %2139 = vmatpush2.msra.mxu0 0.0
        %2140 = vmatprep.subr.mxu0 0.0
        %2141 = vmatpush2.msra.mxu0 0.0
        %2142 = vmatprep.subr.mxu0 0.0
        %2143 = vmatpush2.msra.mxu0 0.0
        %2144 = vmatprep.subr.mxu0 0.0
        %2145 = vmatpush2.msra.mxu0 0.0
        %2146 = vmatprep.subr.mxu0 0.0
        %2147 = vmatpush2.msra.mxu0 0.0
        %2148 = vmatprep.subr.mxu0 0.0
        %2149 = vmatpush2.msra.mxu0 0.0
        %2150 = vmatprep.subr.mxu0 0.0
        %2151 = vmatpush2.msra.mxu0 0.0
        %2152 = vmatprep.subr.mxu0 0.0
        %2153 = vmatpush2.msra.mxu0 0.0
        %2154 = vmatprep.subr.mxu0 0.0
        %2155 = vmatpush2.msra.mxu0 0.0
        %2156 = vmatprep.subr.mxu0 0.0
        %2157 = vmatpush2.msra.mxu0 0.0
        %2158 = vmatprep.subr.mxu0 0.0
        %2159 = vmatpush2.msra.mxu0 0.0
        %2160 = vmatprep.subr.mxu0 0.0
        %2161 = vmatpush2.msra.mxu0 0.0
        %2162 = vmatprep.subr.mxu0 0.0
        %2163 = vmatpush2.msra.mxu0 0.0
        %2164 = vmatprep.subr.mxu0 0.0
        %2165 = vmatpush2.msra.mxu0 0.0
        %2166 = vmatprep.subr.mxu0 0.0
        %2167 = vmatpush2.msra.mxu0 0.0
        %2168 = vmatprep.mubr.f32.mxu0 0.0
        %2169 = vmatmul.mubr.f32.gmra.mxu0 %v2102
        %v2170 = vpop.f32.mrf.mxu0
        %v2171 = vadd.f32 0.0, %v2170
        %v2172 = vpop.f32.mrf.mxu0
        %2173 = vdwg.mxu0
        %2175 = vrot.lane.b32.xlu0 %v2045, 112
        %v2176 = vpop.permute.xlu0 %2175
        %2178 = vxpose.xlu0.b32.start [1/16] %v2176, 128
        %2179 = vxpose.xlu0.b32.cont [2/16] 0.0, 128
        %2180 = vxpose.xlu0.b32.cont [3/16] 0.0, 128
        %2181 = vxpose.xlu0.b32.cont [4/16] 0.0, 128
        %2182 = vxpose.xlu0.b32.cont [5/16] 0.0, 128
        %2183 = vxpose.xlu0.b32.cont [6/16] 0.0, 128
        %2184 = vxpose.xlu0.b32.cont [7/16] 0.0, 128
        %2185 = vxpose.xlu0.b32.cont [8/16] 0.0, 128
        %2186 = vxpose.xlu0.b32.cont [9/16] 0.0, 128
        %2187 = vxpose.xlu0.b32.cont [10/16] 0.0, 128
        %2188 = vxpose.xlu0.b32.cont [11/16] 0.0, 128
        %2189 = vxpose.xlu0.b32.cont [12/16] 0.0, 128
        %2190 = vxpose.xlu0.b32.cont [13/16] 0.0, 128
        %2191 = vxpose.xlu0.b32.cont [14/16] 0.0, 128
        %2192 = vxpose.xlu0.b32.cont [15/16] 0.0, 128
        %2193 = vxpose.xlu0.b32.end [16/16] 0.0, 128
        %v2194 = vpop.trf.xlu0
        %v2195 = vpop.trf.xlu0
        %v2196 = vpop.trf.xlu0
        %v2197 = vpop.trf.xlu0
        %v2198 = vpop.trf.xlu0
        %v2199 = vpop.trf.xlu0
        %v2200 = vpop.trf.xlu0
        %v2201 = vpop.trf.xlu0
        %v2202 = vpop.trf.xlu0
        %v2203 = vpop.trf.xlu0
        %v2204 = vpop.trf.xlu0
        %v2205 = vpop.trf.xlu0
        %v2206 = vpop.trf.xlu0
        %v2207 = vpop.trf.xlu0
        %v2208 = vpop.trf.xlu0
        %v2209 = vpop.trf.xlu0
        %v2211 = vsel %vm1530, %v2194, 0
        %2213 = vmatprep.subr.mxu0 0.0
        %2214 = vmatpush1.msra.mxu0 0.0
        %2215 = vmatprep.subr.mxu0 0.0
        %2216 = vmatpush1.msra.mxu0 0.0
        %2217 = vmatprep.subr.mxu0 0.0
        %2218 = vmatpush1.msra.mxu0 0.0
        %2219 = vmatprep.subr.mxu0 0.0
        %2220 = vmatpush1.msra.mxu0 0.0
        %2221 = vmatprep.subr.mxu0 0.0
        %2222 = vmatpush1.msra.mxu0 0.0
        %2223 = vmatprep.subr.mxu0 0.0
        %2224 = vmatpush1.msra.mxu0 0.0
        %2225 = vmatprep.subr.mxu0 0.0
        %2226 = vmatpush1.msra.mxu0 0.0
        %2227 = vmatprep.subr.mxu0 0.0
        %2228 = vmatpush1.msra.mxu0 0.0
        %2229 = vmatprep.subr.mxu0 0.0
        %2230 = vmatpush1.msra.mxu0 0.0
        %2231 = vmatprep.subr.mxu0 0.0
        %2232 = vmatpush1.msra.mxu0 0.0
        %2233 = vmatprep.subr.mxu0 0.0
        %2234 = vmatpush1.msra.mxu0 0.0
        %2235 = vmatprep.subr.mxu0 0.0
        %2236 = vmatpush1.msra.mxu0 0.0
        %2237 = vmatprep.subr.mxu0 0.0
        %2238 = vmatpush1.msra.mxu0 0.0
        %2239 = vmatprep.subr.mxu0 0.0
        %2240 = vmatpush1.msra.mxu0 0.0
        %2241 = vmatprep.subr.mxu0 0.0
        %2242 = vmatpush1.msra.mxu0 0.0
        %2243 = vmatprep.subr.mxu0 0.0
        %2244 = vmatpush1.msra.mxu0 %v2171
        %2245 = vmatprep.subr.mxu0 0.0
        %2246 = vmatpush2.msra.mxu0 0.0
        %2247 = vmatprep.subr.mxu0 0.0
        %2248 = vmatpush2.msra.mxu0 0.0
        %2249 = vmatprep.subr.mxu0 0.0
        %2250 = vmatpush2.msra.mxu0 0.0
        %2251 = vmatprep.subr.mxu0 0.0
        %2252 = vmatpush2.msra.mxu0 0.0
        %2253 = vmatprep.subr.mxu0 0.0
        %2254 = vmatpush2.msra.mxu0 0.0
        %2255 = vmatprep.subr.mxu0 0.0
        %2256 = vmatpush2.msra.mxu0 0.0
        %2257 = vmatprep.subr.mxu0 0.0
        %2258 = vmatpush2.msra.mxu0 0.0
        %2259 = vmatprep.subr.mxu0 0.0
        %2260 = vmatpush2.msra.mxu0 0.0
        %2261 = vmatprep.subr.mxu0 0.0
        %2262 = vmatpush2.msra.mxu0 0.0
        %2263 = vmatprep.subr.mxu0 0.0
        %2264 = vmatpush2.msra.mxu0 0.0
        %2265 = vmatprep.subr.mxu0 0.0
        %2266 = vmatpush2.msra.mxu0 0.0
        %2267 = vmatprep.subr.mxu0 0.0
        %2268 = vmatpush2.msra.mxu0 0.0
        %2269 = vmatprep.subr.mxu0 0.0
        %2270 = vmatpush2.msra.mxu0 0.0
        %2271 = vmatprep.subr.mxu0 0.0
        %2272 = vmatpush2.msra.mxu0 0.0
        %2273 = vmatprep.subr.mxu0 0.0
        %2274 = vmatpush2.msra.mxu0 0.0
        %2275 = vmatprep.subr.mxu0 0.0
        %2276 = vmatpush2.msra.mxu0 0.0
        %2277 = vmatprep.mubr.f32.mxu0 0.0
        %2278 = vmatmul.mubr.f32.gmra.mxu0 %v2211
        %v2279 = vpop.f32.mrf.mxu0
        %v2280 = vadd.f32 0.0, %v2279
        %v2281 = vpop.f32.mrf.mxu0
        %2282 = vdwg.mxu0
        %2283 = vst.msk [vmem:[#allocation2 + $0x10] sm:$0xff] %vm429, %v2280
        %s2284 = sld [smem:[#allocation3 + $0x3]]
        %v2285 = vstv %s2284
        %v2286 = vmul.f32 %v1003, %v2285
        %v2287 = vmul.f32 %v1358, %v2286
        %vm2288 = vcmask 261312
        %v2289 = vsel %vm2288, %v2287, -inf
        %2290 = vmax.xlane.f32.xlu0 %v2289
        %v2291 = vpop.xlane.xlu0 %2290
        %v2292 = vsub.f32 %v2287, %v2291
        %v2293 = vmul.f32 %v2292, 1.442695
        %v2294 = vpow.pop %v2293
        %2296 = vrot.lane.b32.xlu0 %v2294, 104
        %v2297 = vpop.permute.xlu0 %2296
        %v2299 = vsel %vm1530, %v2297, 0.0
        %2300 = vadd.xlane.f32.xlu0 %v2299
        %v2301 = vpop.xlane.xlu0 %2300
        %v2302 = vrcp.pop %v2301
        %v2303 = vmul.f32 %v2294, %v2302
        %s2304 = sld [smem:[#allocation5 + $0x3]]
        %v2305 = vstv %s2304
        %v2306 = vmul.f32 %v1043, %v2305
        %v2307 = vmul.f32 %v1519, %v2306
        %v2308 = vsel %vm2288, %v2307, -inf
        %2309 = vmax.xlane.f32.xlu0 %v2308
        %v2310 = vpop.xlane.xlu0 %2309
        %v2311 = vsub.f32 %v2307, %v2310
        %v2312 = vmul.f32 %v2311, 1.442695
        %v2313 = vpow.pop %v2312
        %2315 = vrot.lane.b32.xlu0 %v2313, 104
        %v2316 = vpop.permute.xlu0 %2315
        %v2318 = vsel %vm1530, %v2316, 0.0
        %2319 = vadd.xlane.f32.xlu0 %v2318
        %v2320 = vpop.xlane.xlu0 %2319
        %v2321 = vrcp.pop %v2320
        %v2322 = vmul.f32 %v2313, %v2321
        %2324 = vrot.lane.b32.xlu0 %v2322, 104
        %v2325 = vpop.permute.xlu0 %2324
        %2327 = vxpose.xlu0.b32.start [1/16] %v2325, 128
        %2328 = vxpose.xlu0.b32.cont [2/16] 0.0, 128
        %2329 = vxpose.xlu0.b32.cont [3/16] 0.0, 128
        %2330 = vxpose.xlu0.b32.cont [4/16] 0.0, 128
        %2331 = vxpose.xlu0.b32.cont [5/16] 0.0, 128
        %2332 = vxpose.xlu0.b32.cont [6/16] 0.0, 128
        %2333 = vxpose.xlu0.b32.cont [7/16] 0.0, 128
        %2334 = vxpose.xlu0.b32.cont [8/16] 0.0, 128
        %2335 = vxpose.xlu0.b32.cont [9/16] 0.0, 128
        %2336 = vxpose.xlu0.b32.cont [10/16] 0.0, 128
        %2337 = vxpose.xlu0.b32.cont [11/16] 0.0, 128
        %2338 = vxpose.xlu0.b32.cont [12/16] 0.0, 128
        %2339 = vxpose.xlu0.b32.cont [13/16] 0.0, 128
        %2340 = vxpose.xlu0.b32.cont [14/16] 0.0, 128
        %2341 = vxpose.xlu0.b32.cont [15/16] 0.0, 128
        %2342 = vxpose.xlu0.b32.end [16/16] 0.0, 128
        %v2343 = vpop.trf.xlu0
        %v2344 = vpop.trf.xlu0
        %v2345 = vpop.trf.xlu0
        %v2346 = vpop.trf.xlu0
        %v2347 = vpop.trf.xlu0
        %v2348 = vpop.trf.xlu0
        %v2349 = vpop.trf.xlu0
        %v2350 = vpop.trf.xlu0
        %v2351 = vpop.trf.xlu0
        %v2352 = vpop.trf.xlu0
        %v2353 = vpop.trf.xlu0
        %v2354 = vpop.trf.xlu0
        %v2355 = vpop.trf.xlu0
        %v2356 = vpop.trf.xlu0
        %v2357 = vpop.trf.xlu0
        %v2358 = vpop.trf.xlu0
        %v2360 = vsel %vm1530, %v2343, 0
        %2362 = vmatprep.subr.mxu0 0.0
        %2363 = vmatpush1.msra.mxu0 0.0
        %2364 = vmatprep.subr.mxu0 0.0
        %2365 = vmatpush1.msra.mxu0 0.0
        %2366 = vmatprep.subr.mxu0 0.0
        %2367 = vmatpush1.msra.mxu0 0.0
        %2368 = vmatprep.subr.mxu0 0.0
        %2369 = vmatpush1.msra.mxu0 0.0
        %2370 = vmatprep.subr.mxu0 0.0
        %2371 = vmatpush1.msra.mxu0 0.0
        %2372 = vmatprep.subr.mxu0 0.0
        %2373 = vmatpush1.msra.mxu0 0.0
        %2374 = vmatprep.subr.mxu0 0.0
        %2375 = vmatpush1.msra.mxu0 0.0
        %2376 = vmatprep.subr.mxu0 0.0
        %2377 = vmatpush1.msra.mxu0 0.0
        %2378 = vmatprep.subr.mxu0 0.0
        %2379 = vmatpush1.msra.mxu0 0.0
        %2380 = vmatprep.subr.mxu0 0.0
        %2381 = vmatpush1.msra.mxu0 0.0
        %2382 = vmatprep.subr.mxu0 0.0
        %2383 = vmatpush1.msra.mxu0 0.0
        %2384 = vmatprep.subr.mxu0 0.0
        %2385 = vmatpush1.msra.mxu0 0.0
        %2386 = vmatprep.subr.mxu0 0.0
        %2387 = vmatpush1.msra.mxu0 0.0
        %2388 = vmatprep.subr.mxu0 0.0
        %2389 = vmatpush1.msra.mxu0 0.0
        %2390 = vmatprep.subr.mxu0 0.0
        %2391 = vmatpush1.msra.mxu0 0.0
        %2392 = vmatprep.subr.mxu0 0.0
        %2393 = vmatpush1.msra.mxu0 %v1525
        %2394 = vmatprep.subr.mxu0 0.0
        %2395 = vmatpush2.msra.mxu0 0.0
        %2396 = vmatprep.subr.mxu0 0.0
        %2397 = vmatpush2.msra.mxu0 0.0
        %2398 = vmatprep.subr.mxu0 0.0
        %2399 = vmatpush2.msra.mxu0 0.0
        %2400 = vmatprep.subr.mxu0 0.0
        %2401 = vmatpush2.msra.mxu0 0.0
        %2402 = vmatprep.subr.mxu0 0.0
        %2403 = vmatpush2.msra.mxu0 0.0
        %2404 = vmatprep.subr.mxu0 0.0
        %2405 = vmatpush2.msra.mxu0 0.0
        %2406 = vmatprep.subr.mxu0 0.0
        %2407 = vmatpush2.msra.mxu0 0.0
        %2408 = vmatprep.subr.mxu0 0.0
        %2409 = vmatpush2.msra.mxu0 0.0
        %2410 = vmatprep.subr.mxu0 0.0
        %2411 = vmatpush2.msra.mxu0 0.0
        %2412 = vmatprep.subr.mxu0 0.0
        %2413 = vmatpush2.msra.mxu0 0.0
        %2414 = vmatprep.subr.mxu0 0.0
        %2415 = vmatpush2.msra.mxu0 0.0
        %2416 = vmatprep.subr.mxu0 0.0
        %2417 = vmatpush2.msra.mxu0 0.0
        %2418 = vmatprep.subr.mxu0 0.0
        %2419 = vmatpush2.msra.mxu0 0.0
        %2420 = vmatprep.subr.mxu0 0.0
        %2421 = vmatpush2.msra.mxu0 0.0
        %2422 = vmatprep.subr.mxu0 0.0
        %2423 = vmatpush2.msra.mxu0 0.0
        %2424 = vmatprep.subr.mxu0 0.0
        %2425 = vmatpush2.msra.mxu0 0.0
        %2426 = vmatprep.mubr.f32.mxu0 0.0
        %2427 = vmatmul.mubr.f32.gmra.mxu0 %v2360
        %v2428 = vpop.f32.mrf.mxu0
        %v2429 = vadd.f32 0.0, %v2428
        %v2430 = vpop.f32.mrf.mxu0
        %2431 = vdwg.mxu0
        %2433 = vrot.lane.b32.xlu0 %v2303, 104
        %v2434 = vpop.permute.xlu0 %2433
        %2436 = vxpose.xlu0.b32.start [1/16] %v2434, 128
        %2437 = vxpose.xlu0.b32.cont [2/16] 0.0, 128
        %2438 = vxpose.xlu0.b32.cont [3/16] 0.0, 128
        %2439 = vxpose.xlu0.b32.cont [4/16] 0.0, 128
        %2440 = vxpose.xlu0.b32.cont [5/16] 0.0, 128
        %2441 = vxpose.xlu0.b32.cont [6/16] 0.0, 128
        %2442 = vxpose.xlu0.b32.cont [7/16] 0.0, 128
        %2443 = vxpose.xlu0.b32.cont [8/16] 0.0, 128
        %2444 = vxpose.xlu0.b32.cont [9/16] 0.0, 128
        %2445 = vxpose.xlu0.b32.cont [10/16] 0.0, 128
        %2446 = vxpose.xlu0.b32.cont [11/16] 0.0, 128
        %2447 = vxpose.xlu0.b32.cont [12/16] 0.0, 128
        %2448 = vxpose.xlu0.b32.cont [13/16] 0.0, 128
        %2449 = vxpose.xlu0.b32.cont [14/16] 0.0, 128
        %2450 = vxpose.xlu0.b32.cont [15/16] 0.0, 128
        %2451 = vxpose.xlu0.b32.end [16/16] 0.0, 128
        %v2452 = vpop.trf.xlu0
        %v2453 = vpop.trf.xlu0
        %v2454 = vpop.trf.xlu0
        %v2455 = vpop.trf.xlu0
        %v2456 = vpop.trf.xlu0
        %v2457 = vpop.trf.xlu0
        %v2458 = vpop.trf.xlu0
        %v2459 = vpop.trf.xlu0
        %v2460 = vpop.trf.xlu0
        %v2461 = vpop.trf.xlu0
        %v2462 = vpop.trf.xlu0
        %v2463 = vpop.trf.xlu0
        %v2464 = vpop.trf.xlu0
        %v2465 = vpop.trf.xlu0
        %v2466 = vpop.trf.xlu0
        %v2467 = vpop.trf.xlu0
        %v2469 = vsel %vm1530, %v2452, 0
        %2471 = vmatprep.subr.mxu0 0.0
        %2472 = vmatpush1.msra.mxu0 0.0
        %2473 = vmatprep.subr.mxu0 0.0
        %2474 = vmatpush1.msra.mxu0 0.0
        %2475 = vmatprep.subr.mxu0 0.0
        %2476 = vmatpush1.msra.mxu0 0.0
        %2477 = vmatprep.subr.mxu0 0.0
        %2478 = vmatpush1.msra.mxu0 0.0
        %2479 = vmatprep.subr.mxu0 0.0
        %2480 = vmatpush1.msra.mxu0 0.0
        %2481 = vmatprep.subr.mxu0 0.0
        %2482 = vmatpush1.msra.mxu0 0.0
        %2483 = vmatprep.subr.mxu0 0.0
        %2484 = vmatpush1.msra.mxu0 0.0
        %2485 = vmatprep.subr.mxu0 0.0
        %2486 = vmatpush1.msra.mxu0 0.0
        %2487 = vmatprep.subr.mxu0 0.0
        %2488 = vmatpush1.msra.mxu0 0.0
        %2489 = vmatprep.subr.mxu0 0.0
        %2490 = vmatpush1.msra.mxu0 0.0
        %2491 = vmatprep.subr.mxu0 0.0
        %2492 = vmatpush1.msra.mxu0 0.0
        %2493 = vmatprep.subr.mxu0 0.0
        %2494 = vmatpush1.msra.mxu0 0.0
        %2495 = vmatprep.subr.mxu0 0.0
        %2496 = vmatpush1.msra.mxu0 0.0
        %2497 = vmatprep.subr.mxu0 0.0
        %2498 = vmatpush1.msra.mxu0 0.0
        %2499 = vmatprep.subr.mxu0 0.0
        %2500 = vmatpush1.msra.mxu0 0.0
        %2501 = vmatprep.subr.mxu0 0.0
        %2502 = vmatpush1.msra.mxu0 %v2429
        %2503 = vmatprep.subr.mxu0 0.0
        %2504 = vmatpush2.msra.mxu0 0.0
        %2505 = vmatprep.subr.mxu0 0.0
        %2506 = vmatpush2.msra.mxu0 0.0
        %2507 = vmatprep.subr.mxu0 0.0
        %2508 = vmatpush2.msra.mxu0 0.0
        %2509 = vmatprep.subr.mxu0 0.0
        %2510 = vmatpush2.msra.mxu0 0.0
        %2511 = vmatprep.subr.mxu0 0.0
        %2512 = vmatpush2.msra.mxu0 0.0
        %2513 = vmatprep.subr.mxu0 0.0
        %2514 = vmatpush2.msra.mxu0 0.0
        %2515 = vmatprep.subr.mxu0 0.0
        %2516 = vmatpush2.msra.mxu0 0.0
        %2517 = vmatprep.subr.mxu0 0.0
        %2518 = vmatpush2.msra.mxu0 0.0
        %2519 = vmatprep.subr.mxu0 0.0
        %2520 = vmatpush2.msra.mxu0 0.0
        %2521 = vmatprep.subr.mxu0 0.0
        %2522 = vmatpush2.msra.mxu0 0.0
        %2523 = vmatprep.subr.mxu0 0.0
        %2524 = vmatpush2.msra.mxu0 0.0
        %2525 = vmatprep.subr.mxu0 0.0
        %2526 = vmatpush2.msra.mxu0 0.0
        %2527 = vmatprep.subr.mxu0 0.0
        %2528 = vmatpush2.msra.mxu0 0.0
        %2529 = vmatprep.subr.mxu0 0.0
        %2530 = vmatpush2.msra.mxu0 0.0
        %2531 = vmatprep.subr.mxu0 0.0
        %2532 = vmatpush2.msra.mxu0 0.0
        %2533 = vmatprep.subr.mxu0 0.0
        %2534 = vmatpush2.msra.mxu0 0.0
        %2535 = vmatprep.mubr.f32.mxu0 0.0
        %2536 = vmatmul.mubr.f32.gmra.mxu0 %v2469
        %v2537 = vpop.f32.mrf.mxu0
        %v2538 = vadd.f32 0.0, %v2537
        %v2539 = vpop.f32.mrf.mxu0
        %2540 = vdwg.mxu0
        %2541 = vst.msk [vmem:[#allocation2 + $0x18] sm:$0xff] %vm429, %v2538
        %v2542 = vld [vmem:[#allocation2] sm:$0xff]
        %v2543 = vld [vmem:[#allocation2 + $0x8] sm:$0xff]
        %v2544 = vld [vmem:[#allocation2 + $0x10] sm:$0xff]
        %v2545 = vld [vmem:[#allocation2 + $0x18] sm:$0xff]
        %v2546 = vld [vmem:[%s7] sm:$0x1]
        %v2548 = vlaneseq
        %v2549 = vshrl.u32 %v2548, 7
        %v2550 = vsub.s32 0, %v2549
        %v2551 = vrot.slane %v2546, %v2550
        %2585 = vrot.lane.b32.xlu0 %v593, 64
        %v2586 = vpop.permute.xlu0 %2585
        %2587 = vrot.lane.b32.xlu0 %v598, 64
        %v2588 = vpop.permute.xlu0 %2587
        %2589 = vrot.lane.b32.xlu0 %v603, 64
        %v2590 = vpop.permute.xlu0 %2589
        %2591 = vrot.lane.b32.xlu0 %v608, 64
        %v2592 = vpop.permute.xlu0 %2591
        %2593 = vrot.lane.b32.xlu0 %v613, 64
        %v2594 = vpop.permute.xlu0 %2593
        %2595 = vrot.lane.b32.xlu0 %v618, 64
        %v2596 = vpop.permute.xlu0 %2595
        %2597 = vrot.lane.b32.xlu0 %v623, 64
        %v2598 = vpop.permute.xlu0 %2597
        %2599 = vrot.lane.b32.xlu0 %v628, 64
        %v2600 = vpop.permute.xlu0 %2599
        %2601 = vrot.lane.b32.xlu0 %v633, 64
        %v2602 = vpop.permute.xlu0 %2601
        %2603 = vrot.lane.b32.xlu0 %v638, 64
        %v2604 = vpop.permute.xlu0 %2603
        %2605 = vrot.lane.b32.xlu0 %v643, 64
        %v2606 = vpop.permute.xlu0 %2605
        %2607 = vrot.lane.b32.xlu0 %v648, 64
        %v2608 = vpop.permute.xlu0 %2607
        %2609 = vrot.lane.b32.xlu0 %v653, 64
        %v2610 = vpop.permute.xlu0 %2609
        %2611 = vrot.lane.b32.xlu0 %v658, 64
        %v2612 = vpop.permute.xlu0 %2611
        %2613 = vrot.lane.b32.xlu0 %v663, 64
        %v2614 = vpop.permute.xlu0 %2613
        %2615 = vrot.lane.b32.xlu0 %v668, 64
        %v2616 = vpop.permute.xlu0 %2615
        %2617 = vrot.lane.b32.xlu0 %v673, 64
        %v2618 = vpop.permute.xlu0 %2617
        %2619 = vrot.lane.b32.xlu0 %v678, 64
        %v2620 = vpop.permute.xlu0 %2619
        %2621 = vrot.lane.b32.xlu0 %v683, 64
        %v2622 = vpop.permute.xlu0 %2621
        %2623 = vrot.lane.b32.xlu0 %v688, 64
        %v2624 = vpop.permute.xlu0 %2623
        %2625 = vrot.lane.b32.xlu0 %v693, 64
        %v2626 = vpop.permute.xlu0 %2625
        %2627 = vrot.lane.b32.xlu0 %v698, 64
        %v2628 = vpop.permute.xlu0 %2627
        %2629 = vrot.lane.b32.xlu0 %v703, 64
        %v2630 = vpop.permute.xlu0 %2629
        %2631 = vrot.lane.b32.xlu0 %v708, 64
        %v2632 = vpop.permute.xlu0 %2631
        %2633 = vrot.lane.b32.xlu0 %v713, 64
        %v2634 = vpop.permute.xlu0 %2633
        %2635 = vrot.lane.b32.xlu0 %v718, 64
        %v2636 = vpop.permute.xlu0 %2635
        %2637 = vrot.lane.b32.xlu0 %v723, 64
        %v2638 = vpop.permute.xlu0 %2637
        %2639 = vrot.lane.b32.xlu0 %v728, 64
        %v2640 = vpop.permute.xlu0 %2639
        %2641 = vrot.lane.b32.xlu0 %v733, 64
        %v2642 = vpop.permute.xlu0 %2641
        %2643 = vrot.lane.b32.xlu0 %v738, 64
        %v2644 = vpop.permute.xlu0 %2643
        %2645 = vrot.lane.b32.xlu0 %v743, 64
        %v2646 = vpop.permute.xlu0 %2645
        %2647 = vrot.lane.b32.xlu0 %v748, 64
        %v2648 = vpop.permute.xlu0 %2647
        %v2649 = vsel %vm429, %v2586, 0
        %v2651 = vsel %vm429, %v2588, 0
        %v2653 = vsel %vm429, %v2590, 0
        %v2655 = vsel %vm429, %v2592, 0
        %v2657 = vsel %vm429, %v2594, 0
        %v2659 = vsel %vm429, %v2596, 0
        %v2661 = vsel %vm429, %v2598, 0
        %v2663 = vsel %vm429, %v2600, 0
        %v2665 = vsel %vm429, %v2602, 0
        %v2667 = vsel %vm429, %v2604, 0
        %v2669 = vsel %vm429, %v2606, 0
        %v2671 = vsel %vm429, %v2608, 0
        %v2673 = vsel %vm429, %v2610, 0
        %v2675 = vsel %vm429, %v2612, 0
        %v2677 = vsel %vm429, %v2614, 0
        %v2679 = vsel %vm429, %v2616, 0
        %v2681 = vsel %vm429, %v2618, 0
        %v2683 = vsel %vm429, %v2620, 0
        %v2685 = vsel %vm429, %v2622, 0
        %v2687 = vsel %vm429, %v2624, 0
        %v2689 = vsel %vm429, %v2626, 0
        %v2691 = vsel %vm429, %v2628, 0
        %v2693 = vsel %vm429, %v2630, 0
        %v2695 = vsel %vm429, %v2632, 0
        %v2697 = vsel %vm429, %v2634, 0
        %v2699 = vsel %vm429, %v2636, 0
        %v2701 = vsel %vm429, %v2638, 0
        %v2703 = vsel %vm429, %v2640, 0
        %v2705 = vsel %vm429, %v2642, 0
        %v2707 = vsel %vm429, %v2644, 0
        %v2709 = vsel %vm429, %v2646, 0
        %v2711 = vsel %vm429, %v2648, 0
        %2713 = vmatprep.subr.mxu0 0.0
        %2714 = vmatpush1.msra.mxu0 0.0
        %2715 = vmatprep.subr.mxu0 0.0
        %2716 = vmatpush1.msra.mxu0 0.0
        %2717 = vmatprep.subr.mxu0 0.0
        %2718 = vmatpush1.msra.mxu0 0.0
        %2719 = vmatprep.subr.mxu0 0.0
        %2720 = vmatpush1.msra.mxu0 0.0
        %2721 = vmatprep.subr.mxu0 0.0
        %2722 = vmatpush1.msra.mxu0 0.0
        %2723 = vmatprep.subr.mxu0 0.0
        %2724 = vmatpush1.msra.mxu0 0.0
        %2725 = vmatprep.subr.mxu0 0.0
        %2726 = vmatpush1.msra.mxu0 0.0
        %2727 = vmatprep.subr.mxu0 0.0
        %2728 = vmatpush1.msra.mxu0 0.0
        %2729 = vmatprep.subr.mxu0 0.0
        %2730 = vmatpush1.msra.mxu0 0.0
        %2731 = vmatprep.subr.mxu0 0.0
        %2732 = vmatpush1.msra.mxu0 0.0
        %2733 = vmatprep.subr.mxu0 0.0
        %2734 = vmatpush1.msra.mxu0 0.0
        %2735 = vmatprep.subr.mxu0 0.0
        %2736 = vmatpush1.msra.mxu0 0.0
        %2737 = vmatprep.subr.mxu0 0.0
        %2738 = vmatpush1.msra.mxu0 %v2545
        %2739 = vmatprep.subr.mxu0 0.0
        %2740 = vmatpush1.msra.mxu0 %v2544
        %2741 = vmatprep.subr.mxu0 0.0
        %2742 = vmatpush1.msra.mxu0 %v2543
        %2743 = vmatprep.subr.mxu0 0.0
        %2744 = vmatpush1.msra.mxu0 %v2542
        %2745 = vmatprep.subr.mxu0 0.0
        %2746 = vmatpush2.msra.mxu0 0.0
        %2747 = vmatprep.subr.mxu0 0.0
        %2748 = vmatpush2.msra.mxu0 0.0
        %2749 = vmatprep.subr.mxu0 0.0
        %2750 = vmatpush2.msra.mxu0 0.0
        %2751 = vmatprep.subr.mxu0 0.0
        %2752 = vmatpush2.msra.mxu0 0.0
        %2753 = vmatprep.subr.mxu0 0.0
        %2754 = vmatpush2.msra.mxu0 0.0
        %2755 = vmatprep.subr.mxu0 0.0
        %2756 = vmatpush2.msra.mxu0 0.0
        %2757 = vmatprep.subr.mxu0 0.0
        %2758 = vmatpush2.msra.mxu0 0.0
        %2759 = vmatprep.subr.mxu0 0.0
        %2760 = vmatpush2.msra.mxu0 0.0
        %2761 = vmatprep.subr.mxu0 0.0
        %2762 = vmatpush2.msra.mxu0 0.0
        %2763 = vmatprep.subr.mxu0 0.0
        %2764 = vmatpush2.msra.mxu0 0.0
        %2765 = vmatprep.subr.mxu0 0.0
        %2766 = vmatpush2.msra.mxu0 0.0
        %2767 = vmatprep.subr.mxu0 0.0
        %2768 = vmatpush2.msra.mxu0 0.0
        %2769 = vmatprep.subr.mxu0 0.0
        %2770 = vmatpush2.msra.mxu0 0.0
        %2771 = vmatprep.subr.mxu0 0.0
        %2772 = vmatpush2.msra.mxu0 0.0
        %2773 = vmatprep.subr.mxu0 0.0
        %2774 = vmatpush2.msra.mxu0 0.0
        %2775 = vmatprep.subr.mxu0 0.0
        %2776 = vmatpush2.msra.mxu0 0.0
        %2777 = vmatprep.mubr.f32.mxu0 0.0
        %2778 = vmatmul.mubr.f32.gmra.mxu0 %v2649
        %v2779 = vpop.f32.mrf.mxu0
        %v2780 = vadd.f32 %v2551, %v2779
        %v2781 = vpop.f32.mrf.mxu0
        %2782 = vmatprep.mubr.f32.mxu0 0.0
        %2783 = vmatmul.mubr.f32.gmra.mxu0 %v2651
        %v2784 = vpop.f32.mrf.mxu0
        %v2785 = vadd.f32 %v2551, %v2784
        %v2786 = vpop.f32.mrf.mxu0
        %2787 = vmatprep.mubr.f32.mxu0 0.0
        %2788 = vmatmul.mubr.f32.gmra.mxu0 %v2653
        %v2789 = vpop.f32.mrf.mxu0
        %v2790 = vadd.f32 %v2551, %v2789
        %v2791 = vpop.f32.mrf.mxu0
        %2792 = vmatprep.mubr.f32.mxu0 0.0
        %2793 = vmatmul.mubr.f32.gmra.mxu0 %v2655
        %v2794 = vpop.f32.mrf.mxu0
        %v2795 = vadd.f32 %v2551, %v2794
        %v2796 = vpop.f32.mrf.mxu0
        %2797 = vmatprep.mubr.f32.mxu0 0.0
        %2798 = vmatmul.mubr.f32.gmra.mxu0 %v2657
        %v2799 = vpop.f32.mrf.mxu0
        %v2800 = vadd.f32 %v2551, %v2799
        %v2801 = vpop.f32.mrf.mxu0
        %2802 = vmatprep.mubr.f32.mxu0 0.0
        %2803 = vmatmul.mubr.f32.gmra.mxu0 %v2659
        %v2804 = vpop.f32.mrf.mxu0
        %v2805 = vadd.f32 %v2551, %v2804
        %v2806 = vpop.f32.mrf.mxu0
        %2807 = vmatprep.mubr.f32.mxu0 0.0
        %2808 = vmatmul.mubr.f32.gmra.mxu0 %v2661
        %v2809 = vpop.f32.mrf.mxu0
        %v2810 = vadd.f32 %v2551, %v2809
        %v2811 = vpop.f32.mrf.mxu0
        %2812 = vmatprep.mubr.f32.mxu0 0.0
        %2813 = vmatmul.mubr.f32.gmra.mxu0 %v2663
        %v2814 = vpop.f32.mrf.mxu0
        %v2815 = vadd.f32 %v2551, %v2814
        %v2816 = vpop.f32.mrf.mxu0
        %2817 = vmatprep.mubr.f32.mxu0 0.0
        %2818 = vmatmul.mubr.f32.gmra.mxu0 %v2665
        %v2819 = vpop.f32.mrf.mxu0
        %v2820 = vadd.f32 %v2551, %v2819
        %v2821 = vpop.f32.mrf.mxu0
        %2822 = vmatprep.mubr.f32.mxu0 0.0
        %2823 = vmatmul.mubr.f32.gmra.mxu0 %v2667
        %v2824 = vpop.f32.mrf.mxu0
        %v2825 = vadd.f32 %v2551, %v2824
        %v2826 = vpop.f32.mrf.mxu0
        %2827 = vmatprep.mubr.f32.mxu0 0.0
        %2828 = vmatmul.mubr.f32.gmra.mxu0 %v2669
        %v2829 = vpop.f32.mrf.mxu0
        %v2830 = vadd.f32 %v2551, %v2829
        %v2831 = vpop.f32.mrf.mxu0
        %2832 = vmatprep.mubr.f32.mxu0 0.0
        %2833 = vmatmul.mubr.f32.gmra.mxu0 %v2671
        %v2834 = vpop.f32.mrf.mxu0
        %v2835 = vadd.f32 %v2551, %v2834
        %v2836 = vpop.f32.mrf.mxu0
        %2837 = vmatprep.mubr.f32.mxu0 0.0
        %2838 = vmatmul.mubr.f32.gmra.mxu0 %v2673
        %v2839 = vpop.f32.mrf.mxu0
        %v2840 = vadd.f32 %v2551, %v2839
        %v2841 = vpop.f32.mrf.mxu0
        %2842 = vmatprep.mubr.f32.mxu0 0.0
        %2843 = vmatmul.mubr.f32.gmra.mxu0 %v2675
        %v2844 = vpop.f32.mrf.mxu0
        %v2845 = vadd.f32 %v2551, %v2844
        %v2846 = vpop.f32.mrf.mxu0
        %2847 = vmatprep.mubr.f32.mxu0 0.0
        %2848 = vmatmul.mubr.f32.gmra.mxu0 %v2677
        %v2849 = vpop.f32.mrf.mxu0
        %v2850 = vadd.f32 %v2551, %v2849
        %v2851 = vpop.f32.mrf.mxu0
        %2852 = vmatprep.mubr.f32.mxu0 0.0
        %2853 = vmatmul.mubr.f32.gmra.mxu0 %v2679
        %v2854 = vpop.f32.mrf.mxu0
        %v2855 = vadd.f32 %v2551, %v2854
        %v2856 = vpop.f32.mrf.mxu0
        %2857 = vmatprep.mubr.f32.mxu0 0.0
        %2858 = vmatmul.mubr.f32.gmra.mxu0 %v2681
        %v2859 = vpop.f32.mrf.mxu0
        %v2860 = vadd.f32 %v2551, %v2859
        %v2861 = vpop.f32.mrf.mxu0
        %2862 = vmatprep.mubr.f32.mxu0 0.0
        %2863 = vmatmul.mubr.f32.gmra.mxu0 %v2683
        %v2864 = vpop.f32.mrf.mxu0
        %v2865 = vadd.f32 %v2551, %v2864
        %v2866 = vpop.f32.mrf.mxu0
        %2867 = vmatprep.mubr.f32.mxu0 0.0
        %2868 = vmatmul.mubr.f32.gmra.mxu0 %v2685
        %v2869 = vpop.f32.mrf.mxu0
        %v2870 = vadd.f32 %v2551, %v2869
        %v2871 = vpop.f32.mrf.mxu0
        %2872 = vmatprep.mubr.f32.mxu0 0.0
        %2873 = vmatmul.mubr.f32.gmra.mxu0 %v2687
        %v2874 = vpop.f32.mrf.mxu0
        %v2875 = vadd.f32 %v2551, %v2874
        %v2876 = vpop.f32.mrf.mxu0
        %2877 = vmatprep.mubr.f32.mxu0 0.0
        %2878 = vmatmul.mubr.f32.gmra.mxu0 %v2689
        %v2879 = vpop.f32.mrf.mxu0
        %v2880 = vadd.f32 %v2551, %v2879
        %v2881 = vpop.f32.mrf.mxu0
        %2882 = vmatprep.mubr.f32.mxu0 0.0
        %2883 = vmatmul.mubr.f32.gmra.mxu0 %v2691
        %v2884 = vpop.f32.mrf.mxu0
        %v2885 = vadd.f32 %v2551, %v2884
        %v2886 = vpop.f32.mrf.mxu0
        %2887 = vmatprep.mubr.f32.mxu0 0.0
        %2888 = vmatmul.mubr.f32.gmra.mxu0 %v2693
        %v2889 = vpop.f32.mrf.mxu0
        %v2890 = vadd.f32 %v2551, %v2889
        %v2891 = vpop.f32.mrf.mxu0
        %2892 = vmatprep.mubr.f32.mxu0 0.0
        %2893 = vmatmul.mubr.f32.gmra.mxu0 %v2695
        %v2894 = vpop.f32.mrf.mxu0
        %v2895 = vadd.f32 %v2551, %v2894
        %v2896 = vpop.f32.mrf.mxu0
        %2897 = vmatprep.mubr.f32.mxu0 0.0
        %2898 = vmatmul.mubr.f32.gmra.mxu0 %v2697
        %v2899 = vpop.f32.mrf.mxu0
        %v2900 = vadd.f32 %v2551, %v2899
        %v2901 = vpop.f32.mrf.mxu0
        %2902 = vmatprep.mubr.f32.mxu0 0.0
        %2903 = vmatmul.mubr.f32.gmra.mxu0 %v2699
        %v2904 = vpop.f32.mrf.mxu0
        %v2905 = vadd.f32 %v2551, %v2904
        %v2906 = vpop.f32.mrf.mxu0
        %2907 = vmatprep.mubr.f32.mxu0 0.0
        %2908 = vmatmul.mubr.f32.gmra.mxu0 %v2701
        %v2909 = vpop.f32.mrf.mxu0
        %v2910 = vadd.f32 %v2551, %v2909
        %v2911 = vpop.f32.mrf.mxu0
        %2912 = vmatprep.mubr.f32.mxu0 0.0
        %2913 = vmatmul.mubr.f32.gmra.mxu0 %v2703
        %v2914 = vpop.f32.mrf.mxu0
        %v2915 = vadd.f32 %v2551, %v2914
        %v2916 = vpop.f32.mrf.mxu0
        %2917 = vmatprep.mubr.f32.mxu0 0.0
        %2918 = vmatmul.mubr.f32.gmra.mxu0 %v2705
        %v2919 = vpop.f32.mrf.mxu0
        %v2920 = vadd.f32 %v2551, %v2919
        %v2921 = vpop.f32.mrf.mxu0
        %2922 = vmatprep.mubr.f32.mxu0 0.0
        %2923 = vmatmul.mubr.f32.gmra.mxu0 %v2707
        %v2924 = vpop.f32.mrf.mxu0
        %v2925 = vadd.f32 %v2551, %v2924
        %v2926 = vpop.f32.mrf.mxu0
        %2927 = vmatprep.mubr.f32.mxu0 0.0
        %2928 = vmatmul.mubr.f32.gmra.mxu0 %v2709
        %v2929 = vpop.f32.mrf.mxu0
        %v2930 = vadd.f32 %v2551, %v2929
        %v2931 = vpop.f32.mrf.mxu0
        %2932 = vmatprep.mubr.f32.mxu0 0.0
        %2933 = vmatmul.mubr.f32.gmra.mxu0 %v2711
        %v2934 = vpop.f32.mrf.mxu0
        %v2935 = vadd.f32 %v2551, %v2934
        %v2936 = vpop.f32.mrf.mxu0
        %2937 = vdwg.mxu0
        %2938 = vst.msk [vmem:[%s387] sm:$0xff] %vm429, %v2780
        %2939 = vst.msk [vmem:[%s387 + $0x8] sm:$0xff] %vm429, %v2785
        %2940 = vst.msk [vmem:[%s387 + $0x10] sm:$0xff] %vm429, %v2790
        %2941 = vst.msk [vmem:[%s387 + $0x18] sm:$0xff] %vm429, %v2795
        %2942 = vst.msk [vmem:[%s387 + $0x20] sm:$0xff] %vm429, %v2800
        %2943 = vst.msk [vmem:[%s387 + $0x28] sm:$0xff] %vm429, %v2805
        %2944 = vst.msk [vmem:[%s387 + $0x30] sm:$0xff] %vm429, %v2810
        %2945 = vst.msk [vmem:[%s387 + $0x38] sm:$0xff] %vm429, %v2815
        %2946 = vst.msk [vmem:[%s387 + $0x40] sm:$0xff] %vm429, %v2820
        %2947 = vst.msk [vmem:[%s387 + $0x48] sm:$0xff] %vm429, %v2825
        %2948 = vst.msk [vmem:[%s387 + $0x50] sm:$0xff] %vm429, %v2830
        %2949 = vst.msk [vmem:[%s387 + $0x58] sm:$0xff] %vm429, %v2835
        %2950 = vst.msk [vmem:[%s387 + $0x60] sm:$0xff] %vm429, %v2840
        %2951 = vst.msk [vmem:[%s387 + $0x68] sm:$0xff] %vm429, %v2845
        %2952 = vst.msk [vmem:[%s387 + $0x70] sm:$0xff] %vm429, %v2850
        %2953 = vst.msk [vmem:[%s387 + $0x78] sm:$0xff] %vm429, %v2855
        %2954 = vst.msk [vmem:[%s387 + $0x80] sm:$0xff] %vm429, %v2860
        %2955 = vst.msk [vmem:[%s387 + $0x88] sm:$0xff] %vm429, %v2865
        %2956 = vst.msk [vmem:[%s387 + $0x90] sm:$0xff] %vm429, %v2870
        %2957 = vst.msk [vmem:[%s387 + $0x98] sm:$0xff] %vm429, %v2875
        %2958 = vst.msk [vmem:[%s387 + $0xa0] sm:$0xff] %vm429, %v2880
        %2959 = vst.msk [vmem:[%s387 + $0xa8] sm:$0xff] %vm429, %v2885
        %2960 = vst.msk [vmem:[%s387 + $0xb0] sm:$0xff] %vm429, %v2890
        %2961 = vst.msk [vmem:[%s387 + $0xb8] sm:$0xff] %vm429, %v2895
        %2962 = vst.msk [vmem:[%s387 + $0xc0] sm:$0xff] %vm429, %v2900
        %2963 = vst.msk [vmem:[%s387 + $0xc8] sm:$0xff] %vm429, %v2905
        %2964 = vst.msk [vmem:[%s387 + $0xd0] sm:$0xff] %vm429, %v2910
        %2965 = vst.msk [vmem:[%s387 + $0xd8] sm:$0xff] %vm429, %v2915
        %2966 = vst.msk [vmem:[%s387 + $0xe0] sm:$0xff] %vm429, %v2920
        %2967 = vst.msk [vmem:[%s387 + $0xe8] sm:$0xff] %vm429, %v2925
        %2968 = vst.msk [vmem:[%s387 + $0xf0] sm:$0xff] %vm429, %v2930
        %2969 = vst.msk [vmem:[%s387 + $0xf8] sm:$0xff] %vm429, %v2935
        %3002 = vst.msk [vmem:[%s392] sm:$0xff] %vm429, %v2586
        %3003 = vst.msk [vmem:[%s392 + $0x8] sm:$0xff] %vm429, %v2588
        %3004 = vst.msk [vmem:[%s392 + $0x10] sm:$0xff] %vm429, %v2590
        %3005 = vst.msk [vmem:[%s392 + $0x18] sm:$0xff] %vm429, %v2592
        %3006 = vst.msk [vmem:[%s392 + $0x20] sm:$0xff] %vm429, %v2594
        %3007 = vst.msk [vmem:[%s392 + $0x28] sm:$0xff] %vm429, %v2596
        %3008 = vst.msk [vmem:[%s392 + $0x30] sm:$0xff] %vm429, %v2598
        %3009 = vst.msk [vmem:[%s392 + $0x38] sm:$0xff] %vm429, %v2600
        %3010 = vst.msk [vmem:[%s392 + $0x40] sm:$0xff] %vm429, %v2602
        %3011 = vst.msk [vmem:[%s392 + $0x48] sm:$0xff] %vm429, %v2604
        %3012 = vst.msk [vmem:[%s392 + $0x50] sm:$0xff] %vm429, %v2606
        %3013 = vst.msk [vmem:[%s392 + $0x58] sm:$0xff] %vm429, %v2608
        %3014 = vst.msk [vmem:[%s392 + $0x60] sm:$0xff] %vm429, %v2610
        %3015 = vst.msk [vmem:[%s392 + $0x68] sm:$0xff] %vm429, %v2612
        %3016 = vst.msk [vmem:[%s392 + $0x70] sm:$0xff] %vm429, %v2614
        %3017 = vst.msk [vmem:[%s392 + $0x78] sm:$0xff] %vm429, %v2616
        %3018 = vst.msk [vmem:[%s392 + $0x80] sm:$0xff] %vm429, %v2618
        %3019 = vst.msk [vmem:[%s392 + $0x88] sm:$0xff] %vm429, %v2620
        %3020 = vst.msk [vmem:[%s392 + $0x90] sm:$0xff] %vm429, %v2622
        %3021 = vst.msk [vmem:[%s392 + $0x98] sm:$0xff] %vm429, %v2624
        %3022 = vst.msk [vmem:[%s392 + $0xa0] sm:$0xff] %vm429, %v2626
        %3023 = vst.msk [vmem:[%s392 + $0xa8] sm:$0xff] %vm429, %v2628
        %3024 = vst.msk [vmem:[%s392 + $0xb0] sm:$0xff] %vm429, %v2630
        %3025 = vst.msk [vmem:[%s392 + $0xb8] sm:$0xff] %vm429, %v2632
        %3026 = vst.msk [vmem:[%s392 + $0xc0] sm:$0xff] %vm429, %v2634
        %3027 = vst.msk [vmem:[%s392 + $0xc8] sm:$0xff] %vm429, %v2636
        %3028 = vst.msk [vmem:[%s392 + $0xd0] sm:$0xff] %vm429, %v2638
        %3029 = vst.msk [vmem:[%s392 + $0xd8] sm:$0xff] %vm429, %v2640
        %3030 = vst.msk [vmem:[%s392 + $0xe0] sm:$0xff] %vm429, %v2642
        %3031 = vst.msk [vmem:[%s392 + $0xe8] sm:$0xff] %vm429, %v2644
        %3032 = vst.msk [vmem:[%s392 + $0xf0] sm:$0xff] %vm429, %v2646
        %3033 = vst.msk [vmem:[%s392 + $0xf8] sm:$0xff] %vm429, %v2648
        %p3034 = scmp.lt.s32.totalorder %s23, 1
        %s3035 = scalar_select %p3034, %s23, 1
        %s3036 = smul.addr %s3035, 32
        %s3037 = smul.addr %s3036, 8
        %s3038 = scalar_lea.vmem %s8, %s3037
        %p3039 = scmp.lt.s32.totalorder %s23, 1
        %s3040 = scalar_select %p3039, %s23, 1
        %s3041 = smul.addr %s3040, 32
        %s3042 = smul.addr %s3041, 8
        %s3043 = scalar_lea.vmem %s9, %s3042
        // Predicated region
        $region61: #{psa_forward.2} parent=51 // pred_check
          %p3044 = pneg %p219
        $region62: #{psa_forward.2} parent=51 // pred_check_branch
          %3046 = sbr.rel (%p3044) target = $region64
        $region63: #{psa_forward.2} parent=51 // pred_region
          _
        $region64: #{psa_forward.2} parent=51 // pred_fallthru
          _
        // Predicated region
        $region65: #{psa_forward.2} parent=51 // pred_check
          %p3047 = pneg %p245
        $region66: #{psa_forward.2} parent=51 // pred_check_branch
          %3049 = sbr.rel (%p3047) target = $region68
        $region67: #{psa_forward.2} parent=51 // pred_region
          _
        $region68: #{psa_forward.2} parent=51 // pred_fallthru
          _
      $region52: #{psa_forward.2} parent=5 // pred_fallthru
        _
      %p3050 = scmp.le.s32.totalorder 2, %s18
      // Predicated region
      $region69: #{psa_forward.2} parent=5 // pred_check
        %p3051 = pneg %p3050
      $region70: #{psa_forward.2} parent=5 // pred_check_branch
        %3053 = sbr.rel (%p3051) target = $region72
      $region71: #{psa_forward.2} parent=5 // pred_region
        %s3054 = ssub.s32 %s18, 2
        // Predicated region
        $region73: #{psa_forward.2} parent=71 // pred_check
          %p3055 = pneg %p225
        $region74: #{psa_forward.2} parent=71 // pred_check_branch
          %3057 = sbr.rel (%p3055) target = $region76
        $region75: #{psa_forward.2} parent=71 // pred_region
          %p3058 = scmp.lt.s32.totalorder %s24, 1
          %s3059 = scalar_select %p3058, %s24, 1
          %s3060 = smul.addr %s3059, 32
          %s3061 = smul.addr %s3060, 8
          %s3062 = scalar_lea.vmem %s8, %s3061
        $region76: #{psa_forward.2} parent=71 // pred_fallthru
          _
        // Predicated region
        $region77: #{psa_forward.2} parent=71 // pred_check
          %p3063 = pneg %p251
        $region78: #{psa_forward.2} parent=71 // pred_check_branch
          %3065 = sbr.rel (%p3063) target = $region80
        $region79: #{psa_forward.2} parent=71 // pred_region
          %p3066 = scmp.lt.s32.totalorder %s24, 1
          %s3067 = scalar_select %p3066, %s24, 1
          %s3068 = smul.addr %s3067, 32
          %s3069 = smul.addr %s3068, 8
          %s3070 = scalar_lea.vmem %s9, %s3069
        $region80: #{psa_forward.2} parent=71 // pred_fallthru
          _
      $region72: #{psa_forward.2} parent=5 // pred_fallthru
        _
    $region6: #{psa_forward.2} parent=1 // loop_footer
      %s22 = sadd.s32 1, %s18
    $region7: #{psa_forward.2} parent=1 // loop_footer_branch
      %17 = sbr.rel target = $region3
    $region8: #{psa_forward.2} parent=1 // loop_exit
      _
    %3071 = vsyncpa [#allocation4], 1
    %s3072 = scalar_lea.sflag [#allocation4], 1
    %3073 = vsyncpa %s3072, 1
    %3074 = vsyncpa [#allocation6], 1

</llo_original>
